<compile_context>
chip_gen: v5e
topology: v5e:2x2
jax: 0.10.0
libtpu: 0.0.40
codegen_flags: <defaults>
</compile_context>

<pallas_src>
import functools

import jax
import jax.numpy as jnp
from jax import lax
from jax.experimental import pallas as pl
from jax.experimental.pallas import tpu as pltpu


def lstm_mlp_kernel(x_ref,                 # (Tblk, Bblk, D)  f32 : raw time-major inputs
                    wih0_ref, b0_ref,      # (D, 4H) bf16, (1, 4H) f32
                    whh0_ref,              # (H, 4H) bf16
                    wih1_ref, whh1_ref,    # (H, 4H) bf16 each (layer-1 un-fused)
                    b1_ref,                # (1, 4H) f32
                    wfc1_ref, bfc1_ref,    # (H, FC1) bf16, (1, FC1) f32
                    wfc2_ref, bfc2_ref,    # (FC1, OUT) bf16, (1, OUT) f32
                    out_ref,               # (Bblk, OUT) f32
                    gx_sc,                 # (Tblk, Bblk, 4H) f32 scratch: layer-0 input proj
                    h_sc, c_sc,            # (2, Bblk, H) f32 scratch (persist over time axis)
                    *, hidden_size, t_block, seq_len, needs_mask, nl_dtype):
    """Grid = (batch_block [parallel], time_block [arbitrary / sequential])."""
    H = hidden_size
    tb = pl.program_id(1)
    nT = pl.num_programs(1)

    @pl.when(tb == 0)
    def _init():
        # h0 = c0 = zeros, exactly as in the PyTorch forward (per batch block).
        h_sc[...] = jnp.zeros_like(h_sc)
        c_sc[...] = jnp.zeros_like(c_sc)

    # ---- layer-0 input projection prologue: Tblk independent small matmuls ----
    # (off the serial recurrence path; static indices -> no reshape/relayout needed)
    for ti in range(t_block):
        gx_sc[ti] = (jnp.dot(x_ref[ti].astype(jnp.bfloat16), wih0_ref[...],
                             preferred_element_type=jnp.float32) + b0_ref[...])

    def gate_nonlin(gates):
        # PyTorch gate order i, f, g, o; H=128 -> lane-aligned free slices.
        # Nonlinearities run in nl_dtype (bf16 on v6e/v7x EUP, f32 on v5e),
        # results cast back to f32 for the cell-state update.
        g = gates.astype(nl_dtype)
        i = jax.nn.sigmoid(g[:, 0 * H:1 * H]).astype(jnp.float32)
        f = jax.nn.sigmoid(g[:, 1 * H:2 * H]).astype(jnp.float32)
        gg = jnp.tanh(g[:, 2 * H:3 * H]).astype(jnp.float32)
        o = jax.nn.sigmoid(g[:, 3 * H:4 * H]).astype(jnp.float32)
        return i, f, gg, o

    def step(ti, carry):
        h0, c0, h1, c1 = carry

        # layer-1 recurrent partial: independent of h0_new -> overlaps layer-0 work
        g1p = jnp.dot(h1.astype(jnp.bfloat16), whh1_ref[...],
                      preferred_element_type=jnp.float32) + b1_ref[...]

        # ---- layer 0: only the recurrent matmul sits on the serial chain ----
        g0 = gx_sc[ti] + jnp.dot(h0.astype(jnp.bfloat16), whh0_ref[...],
                                 preferred_element_type=jnp.float32)
        i0, f0, gg0, o0 = gate_nonlin(g0)
        c0n = f0 * c0 + i0 * gg0                                     # f32 state update
        h0n = o0 * jnp.tanh(c0n.astype(nl_dtype)).astype(jnp.float32)

        # ---- layer 1: complete the gates with the fresh h0 (K=128 on serial path) ----
        g1 = g1p + jnp.dot(h0n.astype(jnp.bfloat16), wih1_ref[...],
                           preferred_element_type=jnp.float32)
        i1, f1, gg1, o1 = gate_nonlin(g1)
        c1n = f1 * c1 + i1 * gg1
        h1n = o1 * jnp.tanh(c1n.astype(nl_dtype)).astype(jnp.float32)

        if needs_mask:
            # zero-padded timesteps are NOT an identity LSTM step -> keep old state
            valid = (tb * t_block + ti) < seq_len
            h0n = jnp.where(valid, h0n, h0)
            c0n = jnp.where(valid, c0n, c0)
            h1n = jnp.where(valid, h1n, h1)
            c1n = jnp.where(valid, c1n, c1)
        return h0n, c0n, h1n, c1n

    h0, c0, h1, c1 = lax.fori_loop(
        0, t_block, step, (h_sc[0], c_sc[0], h_sc[1], c_sc[1]),
        unroll=min(8, t_block))

    # write recurrent state back once per grid step
    h_sc[0] = h0
    c_sc[0] = c0
    h_sc[1] = h1
    c_sc[1] = c1

    # ---- head: only the last time step's top-layer hidden is used ----
    @pl.when(tb == nT - 1)
    def _head():
        a1 = jnp.maximum(
            jnp.dot(h1.astype(jnp.bfloat16), wfc1_ref[...],
                    preferred_element_type=jnp.float32) + bfc1_ref[...], 0.0)   # ReLU(fc1)
        logits = (jnp.dot(a1.astype(jnp.bfloat16), wfc2_ref[...],
                          preferred_element_type=jnp.float32) + bfc2_ref[...])  # (Bblk, OUT)
        # column 0 -> raw regression output, column 1 -> sigmoid probability
        col = lax.broadcasted_iota(jnp.int32, logits.shape, 1)
        out_ref[...] = jnp.where(col == 1, jax.nn.sigmoid(logits),
                                 logits).astype(out_ref.dtype)


def _round_up(n, m):
    return ((n + m - 1) // m) * m


def _tpu_generation():
    """Best-effort TPU generation detection; falls back to conservative defaults."""
    try:
        kind = jax.devices()[0].device_kind.lower()
    except Exception:
        return 0
    for g in (7, 6, 5, 4, 3, 2):
        if ("v%d" % g) in kind or ("tpu%d" % g) in kind:
            return g
    return 0


def lstm_forward(x, params, hidden_size, *, t_block_target=32):
    """x: (B, T, D) float32.  Returns (out[:, 0], sigmoid(out[:, 1]))."""
    B, T, D = x.shape
    H = hidden_size
    (wih0, whh0, b0, wih1, whh1, b1, wfc1, bfc1, wfc2, bfc2) = params
    FC1 = wfc1.shape[1]
    OUT = wfc2.shape[1]
    bf16 = jnp.bfloat16

    gen = _tpu_generation()
    # bf16 EUP only on v6e/v7x (v5e has no bf16 VPU/EUP -> keep f32 nonlinearities).
    nl_dtype = jnp.bfloat16 if gen >= 6 else jnp.float32
    # v6e/v7x MXUs are 2x256x256 -> 256 LHS rows amortize weight load; v5e saturates at 128.
    b_cap = 256 if gen >= 6 else 128

    # ---- batch blocking ----
    B_pad = _round_up(B, 8)
    Bblk = min(B_pad, b_cap)
    if gen >= 7 and B_pad <= Bblk and B_pad >= 16:
        # v7x has 2 TensorCores: ensure >= 2 batch blocks so the parallel axis feeds both.
        Bblk = _round_up(B_pad // 2, 8)
    B_pad = _round_up(B_pad, Bblk)

    # ---- time blocking: independent of divisibility; tail timesteps masked in-kernel ----
    Tblk = min(T, t_block_target)
    T_pad = _round_up(T, Tblk)
    needs_mask = (T_pad != T)

    x_tm = jnp.transpose(x, (1, 0, 2))                     # time-major (T, B, D)
    if B_pad != B or T_pad != T:
        x_tm = jnp.pad(x_tm, ((0, T_pad - T), (0, B_pad - B), (0, 0)))

    kernel = functools.partial(lstm_mlp_kernel, hidden_size=H, t_block=Tblk,
                               seq_len=T, needs_mask=needs_mask, nl_dtype=nl_dtype)

    def wspec(shape):
        # constant-index (resident) weight blocks
        return pl.BlockSpec(shape, lambda b, t, _s=shape: (0,) * len(_s))

    # VMEM footprint is dominated by the gx scratch (Tblk*Bblk*4H f32 <= 16 MiB);
    # keep the limit comfortably under v7x's 64 MiB physical VMEM.
    vmem_limit = (48 if gen >= 7 else 64) * 1024 * 1024

    out = pl.pallas_call(
        kernel,
        out_shape=jax.ShapeDtypeStruct((B_pad, OUT), jnp.float32),
        grid_spec=pltpu.PrefetchScalarGridSpec(
            num_scalar_prefetch=0,
            grid=(B_pad // Bblk, T_pad // Tblk),
            in_specs=[
                pl.BlockSpec((Tblk, Bblk, D), lambda b, t: (t, b, 0)),  # raw x chunk
                wspec((D, 4 * H)), wspec((1, 4 * H)),                   # wih0, b0
                wspec((H, 4 * H)),                                      # whh0
                wspec((H, 4 * H)), wspec((H, 4 * H)), wspec((1, 4 * H)),  # wih1, whh1, b1
                wspec((H, FC1)), wspec((1, FC1)),                       # fc1
                wspec((FC1, OUT)), wspec((1, OUT)),                     # fc2
            ],
            out_specs=pl.BlockSpec((Bblk, OUT), lambda b, t: (b, 0)),
            scratch_shapes=[
                pltpu.VMEM((Tblk, Bblk, 4 * H), jnp.float32),   # layer-0 input projection
                pltpu.VMEM((2, Bblk, H), jnp.float32),          # h for both layers (f32)
                pltpu.VMEM((2, Bblk, H), jnp.float32),          # c for both layers (f32)
            ],
        ),
        compiler_params=pltpu.CompilerParams(
            # batch blocks are independent (megacore / 2 TCs); time recurrence is sequential
            dimension_semantics=("parallel", "arbitrary"),
            vmem_limit_bytes=vmem_limit,
        ),
    )(x_tm,
      wih0.astype(bf16), b0,
      whh0.astype(bf16),
      wih1.astype(bf16), whh1.astype(bf16), b1,
      wfc1.astype(bf16), bfc1,
      wfc2.astype(bf16), bfc2)

    out = out[:B]
    return out[:, 0], out[:, 1]


def init_params(key, input_size, hidden_size, fc1_size, output_size):
    """Deterministic uniform init mimicking PyTorch default ranges."""
    H = hidden_size
    keys = jax.random.split(key, 10)
    k_lstm = 1.0 / jnp.sqrt(H)

    def u(k, shape, scale):
        return jax.random.uniform(k, shape, jnp.float32, -scale, scale)

    # weights stored pre-transposed: (in_features, out_features); gate order i,f,g,o
    wih0 = u(keys[0], (input_size, 4 * H), k_lstm)
    whh0 = u(keys[1], (H, 4 * H), k_lstm)
    b0 = u(keys[2], (1, 4 * H), k_lstm)        # b_ih + b_hh folded together
    wih1 = u(keys[3], (H, 4 * H), k_lstm)
    whh1 = u(keys[4], (H, 4 * H), k_lstm)
    b1 = u(keys[5], (1, 4 * H), k_lstm)

    k_fc1 = 1.0 / jnp.sqrt(H)
    wfc1 = u(keys[6], (H, fc1_size), k_fc1)
    bfc1 = u(keys[7], (1, fc1_size), k_fc1)
    k_fc2 = 1.0 / jnp.sqrt(fc1_size)
    wfc2 = u(keys[8], (fc1_size, output_size), k_fc2)
    bfc2 = u(keys[9], (1, output_size), k_fc2)
    return (wih0, whh0, b0, wih1, whh1, b1, wfc1, bfc1, wfc2, bfc2)


def reference_forward(x, params, hidden_size):
    """Pure-JAX f32 reference of the PyTorch forward (for validation)."""
    wih0, whh0, b0, wih1, whh1, b1, wfc1, bfc1, wfc2, bfc2 = params
    B, T, D = x.shape
    H = hidden_size
    layers = [(wih0, whh0, b0), (wih1, whh1, b1)]
    h = [jnp.zeros((B, H), jnp.float32) for _ in range(2)]
    c = [jnp.zeros((B, H), jnp.float32) for _ in range(2)]
    for t in range(T):
        inp = x[:, t, :]
        for l, (wih, whh, b) in enumerate(layers):
            gates = inp @ wih + h[l] @ whh + b
            i = jax.nn.sigmoid(gates[:, 0 * H:1 * H])
            f = jax.nn.sigmoid(gates[:, 1 * H:2 * H])
            g = jnp.tanh(gates[:, 2 * H:3 * H])
            o = jax.nn.sigmoid(gates[:, 3 * H:4 * H])
            c[l] = f * c[l] + i * g
            h[l] = o * jnp.tanh(c[l])
            inp = h[l]
    f1 = jnp.maximum(h[1] @ wfc1 + bfc1, 0.0)
    logits = f1 @ wfc2 + bfc2
    return logits[:, 0], jax.nn.sigmoid(logits[:, 1])


if __name__ == "__main__":
    # Small shapes consistent with the module: hidden_size / fc1 are hard-coded to 128
    # in the PyTorch module (128 keeps gate slices lane-aligned).
    B, T, D = 2, 8, 16          # batch, sequence length, input_size
    H = 128                     # hidden_size (as in the module)
    FC1 = 128                   # fc1 output dim hard-coded to 128 in the module
    OUT = 2                     # output_size

    key = jax.random.PRNGKey(0)
    kx, kp = jax.random.split(key)
    x = jax.random.normal(kx, (B, T, D), jnp.float32)
    params = init_params(kp, D, H, FC1, OUT)

    out0, out1 = lstm_forward(x, params, H)
    out0, out1 = jax.block_until_ready((out0, out1))

    ref0, ref1 = reference_forward(x, params, H)
    # bf16 matmul operands / nonlinearities (f32 accumulation and f32 cell state)
    # -> loose tolerance vs. the f32 reference
    assert jnp.allclose(out0, ref0, atol=5e-2, rtol=5e-2), (out0, ref0)
    assert jnp.allclose(out1, ref1, atol=5e-2, rtol=5e-2), (out1, ref1)

    print("KERNEL_OK")
</pallas_src>

<mosaic_0001>
module attributes {stable_mosaic.version = 11 : i64} {
  func.func @lstm_mlp_kernel(%arg0: i32, %arg1: i32, %arg2: memref<8x8x16xf32, #tpu.memory_space<vmem>>, %arg3: memref<16x512xbf16, #tpu.memory_space<vmem>>, %arg4: memref<1x512xf32, #tpu.memory_space<vmem>>, %arg5: memref<128x512xbf16, #tpu.memory_space<vmem>>, %arg6: memref<128x512xbf16, #tpu.memory_space<vmem>>, %arg7: memref<128x512xbf16, #tpu.memory_space<vmem>>, %arg8: memref<1x512xf32, #tpu.memory_space<vmem>>, %arg9: memref<128x128xbf16, #tpu.memory_space<vmem>>, %arg10: memref<1x128xf32, #tpu.memory_space<vmem>>, %arg11: memref<128x2xbf16, #tpu.memory_space<vmem>>, %arg12: memref<1x2xf32, #tpu.memory_space<vmem>>, %arg13: memref<8x2xf32, #tpu.memory_space<vmem>>, %arg14: memref<8x8x512xf32, #tpu.memory_space<vmem>>, %arg15: memref<2x8x128xf32, #tpu.memory_space<vmem>>, %arg16: memref<2x8x128xf32, #tpu.memory_space<vmem>>) attributes {dimension_semantics = [#tpu.dimension_semantics<parallel>, #tpu.dimension_semantics<arbitrary>], iteration_bounds = array<i64: 1, 1>, scalar_prefetch = 0 : i64, scratch_operands = 3 : i64, tpu.core_type = #tpu.core_type<tc>, window_params = [{transform_indices = @transform_0, window_bounds = array<i64: 8, 8, 16>}, {pipeline_mode = #tpu.pipeline_mode<synchronous>, transform_indices = @transform_1, window_bounds = array<i64: 16, 512>}, {pipeline_mode = #tpu.pipeline_mode<synchronous>, transform_indices = @transform_2, window_bounds = array<i64: 1, 512>}, {pipeline_mode = #tpu.pipeline_mode<synchronous>, transform_indices = @transform_3, window_bounds = array<i64: 128, 512>}, {pipeline_mode = #tpu.pipeline_mode<synchronous>, transform_indices = @transform_4, window_bounds = array<i64: 128, 512>}, {pipeline_mode = #tpu.pipeline_mode<synchronous>, transform_indices = @transform_5, window_bounds = array<i64: 128, 512>}, {pipeline_mode = #tpu.pipeline_mode<synchronous>, transform_indices = @transform_6, window_bounds = array<i64: 1, 512>}, {pipeline_mode = #tpu.pipeline_mode<synchronous>, transform_indices = @transform_7, window_bounds = array<i64: 128, 128>}, {pipeline_mode = #tpu.pipeline_mode<synchronous>, transform_indices = @transform_8, window_bounds = array<i64: 1, 128>}, {pipeline_mode = #tpu.pipeline_mode<synchronous>, transform_indices = @transform_9, window_bounds = array<i64: 128, 2>}, {pipeline_mode = #tpu.pipeline_mode<synchronous>, transform_indices = @transform_10, window_bounds = array<i64: 1, 2>}, {transform_indices = @transform_11, window_bounds = array<i64: 8, 2>}]} {
    %c0_i32 = arith.constant 0 : i32
    %0 = arith.cmpi eq, %arg1, %c0_i32 : i32
    %1 = arith.extui %0 : i1 to i32
    %c0_i32_0 = arith.constant 0 : i32
    %2 = arith.cmpi ne, %1, %c0_i32_0 : i32
    scf.if %2 {
      %cst_259 = arith.constant 0.000000e+00 : f32
      %650 = vector.broadcast %cst_259 : f32 to vector<2x8x128xf32>
      %c0_260 = arith.constant 0 : index
      %c0_261 = arith.constant 0 : index
      %c0_262 = arith.constant 0 : index
      %651 = vector.load %arg15[%c0_260, %c0_261, %c0_262] : memref<2x8x128xf32, #tpu.memory_space<vmem>>, vector<2x8x128xf32>
      tpu.vector_store %arg15[%c0_260, %c0_261, %c0_262], %650 {strides = array<i32>} : memref<2x8x128xf32, #tpu.memory_space<vmem>>, vector<2x8x128xf32>,
      %cst_263 = arith.constant 0.000000e+00 : f32
      %652 = vector.broadcast %cst_263 : f32 to vector<2x8x128xf32>
      %c0_264 = arith.constant 0 : index
      %c0_265 = arith.constant 0 : index
      %c0_266 = arith.constant 0 : index
      %653 = vector.load %arg16[%c0_264, %c0_265, %c0_266] : memref<2x8x128xf32, #tpu.memory_space<vmem>>, vector<2x8x128xf32>
      tpu.vector_store %arg16[%c0_264, %c0_265, %c0_266], %652 {strides = array<i32>} : memref<2x8x128xf32, #tpu.memory_space<vmem>>, vector<2x8x128xf32>,
    } else {
    }
    %c0 = arith.constant 0 : index
    %c0_1 = arith.constant 0 : index
    %c0_2 = arith.constant 0 : index
    %3 = vector.load %arg2[%c0, %c0_1, %c0_2] : memref<8x8x16xf32, #tpu.memory_space<vmem>>, vector<1x8x16xf32>
    %4 = vector.shape_cast %3 : vector<1x8x16xf32> to vector<8x16xf32>
    %5 = arith.truncf %4 : vector<8x16xf32> to vector<8x16xbf16>
    %c0_3 = arith.constant 0 : index
    %c0_4 = arith.constant 0 : index
    %6 = vector.load %arg3[%c0_3, %c0_4] : memref<16x512xbf16, #tpu.memory_space<vmem>>, vector<16x512xbf16>
    %cst = arith.constant dense<0.000000e+00> : vector<8x512xf32>
    %7 = tpu.matmul %5, %6, %cst {dimension_numbers = #tpu.dot_dimension_numbers<[1], [0], [0], [1], [0, 0, 1, 1], [], []>} : vector<8x16xbf16>, vector<16x512xbf16>, vector<8x512xf32> -> vector<8x512xf32>
    %c0_5 = arith.constant 0 : index
    %c0_6 = arith.constant 0 : index
    %8 = vector.load %arg4[%c0_5, %c0_6] : memref<1x512xf32, #tpu.memory_space<vmem>>, vector<1x512xf32>
    %9 = vector.broadcast %8 : vector<1x512xf32> to vector<8x512xf32>
    %10 = arith.addf %7, %9 : vector<8x512xf32>
    %c0_7 = arith.constant 0 : index
    %c0_8 = arith.constant 0 : index
    %c0_9 = arith.constant 0 : index
    %11 = vector.load %arg14[%c0_7, %c0_8, %c0_9] : memref<8x8x512xf32, #tpu.memory_space<vmem>>, vector<1x8x512xf32>
    %12 = vector.shape_cast %11 : vector<1x8x512xf32> to vector<8x512xf32>
    %13 = vector.shape_cast %10 : vector<8x512xf32> to vector<1x8x512xf32>
    tpu.vector_store %arg14[%c0_7, %c0_8, %c0_9], %13 {strides = array<i32>} : memref<8x8x512xf32, #tpu.memory_space<vmem>>, vector<1x8x512xf32>,
    %c1 = arith.constant 1 : index
    %c0_10 = arith.constant 0 : index
    %c0_11 = arith.constant 0 : index
    %14 = vector.load %arg2[%c1, %c0_10, %c0_11] : memref<8x8x16xf32, #tpu.memory_space<vmem>>, vector<1x8x16xf32>
    %15 = vector.shape_cast %14 : vector<1x8x16xf32> to vector<8x16xf32>
    %16 = arith.truncf %15 : vector<8x16xf32> to vector<8x16xbf16>
    %c0_12 = arith.constant 0 : index
    %c0_13 = arith.constant 0 : index
    %17 = vector.load %arg3[%c0_12, %c0_13] : memref<16x512xbf16, #tpu.memory_space<vmem>>, vector<16x512xbf16>
    %cst_14 = arith.constant dense<0.000000e+00> : vector<8x512xf32>
    %18 = tpu.matmul %16, %17, %cst_14 {dimension_numbers = #tpu.dot_dimension_numbers<[1], [0], [0], [1], [0, 0, 1, 1], [], []>} : vector<8x16xbf16>, vector<16x512xbf16>, vector<8x512xf32> -> vector<8x512xf32>
    %c0_15 = arith.constant 0 : index
    %c0_16 = arith.constant 0 : index
    %19 = vector.load %arg4[%c0_15, %c0_16] : memref<1x512xf32, #tpu.memory_space<vmem>>, vector<1x512xf32>
    %20 = vector.broadcast %19 : vector<1x512xf32> to vector<8x512xf32>
    %21 = arith.addf %18, %20 : vector<8x512xf32>
    %c1_17 = arith.constant 1 : index
    %c0_18 = arith.constant 0 : index
    %c0_19 = arith.constant 0 : index
    %22 = vector.load %arg14[%c1_17, %c0_18, %c0_19] : memref<8x8x512xf32, #tpu.memory_space<vmem>>, vector<1x8x512xf32>
    %23 = vector.shape_cast %22 : vector<1x8x512xf32> to vector<8x512xf32>
    %24 = vector.shape_cast %21 : vector<8x512xf32> to vector<1x8x512xf32>
    tpu.vector_store %arg14[%c1_17, %c0_18, %c0_19], %24 {strides = array<i32>} : memref<8x8x512xf32, #tpu.memory_space<vmem>>, vector<1x8x512xf32>,
    %c2 = arith.constant 2 : index
    %c0_20 = arith.constant 0 : index
    %c0_21 = arith.constant 0 : index
    %25 = vector.load %arg2[%c2, %c0_20, %c0_21] : memref<8x8x16xf32, #tpu.memory_space<vmem>>, vector<1x8x16xf32>
    %26 = vector.shape_cast %25 : vector<1x8x16xf32> to vector<8x16xf32>
    %27 = arith.truncf %26 : vector<8x16xf32> to vector<8x16xbf16>
    %c0_22 = arith.constant 0 : index
    %c0_23 = arith.constant 0 : index
    %28 = vector.load %arg3[%c0_22, %c0_23] : memref<16x512xbf16, #tpu.memory_space<vmem>>, vector<16x512xbf16>
    %cst_24 = arith.constant dense<0.000000e+00> : vector<8x512xf32>
    %29 = tpu.matmul %27, %28, %cst_24 {dimension_numbers = #tpu.dot_dimension_numbers<[1], [0], [0], [1], [0, 0, 1, 1], [], []>} : vector<8x16xbf16>, vector<16x512xbf16>, vector<8x512xf32> -> vector<8x512xf32>
    %c0_25 = arith.constant 0 : index
    %c0_26 = arith.constant 0 : index
    %30 = vector.load %arg4[%c0_25, %c0_26] : memref<1x512xf32, #tpu.memory_space<vmem>>, vector<1x512xf32>
    %31 = vector.broadcast %30 : vector<1x512xf32> to vector<8x512xf32>
    %32 = arith.addf %29, %31 : vector<8x512xf32>
    %c2_27 = arith.constant 2 : index
    %c0_28 = arith.constant 0 : index
    %c0_29 = arith.constant 0 : index
    %33 = vector.load %arg14[%c2_27, %c0_28, %c0_29] : memref<8x8x512xf32, #tpu.memory_space<vmem>>, vector<1x8x512xf32>
    %34 = vector.shape_cast %33 : vector<1x8x512xf32> to vector<8x512xf32>
    %35 = vector.shape_cast %32 : vector<8x512xf32> to vector<1x8x512xf32>
    tpu.vector_store %arg14[%c2_27, %c0_28, %c0_29], %35 {strides = array<i32>} : memref<8x8x512xf32, #tpu.memory_space<vmem>>, vector<1x8x512xf32>,
    %c3 = arith.constant 3 : index
    %c0_30 = arith.constant 0 : index
    %c0_31 = arith.constant 0 : index
    %36 = vector.load %arg2[%c3, %c0_30, %c0_31] : memref<8x8x16xf32, #tpu.memory_space<vmem>>, vector<1x8x16xf32>
    %37 = vector.shape_cast %36 : vector<1x8x16xf32> to vector<8x16xf32>
    %38 = arith.truncf %37 : vector<8x16xf32> to vector<8x16xbf16>
    %c0_32 = arith.constant 0 : index
    %c0_33 = arith.constant 0 : index
    %39 = vector.load %arg3[%c0_32, %c0_33] : memref<16x512xbf16, #tpu.memory_space<vmem>>, vector<16x512xbf16>
    %cst_34 = arith.constant dense<0.000000e+00> : vector<8x512xf32>
    %40 = tpu.matmul %38, %39, %cst_34 {dimension_numbers = #tpu.dot_dimension_numbers<[1], [0], [0], [1], [0, 0, 1, 1], [], []>} : vector<8x16xbf16>, vector<16x512xbf16>, vector<8x512xf32> -> vector<8x512xf32>
    %c0_35 = arith.constant 0 : index
    %c0_36 = arith.constant 0 : index
    %41 = vector.load %arg4[%c0_35, %c0_36] : memref<1x512xf32, #tpu.memory_space<vmem>>, vector<1x512xf32>
    %42 = vector.broadcast %41 : vector<1x512xf32> to vector<8x512xf32>
    %43 = arith.addf %40, %42 : vector<8x512xf32>
    %c3_37 = arith.constant 3 : index
    %c0_38 = arith.constant 0 : index
    %c0_39 = arith.constant 0 : index
    %44 = vector.load %arg14[%c3_37, %c0_38, %c0_39] : memref<8x8x512xf32, #tpu.memory_space<vmem>>, vector<1x8x512xf32>
    %45 = vector.shape_cast %44 : vector<1x8x512xf32> to vector<8x512xf32>
    %46 = vector.shape_cast %43 : vector<8x512xf32> to vector<1x8x512xf32>
    tpu.vector_store %arg14[%c3_37, %c0_38, %c0_39], %46 {strides = array<i32>} : memref<8x8x512xf32, #tpu.memory_space<vmem>>, vector<1x8x512xf32>,
    %c4 = arith.constant 4 : index
    %c0_40 = arith.constant 0 : index
    %c0_41 = arith.constant 0 : index
    %47 = vector.load %arg2[%c4, %c0_40, %c0_41] : memref<8x8x16xf32, #tpu.memory_space<vmem>>, vector<1x8x16xf32>
    %48 = vector.shape_cast %47 : vector<1x8x16xf32> to vector<8x16xf32>
    %49 = arith.truncf %48 : vector<8x16xf32> to vector<8x16xbf16>
    %c0_42 = arith.constant 0 : index
    %c0_43 = arith.constant 0 : index
    %50 = vector.load %arg3[%c0_42, %c0_43] : memref<16x512xbf16, #tpu.memory_space<vmem>>, vector<16x512xbf16>
    %cst_44 = arith.constant dense<0.000000e+00> : vector<8x512xf32>
    %51 = tpu.matmul %49, %50, %cst_44 {dimension_numbers = #tpu.dot_dimension_numbers<[1], [0], [0], [1], [0, 0, 1, 1], [], []>} : vector<8x16xbf16>, vector<16x512xbf16>, vector<8x512xf32> -> vector<8x512xf32>
    %c0_45 = arith.constant 0 : index
    %c0_46 = arith.constant 0 : index
    %52 = vector.load %arg4[%c0_45, %c0_46] : memref<1x512xf32, #tpu.memory_space<vmem>>, vector<1x512xf32>
    %53 = vector.broadcast %52 : vector<1x512xf32> to vector<8x512xf32>
    %54 = arith.addf %51, %53 : vector<8x512xf32>
    %c4_47 = arith.constant 4 : index
    %c0_48 = arith.constant 0 : index
    %c0_49 = arith.constant 0 : index
    %55 = vector.load %arg14[%c4_47, %c0_48, %c0_49] : memref<8x8x512xf32, #tpu.memory_space<vmem>>, vector<1x8x512xf32>
    %56 = vector.shape_cast %55 : vector<1x8x512xf32> to vector<8x512xf32>
    %57 = vector.shape_cast %54 : vector<8x512xf32> to vector<1x8x512xf32>
    tpu.vector_store %arg14[%c4_47, %c0_48, %c0_49], %57 {strides = array<i32>} : memref<8x8x512xf32, #tpu.memory_space<vmem>>, vector<1x8x512xf32>,
    %c5 = arith.constant 5 : index
    %c0_50 = arith.constant 0 : index
    %c0_51 = arith.constant 0 : index
    %58 = vector.load %arg2[%c5, %c0_50, %c0_51] : memref<8x8x16xf32, #tpu.memory_space<vmem>>, vector<1x8x16xf32>
    %59 = vector.shape_cast %58 : vector<1x8x16xf32> to vector<8x16xf32>
    %60 = arith.truncf %59 : vector<8x16xf32> to vector<8x16xbf16>
    %c0_52 = arith.constant 0 : index
    %c0_53 = arith.constant 0 : index
    %61 = vector.load %arg3[%c0_52, %c0_53] : memref<16x512xbf16, #tpu.memory_space<vmem>>, vector<16x512xbf16>
    %cst_54 = arith.constant dense<0.000000e+00> : vector<8x512xf32>
    %62 = tpu.matmul %60, %61, %cst_54 {dimension_numbers = #tpu.dot_dimension_numbers<[1], [0], [0], [1], [0, 0, 1, 1], [], []>} : vector<8x16xbf16>, vector<16x512xbf16>, vector<8x512xf32> -> vector<8x512xf32>
    %c0_55 = arith.constant 0 : index
    %c0_56 = arith.constant 0 : index
    %63 = vector.load %arg4[%c0_55, %c0_56] : memref<1x512xf32, #tpu.memory_space<vmem>>, vector<1x512xf32>
    %64 = vector.broadcast %63 : vector<1x512xf32> to vector<8x512xf32>
    %65 = arith.addf %62, %64 : vector<8x512xf32>
    %c5_57 = arith.constant 5 : index
    %c0_58 = arith.constant 0 : index
    %c0_59 = arith.constant 0 : index
    %66 = vector.load %arg14[%c5_57, %c0_58, %c0_59] : memref<8x8x512xf32, #tpu.memory_space<vmem>>, vector<1x8x512xf32>
    %67 = vector.shape_cast %66 : vector<1x8x512xf32> to vector<8x512xf32>
    %68 = vector.shape_cast %65 : vector<8x512xf32> to vector<1x8x512xf32>
    tpu.vector_store %arg14[%c5_57, %c0_58, %c0_59], %68 {strides = array<i32>} : memref<8x8x512xf32, #tpu.memory_space<vmem>>, vector<1x8x512xf32>,
    %c6 = arith.constant 6 : index
    %c0_60 = arith.constant 0 : index
    %c0_61 = arith.constant 0 : index
    %69 = vector.load %arg2[%c6, %c0_60, %c0_61] : memref<8x8x16xf32, #tpu.memory_space<vmem>>, vector<1x8x16xf32>
    %70 = vector.shape_cast %69 : vector<1x8x16xf32> to vector<8x16xf32>
    %71 = arith.truncf %70 : vector<8x16xf32> to vector<8x16xbf16>
    %c0_62 = arith.constant 0 : index
    %c0_63 = arith.constant 0 : index
    %72 = vector.load %arg3[%c0_62, %c0_63] : memref<16x512xbf16, #tpu.memory_space<vmem>>, vector<16x512xbf16>
    %cst_64 = arith.constant dense<0.000000e+00> : vector<8x512xf32>
    %73 = tpu.matmul %71, %72, %cst_64 {dimension_numbers = #tpu.dot_dimension_numbers<[1], [0], [0], [1], [0, 0, 1, 1], [], []>} : vector<8x16xbf16>, vector<16x512xbf16>, vector<8x512xf32> -> vector<8x512xf32>
    %c0_65 = arith.constant 0 : index
    %c0_66 = arith.constant 0 : index
    %74 = vector.load %arg4[%c0_65, %c0_66] : memref<1x512xf32, #tpu.memory_space<vmem>>, vector<1x512xf32>
    %75 = vector.broadcast %74 : vector<1x512xf32> to vector<8x512xf32>
    %76 = arith.addf %73, %75 : vector<8x512xf32>
    %c6_67 = arith.constant 6 : index
    %c0_68 = arith.constant 0 : index
    %c0_69 = arith.constant 0 : index
    %77 = vector.load %arg14[%c6_67, %c0_68, %c0_69] : memref<8x8x512xf32, #tpu.memory_space<vmem>>, vector<1x8x512xf32>
    %78 = vector.shape_cast %77 : vector<1x8x512xf32> to vector<8x512xf32>
    %79 = vector.shape_cast %76 : vector<8x512xf32> to vector<1x8x512xf32>
    tpu.vector_store %arg14[%c6_67, %c0_68, %c0_69], %79 {strides = array<i32>} : memref<8x8x512xf32, #tpu.memory_space<vmem>>, vector<1x8x512xf32>,
    %c7 = arith.constant 7 : index
    %c0_70 = arith.constant 0 : index
    %c0_71 = arith.constant 0 : index
    %80 = vector.load %arg2[%c7, %c0_70, %c0_71] : memref<8x8x16xf32, #tpu.memory_space<vmem>>, vector<1x8x16xf32>
    %81 = vector.shape_cast %80 : vector<1x8x16xf32> to vector<8x16xf32>
    %82 = arith.truncf %81 : vector<8x16xf32> to vector<8x16xbf16>
    %c0_72 = arith.constant 0 : index
    %c0_73 = arith.constant 0 : index
    %83 = vector.load %arg3[%c0_72, %c0_73] : memref<16x512xbf16, #tpu.memory_space<vmem>>, vector<16x512xbf16>
    %cst_74 = arith.constant dense<0.000000e+00> : vector<8x512xf32>
    %84 = tpu.matmul %82, %83, %cst_74 {dimension_numbers = #tpu.dot_dimension_numbers<[1], [0], [0], [1], [0, 0, 1, 1], [], []>} : vector<8x16xbf16>, vector<16x512xbf16>, vector<8x512xf32> -> vector<8x512xf32>
    %c0_75 = arith.constant 0 : index
    %c0_76 = arith.constant 0 : index
    %85 = vector.load %arg4[%c0_75, %c0_76] : memref<1x512xf32, #tpu.memory_space<vmem>>, vector<1x512xf32>
    %86 = vector.broadcast %85 : vector<1x512xf32> to vector<8x512xf32>
    %87 = arith.addf %84, %86 : vector<8x512xf32>
    %c7_77 = arith.constant 7 : index
    %c0_78 = arith.constant 0 : index
    %c0_79 = arith.constant 0 : index
    %88 = vector.load %arg14[%c7_77, %c0_78, %c0_79] : memref<8x8x512xf32, #tpu.memory_space<vmem>>, vector<1x8x512xf32>
    %89 = vector.shape_cast %88 : vector<1x8x512xf32> to vector<8x512xf32>
    %90 = vector.shape_cast %87 : vector<8x512xf32> to vector<1x8x512xf32>
    tpu.vector_store %arg14[%c7_77, %c0_78, %c0_79], %90 {strides = array<i32>} : memref<8x8x512xf32, #tpu.memory_space<vmem>>, vector<1x8x512xf32>,
    %c0_80 = arith.constant 0 : index
    %c0_81 = arith.constant 0 : index
    %c0_82 = arith.constant 0 : index
    %91 = vector.load %arg15[%c0_80, %c0_81, %c0_82] : memref<2x8x128xf32, #tpu.memory_space<vmem>>, vector<1x8x128xf32>
    %92 = vector.shape_cast %91 : vector<1x8x128xf32> to vector<8x128xf32>
    %c0_83 = arith.constant 0 : index
    %c0_84 = arith.constant 0 : index
    %c0_85 = arith.constant 0 : index
    %93 = vector.load %arg16[%c0_83, %c0_84, %c0_85] : memref<2x8x128xf32, #tpu.memory_space<vmem>>, vector<1x8x128xf32>
    %94 = vector.shape_cast %93 : vector<1x8x128xf32> to vector<8x128xf32>
    %c1_86 = arith.constant 1 : index
    %c0_87 = arith.constant 0 : index
    %c0_88 = arith.constant 0 : index
    %95 = vector.load %arg15[%c1_86, %c0_87, %c0_88] : memref<2x8x128xf32, #tpu.memory_space<vmem>>, vector<1x8x128xf32>
    %96 = vector.shape_cast %95 : vector<1x8x128xf32> to vector<8x128xf32>
    %c1_89 = arith.constant 1 : index
    %c0_90 = arith.constant 0 : index
    %c0_91 = arith.constant 0 : index
    %97 = vector.load %arg16[%c1_89, %c0_90, %c0_91] : memref<2x8x128xf32, #tpu.memory_space<vmem>>, vector<1x8x128xf32>
    %98 = vector.shape_cast %97 : vector<1x8x128xf32> to vector<8x128xf32>
    %c0_i32_92 = arith.constant 0 : i32
    %99 = arith.truncf %96 : vector<8x128xf32> to vector<8x128xbf16>
    %c0_93 = arith.constant 0 : index
    %c0_94 = arith.constant 0 : index
    %100 = vector.load %arg7[%c0_93, %c0_94] : memref<128x512xbf16, #tpu.memory_space<vmem>>, vector<128x512xbf16>
    %cst_95 = arith.constant dense<0.000000e+00> : vector<8x512xf32>
    %101 = tpu.matmul %99, %100, %cst_95 {dimension_numbers = #tpu.dot_dimension_numbers<[1], [0], [0], [1], [0, 0, 1, 1], [], []>} : vector<8x128xbf16>, vector<128x512xbf16>, vector<8x512xf32> -> vector<8x512xf32>
    %c0_96 = arith.constant 0 : index
    %c0_97 = arith.constant 0 : index
    %102 = vector.load %arg8[%c0_96, %c0_97] : memref<1x512xf32, #tpu.memory_space<vmem>>, vector<1x512xf32>
    %103 = vector.broadcast %102 : vector<1x512xf32> to vector<8x512xf32>
    %104 = arith.addf %101, %103 : vector<8x512xf32>
    %105 = arith.index_cast %c0_i32_92 : i32 to index
    %c0_98 = arith.constant 0 : index
    %c0_99 = arith.constant 0 : index
    %106 = vector.load %arg14[%105, %c0_98, %c0_99] : memref<8x8x512xf32, #tpu.memory_space<vmem>>, vector<1x8x512xf32>
    %107 = vector.shape_cast %106 : vector<1x8x512xf32> to vector<8x512xf32>
    %108 = arith.truncf %92 : vector<8x128xf32> to vector<8x128xbf16>
    %c0_100 = arith.constant 0 : index
    %c0_101 = arith.constant 0 : index
    %109 = vector.load %arg5[%c0_100, %c0_101] : memref<128x512xbf16, #tpu.memory_space<vmem>>, vector<128x512xbf16>
    %cst_102 = arith.constant dense<0.000000e+00> : vector<8x512xf32>
    %110 = tpu.matmul %108, %109, %cst_102 {dimension_numbers = #tpu.dot_dimension_numbers<[1], [0], [0], [1], [0, 0, 1, 1], [], []>} : vector<8x128xbf16>, vector<128x512xbf16>, vector<8x512xf32> -> vector<8x512xf32>
    %111 = arith.addf %107, %110 : vector<8x512xf32>
    %112 = vector.extract_strided_slice %111 {offsets = [0, 0], sizes = [8, 128], strides = [1, 1]} : vector<8x512xf32> to vector<8x128xf32>
    %113 = arith.negf %112 : vector<8x128xf32>
    %114 = math.exp %113 : vector<8x128xf32>
    %cst_103 = arith.constant 1.000000e+00 : f32
    %115 = vector.broadcast %cst_103 : f32 to vector<8x128xf32>
    %116 = arith.addf %115, %114 : vector<8x128xf32>
    %117 = arith.divf %115, %116 : vector<8x128xf32>
    %118 = vector.extract_strided_slice %111 {offsets = [0, 128], sizes = [8, 128], strides = [1, 1]} : vector<8x512xf32> to vector<8x128xf32>
    %119 = arith.negf %118 : vector<8x128xf32>
    %120 = math.exp %119 : vector<8x128xf32>
    %cst_104 = arith.constant 1.000000e+00 : f32
    %121 = vector.broadcast %cst_104 : f32 to vector<8x128xf32>
    %122 = arith.addf %121, %120 : vector<8x128xf32>
    %123 = arith.divf %121, %122 : vector<8x128xf32>
    %124 = vector.extract_strided_slice %111 {offsets = [0, 256], sizes = [8, 128], strides = [1, 1]} : vector<8x512xf32> to vector<8x128xf32>
    %125 = math.tanh %124 : vector<8x128xf32>
    %126 = vector.extract_strided_slice %111 {offsets = [0, 384], sizes = [8, 128], strides = [1, 1]} : vector<8x512xf32> to vector<8x128xf32>
    %127 = arith.negf %126 : vector<8x128xf32>
    %128 = math.exp %127 : vector<8x128xf32>
    %cst_105 = arith.constant 1.000000e+00 : f32
    %129 = vector.broadcast %cst_105 : f32 to vector<8x128xf32>
    %130 = arith.addf %129, %128 : vector<8x128xf32>
    %131 = arith.divf %129, %130 : vector<8x128xf32>
    %132 = arith.mulf %123, %94 : vector<8x128xf32>
    %133 = arith.mulf %117, %125 : vector<8x128xf32>
    %134 = arith.addf %132, %133 : vector<8x128xf32>
    %135 = math.tanh %134 : vector<8x128xf32>
    %136 = arith.mulf %131, %135 : vector<8x128xf32>
    %137 = arith.truncf %136 : vector<8x128xf32> to vector<8x128xbf16>
    %c0_106 = arith.constant 0 : index
    %c0_107 = arith.constant 0 : index
    %138 = vector.load %arg6[%c0_106, %c0_107] : memref<128x512xbf16, #tpu.memory_space<vmem>>, vector<128x512xbf16>
    %cst_108 = arith.constant dense<0.000000e+00> : vector<8x512xf32>
    %139 = tpu.matmul %137, %138, %cst_108 {dimension_numbers = #tpu.dot_dimension_numbers<[1], [0], [0], [1], [0, 0, 1, 1], [], []>} : vector<8x128xbf16>, vector<128x512xbf16>, vector<8x512xf32> -> vector<8x512xf32>
    %140 = arith.addf %104, %139 : vector<8x512xf32>
    %141 = vector.extract_strided_slice %140 {offsets = [0, 0], sizes = [8, 128], strides = [1, 1]} : vector<8x512xf32> to vector<8x128xf32>
    %142 = arith.negf %141 : vector<8x128xf32>
    %143 = math.exp %142 : vector<8x128xf32>
    %cst_109 = arith.constant 1.000000e+00 : f32
    %144 = vector.broadcast %cst_109 : f32 to vector<8x128xf32>
    %145 = arith.addf %144, %143 : vector<8x128xf32>
    %146 = arith.divf %144, %145 : vector<8x128xf32>
    %147 = vector.extract_strided_slice %140 {offsets = [0, 128], sizes = [8, 128], strides = [1, 1]} : vector<8x512xf32> to vector<8x128xf32>
    %148 = arith.negf %147 : vector<8x128xf32>
    %149 = math.exp %148 : vector<8x128xf32>
    %cst_110 = arith.constant 1.000000e+00 : f32
    %150 = vector.broadcast %cst_110 : f32 to vector<8x128xf32>
    %151 = arith.addf %150, %149 : vector<8x128xf32>
    %152 = arith.divf %150, %151 : vector<8x128xf32>
    %153 = vector.extract_strided_slice %140 {offsets = [0, 256], sizes = [8, 128], strides = [1, 1]} : vector<8x512xf32> to vector<8x128xf32>
    %154 = math.tanh %153 : vector<8x128xf32>
    %155 = vector.extract_strided_slice %140 {offsets = [0, 384], sizes = [8, 128], strides = [1, 1]} : vector<8x512xf32> to vector<8x128xf32>
    %156 = arith.negf %155 : vector<8x128xf32>
    %157 = math.exp %156 : vector<8x128xf32>
    %cst_111 = arith.constant 1.000000e+00 : f32
    %158 = vector.broadcast %cst_111 : f32 to vector<8x128xf32>
    %159 = arith.addf %158, %157 : vector<8x128xf32>
    %160 = arith.divf %158, %159 : vector<8x128xf32>
    %161 = arith.mulf %152, %98 : vector<8x128xf32>
    %162 = arith.mulf %146, %154 : vector<8x128xf32>
    %163 = arith.addf %161, %162 : vector<8x128xf32>
    %164 = math.tanh %163 : vector<8x128xf32>
    %165 = arith.mulf %160, %164 : vector<8x128xf32>
    %c1_i32 = arith.constant 1 : i32
    %166 = arith.truncf %165 : vector<8x128xf32> to vector<8x128xbf16>
    %c0_112 = arith.constant 0 : index
    %c0_113 = arith.constant 0 : index
    %167 = vector.load %arg7[%c0_112, %c0_113] : memref<128x512xbf16, #tpu.memory_space<vmem>>, vector<128x512xbf16>
    %cst_114 = arith.constant dense<0.000000e+00> : vector<8x512xf32>
    %168 = tpu.matmul %166, %167, %cst_114 {dimension_numbers = #tpu.dot_dimension_numbers<[1], [0], [0], [1], [0, 0, 1, 1], [], []>} : vector<8x128xbf16>, vector<128x512xbf16>, vector<8x512xf32> -> vector<8x512xf32>
    %c0_115 = arith.constant 0 : index
    %c0_116 = arith.constant 0 : index
    %169 = vector.load %arg8[%c0_115, %c0_116] : memref<1x512xf32, #tpu.memory_space<vmem>>, vector<1x512xf32>
    %170 = vector.broadcast %169 : vector<1x512xf32> to vector<8x512xf32>
    %171 = arith.addf %168, %170 : vector<8x512xf32>
    %172 = arith.index_cast %c1_i32 : i32 to index
    %c0_117 = arith.constant 0 : index
    %c0_118 = arith.constant 0 : index
    %173 = vector.load %arg14[%172, %c0_117, %c0_118] : memref<8x8x512xf32, #tpu.memory_space<vmem>>, vector<1x8x512xf32>
    %174 = vector.shape_cast %173 : vector<1x8x512xf32> to vector<8x512xf32>
    %175 = arith.truncf %136 : vector<8x128xf32> to vector<8x128xbf16>
    %c0_119 = arith.constant 0 : index
    %c0_120 = arith.constant 0 : index
    %176 = vector.load %arg5[%c0_119, %c0_120] : memref<128x512xbf16, #tpu.memory_space<vmem>>, vector<128x512xbf16>
    %cst_121 = arith.constant dense<0.000000e+00> : vector<8x512xf32>
    %177 = tpu.matmul %175, %176, %cst_121 {dimension_numbers = #tpu.dot_dimension_numbers<[1], [0], [0], [1], [0, 0, 1, 1], [], []>} : vector<8x128xbf16>, vector<128x512xbf16>, vector<8x512xf32> -> vector<8x512xf32>
    %178 = arith.addf %174, %177 : vector<8x512xf32>
    %179 = vector.extract_strided_slice %178 {offsets = [0, 0], sizes = [8, 128], strides = [1, 1]} : vector<8x512xf32> to vector<8x128xf32>
    %180 = arith.negf %179 : vector<8x128xf32>
    %181 = math.exp %180 : vector<8x128xf32>
    %cst_122 = arith.constant 1.000000e+00 : f32
    %182 = vector.broadcast %cst_122 : f32 to vector<8x128xf32>
    %183 = arith.addf %182, %181 : vector<8x128xf32>
    %184 = arith.divf %182, %183 : vector<8x128xf32>
    %185 = vector.extract_strided_slice %178 {offsets = [0, 128], sizes = [8, 128], strides = [1, 1]} : vector<8x512xf32> to vector<8x128xf32>
    %186 = arith.negf %185 : vector<8x128xf32>
    %187 = math.exp %186 : vector<8x128xf32>
    %cst_123 = arith.constant 1.000000e+00 : f32
    %188 = vector.broadcast %cst_123 : f32 to vector<8x128xf32>
    %189 = arith.addf %188, %187 : vector<8x128xf32>
    %190 = arith.divf %188, %189 : vector<8x128xf32>
    %191 = vector.extract_strided_slice %178 {offsets = [0, 256], sizes = [8, 128], strides = [1, 1]} : vector<8x512xf32> to vector<8x128xf32>
    %192 = math.tanh %191 : vector<8x128xf32>
    %193 = vector.extract_strided_slice %178 {offsets = [0, 384], sizes = [8, 128], strides = [1, 1]} : vector<8x512xf32> to vector<8x128xf32>
    %194 = arith.negf %193 : vector<8x128xf32>
    %195 = math.exp %194 : vector<8x128xf32>
    %cst_124 = arith.constant 1.000000e+00 : f32
    %196 = vector.broadcast %cst_124 : f32 to vector<8x128xf32>
    %197 = arith.addf %196, %195 : vector<8x128xf32>
    %198 = arith.divf %196, %197 : vector<8x128xf32>
    %199 = arith.mulf %190, %134 : vector<8x128xf32>
    %200 = arith.mulf %184, %192 : vector<8x128xf32>
    %201 = arith.addf %199, %200 : vector<8x128xf32>
    %202 = math.tanh %201 : vector<8x128xf32>
    %203 = arith.mulf %198, %202 : vector<8x128xf32>
    %204 = arith.truncf %203 : vector<8x128xf32> to vector<8x128xbf16>
    %c0_125 = arith.constant 0 : index
    %c0_126 = arith.constant 0 : index
    %205 = vector.load %arg6[%c0_125, %c0_126] : memref<128x512xbf16, #tpu.memory_space<vmem>>, vector<128x512xbf16>
    %cst_127 = arith.constant dense<0.000000e+00> : vector<8x512xf32>
    %206 = tpu.matmul %204, %205, %cst_127 {dimension_numbers = #tpu.dot_dimension_numbers<[1], [0], [0], [1], [0, 0, 1, 1], [], []>} : vector<8x128xbf16>, vector<128x512xbf16>, vector<8x512xf32> -> vector<8x512xf32>
    %207 = arith.addf %171, %206 : vector<8x512xf32>
    %208 = vector.extract_strided_slice %207 {offsets = [0, 0], sizes = [8, 128], strides = [1, 1]} : vector<8x512xf32> to vector<8x128xf32>
    %209 = arith.negf %208 : vector<8x128xf32>
    %210 = math.exp %209 : vector<8x128xf32>
    %cst_128 = arith.constant 1.000000e+00 : f32
    %211 = vector.broadcast %cst_128 : f32 to vector<8x128xf32>
    %212 = arith.addf %211, %210 : vector<8x128xf32>
    %213 = arith.divf %211, %212 : vector<8x128xf32>
    %214 = vector.extract_strided_slice %207 {offsets = [0, 128], sizes = [8, 128], strides = [1, 1]} : vector<8x512xf32> to vector<8x128xf32>
    %215 = arith.negf %214 : vector<8x128xf32>
    %216 = math.exp %215 : vector<8x128xf32>
    %cst_129 = arith.constant 1.000000e+00 : f32
    %217 = vector.broadcast %cst_129 : f32 to vector<8x128xf32>
    %218 = arith.addf %217, %216 : vector<8x128xf32>
    %219 = arith.divf %217, %218 : vector<8x128xf32>
    %220 = vector.extract_strided_slice %207 {offsets = [0, 256], sizes = [8, 128], strides = [1, 1]} : vector<8x512xf32> to vector<8x128xf32>
    %221 = math.tanh %220 : vector<8x128xf32>
    %222 = vector.extract_strided_slice %207 {offsets = [0, 384], sizes = [8, 128], strides = [1, 1]} : vector<8x512xf32> to vector<8x128xf32>
    %223 = arith.negf %222 : vector<8x128xf32>
    %224 = math.exp %223 : vector<8x128xf32>
    %cst_130 = arith.constant 1.000000e+00 : f32
    %225 = vector.broadcast %cst_130 : f32 to vector<8x128xf32>
    %226 = arith.addf %225, %224 : vector<8x128xf32>
    %227 = arith.divf %225, %226 : vector<8x128xf32>
    %228 = arith.mulf %219, %163 : vector<8x128xf32>
    %229 = arith.mulf %213, %221 : vector<8x128xf32>
    %230 = arith.addf %228, %229 : vector<8x128xf32>
    %231 = math.tanh %230 : vector<8x128xf32>
    %232 = arith.mulf %227, %231 : vector<8x128xf32>
    %c2_i32 = arith.constant 2 : i32
    %233 = arith.truncf %232 : vector<8x128xf32> to vector<8x128xbf16>
    %c0_131 = arith.constant 0 : index
    %c0_132 = arith.constant 0 : index
    %234 = vector.load %arg7[%c0_131, %c0_132] : memref<128x512xbf16, #tpu.memory_space<vmem>>, vector<128x512xbf16>
    %cst_133 = arith.constant dense<0.000000e+00> : vector<8x512xf32>
    %235 = tpu.matmul %233, %234, %cst_133 {dimension_numbers = #tpu.dot_dimension_numbers<[1], [0], [0], [1], [0, 0, 1, 1], [], []>} : vector<8x128xbf16>, vector<128x512xbf16>, vector<8x512xf32> -> vector<8x512xf32>
    %c0_134 = arith.constant 0 : index
    %c0_135 = arith.constant 0 : index
    %236 = vector.load %arg8[%c0_134, %c0_135] : memref<1x512xf32, #tpu.memory_space<vmem>>, vector<1x512xf32>
    %237 = vector.broadcast %236 : vector<1x512xf32> to vector<8x512xf32>
    %238 = arith.addf %235, %237 : vector<8x512xf32>
    %239 = arith.index_cast %c2_i32 : i32 to index
    %c0_136 = arith.constant 0 : index
    %c0_137 = arith.constant 0 : index
    %240 = vector.load %arg14[%239, %c0_136, %c0_137] : memref<8x8x512xf32, #tpu.memory_space<vmem>>, vector<1x8x512xf32>
    %241 = vector.shape_cast %240 : vector<1x8x512xf32> to vector<8x512xf32>
    %242 = arith.truncf %203 : vector<8x128xf32> to vector<8x128xbf16>
    %c0_138 = arith.constant 0 : index
    %c0_139 = arith.constant 0 : index
    %243 = vector.load %arg5[%c0_138, %c0_139] : memref<128x512xbf16, #tpu.memory_space<vmem>>, vector<128x512xbf16>
    %cst_140 = arith.constant dense<0.000000e+00> : vector<8x512xf32>
    %244 = tpu.matmul %242, %243, %cst_140 {dimension_numbers = #tpu.dot_dimension_numbers<[1], [0], [0], [1], [0, 0, 1, 1], [], []>} : vector<8x128xbf16>, vector<128x512xbf16>, vector<8x512xf32> -> vector<8x512xf32>
    %245 = arith.addf %241, %244 : vector<8x512xf32>
    %246 = vector.extract_strided_slice %245 {offsets = [0, 0], sizes = [8, 128], strides = [1, 1]} : vector<8x512xf32> to vector<8x128xf32>
    %247 = arith.negf %246 : vector<8x128xf32>
    %248 = math.exp %247 : vector<8x128xf32>
    %cst_141 = arith.constant 1.000000e+00 : f32
    %249 = vector.broadcast %cst_141 : f32 to vector<8x128xf32>
    %250 = arith.addf %249, %248 : vector<8x128xf32>
    %251 = arith.divf %249, %250 : vector<8x128xf32>
    %252 = vector.extract_strided_slice %245 {offsets = [0, 128], sizes = [8, 128], strides = [1, 1]} : vector<8x512xf32> to vector<8x128xf32>
    %253 = arith.negf %252 : vector<8x128xf32>
    %254 = math.exp %253 : vector<8x128xf32>
    %cst_142 = arith.constant 1.000000e+00 : f32
    %255 = vector.broadcast %cst_142 : f32 to vector<8x128xf32>
    %256 = arith.addf %255, %254 : vector<8x128xf32>
    %257 = arith.divf %255, %256 : vector<8x128xf32>
    %258 = vector.extract_strided_slice %245 {offsets = [0, 256], sizes = [8, 128], strides = [1, 1]} : vector<8x512xf32> to vector<8x128xf32>
    %259 = math.tanh %258 : vector<8x128xf32>
    %260 = vector.extract_strided_slice %245 {offsets = [0, 384], sizes = [8, 128], strides = [1, 1]} : vector<8x512xf32> to vector<8x128xf32>
    %261 = arith.negf %260 : vector<8x128xf32>
    %262 = math.exp %261 : vector<8x128xf32>
    %cst_143 = arith.constant 1.000000e+00 : f32
    %263 = vector.broadcast %cst_143 : f32 to vector<8x128xf32>
    %264 = arith.addf %263, %262 : vector<8x128xf32>
    %265 = arith.divf %263, %264 : vector<8x128xf32>
    %266 = arith.mulf %257, %201 : vector<8x128xf32>
    %267 = arith.mulf %251, %259 : vector<8x128xf32>
    %268 = arith.addf %266, %267 : vector<8x128xf32>
    %269 = math.tanh %268 : vector<8x128xf32>
    %270 = arith.mulf %265, %269 : vector<8x128xf32>
    %271 = arith.truncf %270 : vector<8x128xf32> to vector<8x128xbf16>
    %c0_144 = arith.constant 0 : index
    %c0_145 = arith.constant 0 : index
    %272 = vector.load %arg6[%c0_144, %c0_145] : memref<128x512xbf16, #tpu.memory_space<vmem>>, vector<128x512xbf16>
    %cst_146 = arith.constant dense<0.000000e+00> : vector<8x512xf32>
    %273 = tpu.matmul %271, %272, %cst_146 {dimension_numbers = #tpu.dot_dimension_numbers<[1], [0], [0], [1], [0, 0, 1, 1], [], []>} : vector<8x128xbf16>, vector<128x512xbf16>, vector<8x512xf32> -> vector<8x512xf32>
    %274 = arith.addf %238, %273 : vector<8x512xf32>
    %275 = vector.extract_strided_slice %274 {offsets = [0, 0], sizes = [8, 128], strides = [1, 1]} : vector<8x512xf32> to vector<8x128xf32>
    %276 = arith.negf %275 : vector<8x128xf32>
    %277 = math.exp %276 : vector<8x128xf32>
    %cst_147 = arith.constant 1.000000e+00 : f32
    %278 = vector.broadcast %cst_147 : f32 to vector<8x128xf32>
    %279 = arith.addf %278, %277 : vector<8x128xf32>
    %280 = arith.divf %278, %279 : vector<8x128xf32>
    %281 = vector.extract_strided_slice %274 {offsets = [0, 128], sizes = [8, 128], strides = [1, 1]} : vector<8x512xf32> to vector<8x128xf32>
    %282 = arith.negf %281 : vector<8x128xf32>
    %283 = math.exp %282 : vector<8x128xf32>
    %cst_148 = arith.constant 1.000000e+00 : f32
    %284 = vector.broadcast %cst_148 : f32 to vector<8x128xf32>
    %285 = arith.addf %284, %283 : vector<8x128xf32>
    %286 = arith.divf %284, %285 : vector<8x128xf32>
    %287 = vector.extract_strided_slice %274 {offsets = [0, 256], sizes = [8, 128], strides = [1, 1]} : vector<8x512xf32> to vector<8x128xf32>
    %288 = math.tanh %287 : vector<8x128xf32>
    %289 = vector.extract_strided_slice %274 {offsets = [0, 384], sizes = [8, 128], strides = [1, 1]} : vector<8x512xf32> to vector<8x128xf32>
    %290 = arith.negf %289 : vector<8x128xf32>
    %291 = math.exp %290 : vector<8x128xf32>
    %cst_149 = arith.constant 1.000000e+00 : f32
    %292 = vector.broadcast %cst_149 : f32 to vector<8x128xf32>
    %293 = arith.addf %292, %291 : vector<8x128xf32>
    %294 = arith.divf %292, %293 : vector<8x128xf32>
    %295 = arith.mulf %286, %230 : vector<8x128xf32>
    %296 = arith.mulf %280, %288 : vector<8x128xf32>
    %297 = arith.addf %295, %296 : vector<8x128xf32>
    %298 = math.tanh %297 : vector<8x128xf32>
    %299 = arith.mulf %294, %298 : vector<8x128xf32>
    %c3_i32 = arith.constant 3 : i32
    %300 = arith.truncf %299 : vector<8x128xf32> to vector<8x128xbf16>
    %c0_150 = arith.constant 0 : index
    %c0_151 = arith.constant 0 : index
    %301 = vector.load %arg7[%c0_150, %c0_151] : memref<128x512xbf16, #tpu.memory_space<vmem>>, vector<128x512xbf16>
    %cst_152 = arith.constant dense<0.000000e+00> : vector<8x512xf32>
    %302 = tpu.matmul %300, %301, %cst_152 {dimension_numbers = #tpu.dot_dimension_numbers<[1], [0], [0], [1], [0, 0, 1, 1], [], []>} : vector<8x128xbf16>, vector<128x512xbf16>, vector<8x512xf32> -> vector<8x512xf32>
    %c0_153 = arith.constant 0 : index
    %c0_154 = arith.constant 0 : index
    %303 = vector.load %arg8[%c0_153, %c0_154] : memref<1x512xf32, #tpu.memory_space<vmem>>, vector<1x512xf32>
    %304 = vector.broadcast %303 : vector<1x512xf32> to vector<8x512xf32>
    %305 = arith.addf %302, %304 : vector<8x512xf32>
    %306 = arith.index_cast %c3_i32 : i32 to index
    %c0_155 = arith.constant 0 : index
    %c0_156 = arith.constant 0 : index
    %307 = vector.load %arg14[%306, %c0_155, %c0_156] : memref<8x8x512xf32, #tpu.memory_space<vmem>>, vector<1x8x512xf32>
    %308 = vector.shape_cast %307 : vector<1x8x512xf32> to vector<8x512xf32>
    %309 = arith.truncf %270 : vector<8x128xf32> to vector<8x128xbf16>
    %c0_157 = arith.constant 0 : index
    %c0_158 = arith.constant 0 : index
    %310 = vector.load %arg5[%c0_157, %c0_158] : memref<128x512xbf16, #tpu.memory_space<vmem>>, vector<128x512xbf16>
    %cst_159 = arith.constant dense<0.000000e+00> : vector<8x512xf32>
    %311 = tpu.matmul %309, %310, %cst_159 {dimension_numbers = #tpu.dot_dimension_numbers<[1], [0], [0], [1], [0, 0, 1, 1], [], []>} : vector<8x128xbf16>, vector<128x512xbf16>, vector<8x512xf32> -> vector<8x512xf32>
    %312 = arith.addf %308, %311 : vector<8x512xf32>
    %313 = vector.extract_strided_slice %312 {offsets = [0, 0], sizes = [8, 128], strides = [1, 1]} : vector<8x512xf32> to vector<8x128xf32>
    %314 = arith.negf %313 : vector<8x128xf32>
    %315 = math.exp %314 : vector<8x128xf32>
    %cst_160 = arith.constant 1.000000e+00 : f32
    %316 = vector.broadcast %cst_160 : f32 to vector<8x128xf32>
    %317 = arith.addf %316, %315 : vector<8x128xf32>
    %318 = arith.divf %316, %317 : vector<8x128xf32>
    %319 = vector.extract_strided_slice %312 {offsets = [0, 128], sizes = [8, 128], strides = [1, 1]} : vector<8x512xf32> to vector<8x128xf32>
    %320 = arith.negf %319 : vector<8x128xf32>
    %321 = math.exp %320 : vector<8x128xf32>
    %cst_161 = arith.constant 1.000000e+00 : f32
    %322 = vector.broadcast %cst_161 : f32 to vector<8x128xf32>
    %323 = arith.addf %322, %321 : vector<8x128xf32>
    %324 = arith.divf %322, %323 : vector<8x128xf32>
    %325 = vector.extract_strided_slice %312 {offsets = [0, 256], sizes = [8, 128], strides = [1, 1]} : vector<8x512xf32> to vector<8x128xf32>
    %326 = math.tanh %325 : vector<8x128xf32>
    %327 = vector.extract_strided_slice %312 {offsets = [0, 384], sizes = [8, 128], strides = [1, 1]} : vector<8x512xf32> to vector<8x128xf32>
    %328 = arith.negf %327 : vector<8x128xf32>
    %329 = math.exp %328 : vector<8x128xf32>
    %cst_162 = arith.constant 1.000000e+00 : f32
    %330 = vector.broadcast %cst_162 : f32 to vector<8x128xf32>
    %331 = arith.addf %330, %329 : vector<8x128xf32>
    %332 = arith.divf %330, %331 : vector<8x128xf32>
    %333 = arith.mulf %324, %268 : vector<8x128xf32>
    %334 = arith.mulf %318, %326 : vector<8x128xf32>
    %335 = arith.addf %333, %334 : vector<8x128xf32>
    %336 = math.tanh %335 : vector<8x128xf32>
    %337 = arith.mulf %332, %336 : vector<8x128xf32>
    %338 = arith.truncf %337 : vector<8x128xf32> to vector<8x128xbf16>
    %c0_163 = arith.constant 0 : index
    %c0_164 = arith.constant 0 : index
    %339 = vector.load %arg6[%c0_163, %c0_164] : memref<128x512xbf16, #tpu.memory_space<vmem>>, vector<128x512xbf16>
    %cst_165 = arith.constant dense<0.000000e+00> : vector<8x512xf32>
    %340 = tpu.matmul %338, %339, %cst_165 {dimension_numbers = #tpu.dot_dimension_numbers<[1], [0], [0], [1], [0, 0, 1, 1], [], []>} : vector<8x128xbf16>, vector<128x512xbf16>, vector<8x512xf32> -> vector<8x512xf32>
    %341 = arith.addf %305, %340 : vector<8x512xf32>
    %342 = vector.extract_strided_slice %341 {offsets = [0, 0], sizes = [8, 128], strides = [1, 1]} : vector<8x512xf32> to vector<8x128xf32>
    %343 = arith.negf %342 : vector<8x128xf32>
    %344 = math.exp %343 : vector<8x128xf32>
    %cst_166 = arith.constant 1.000000e+00 : f32
    %345 = vector.broadcast %cst_166 : f32 to vector<8x128xf32>
    %346 = arith.addf %345, %344 : vector<8x128xf32>
    %347 = arith.divf %345, %346 : vector<8x128xf32>
    %348 = vector.extract_strided_slice %341 {offsets = [0, 128], sizes = [8, 128], strides = [1, 1]} : vector<8x512xf32> to vector<8x128xf32>
    %349 = arith.negf %348 : vector<8x128xf32>
    %350 = math.exp %349 : vector<8x128xf32>
    %cst_167 = arith.constant 1.000000e+00 : f32
    %351 = vector.broadcast %cst_167 : f32 to vector<8x128xf32>
    %352 = arith.addf %351, %350 : vector<8x128xf32>
    %353 = arith.divf %351, %352 : vector<8x128xf32>
    %354 = vector.extract_strided_slice %341 {offsets = [0, 256], sizes = [8, 128], strides = [1, 1]} : vector<8x512xf32> to vector<8x128xf32>
    %355 = math.tanh %354 : vector<8x128xf32>
    %356 = vector.extract_strided_slice %341 {offsets = [0, 384], sizes = [8, 128], strides = [1, 1]} : vector<8x512xf32> to vector<8x128xf32>
    %357 = arith.negf %356 : vector<8x128xf32>
    %358 = math.exp %357 : vector<8x128xf32>
    %cst_168 = arith.constant 1.000000e+00 : f32
    %359 = vector.broadcast %cst_168 : f32 to vector<8x128xf32>
    %360 = arith.addf %359, %358 : vector<8x128xf32>
    %361 = arith.divf %359, %360 : vector<8x128xf32>
    %362 = arith.mulf %353, %297 : vector<8x128xf32>
    %363 = arith.mulf %347, %355 : vector<8x128xf32>
    %364 = arith.addf %362, %363 : vector<8x128xf32>
    %365 = math.tanh %364 : vector<8x128xf32>
    %366 = arith.mulf %361, %365 : vector<8x128xf32>
    %c4_i32 = arith.constant 4 : i32
    %367 = arith.truncf %366 : vector<8x128xf32> to vector<8x128xbf16>
    %c0_169 = arith.constant 0 : index
    %c0_170 = arith.constant 0 : index
    %368 = vector.load %arg7[%c0_169, %c0_170] : memref<128x512xbf16, #tpu.memory_space<vmem>>, vector<128x512xbf16>
    %cst_171 = arith.constant dense<0.000000e+00> : vector<8x512xf32>
    %369 = tpu.matmul %367, %368, %cst_171 {dimension_numbers = #tpu.dot_dimension_numbers<[1], [0], [0], [1], [0, 0, 1, 1], [], []>} : vector<8x128xbf16>, vector<128x512xbf16>, vector<8x512xf32> -> vector<8x512xf32>
    %c0_172 = arith.constant 0 : index
    %c0_173 = arith.constant 0 : index
    %370 = vector.load %arg8[%c0_172, %c0_173] : memref<1x512xf32, #tpu.memory_space<vmem>>, vector<1x512xf32>
    %371 = vector.broadcast %370 : vector<1x512xf32> to vector<8x512xf32>
    %372 = arith.addf %369, %371 : vector<8x512xf32>
    %373 = arith.index_cast %c4_i32 : i32 to index
    %c0_174 = arith.constant 0 : index
    %c0_175 = arith.constant 0 : index
    %374 = vector.load %arg14[%373, %c0_174, %c0_175] : memref<8x8x512xf32, #tpu.memory_space<vmem>>, vector<1x8x512xf32>
    %375 = vector.shape_cast %374 : vector<1x8x512xf32> to vector<8x512xf32>
    %376 = arith.truncf %337 : vector<8x128xf32> to vector<8x128xbf16>
    %c0_176 = arith.constant 0 : index
    %c0_177 = arith.constant 0 : index
    %377 = vector.load %arg5[%c0_176, %c0_177] : memref<128x512xbf16, #tpu.memory_space<vmem>>, vector<128x512xbf16>
    %cst_178 = arith.constant dense<0.000000e+00> : vector<8x512xf32>
    %378 = tpu.matmul %376, %377, %cst_178 {dimension_numbers = #tpu.dot_dimension_numbers<[1], [0], [0], [1], [0, 0, 1, 1], [], []>} : vector<8x128xbf16>, vector<128x512xbf16>, vector<8x512xf32> -> vector<8x512xf32>
    %379 = arith.addf %375, %378 : vector<8x512xf32>
    %380 = vector.extract_strided_slice %379 {offsets = [0, 0], sizes = [8, 128], strides = [1, 1]} : vector<8x512xf32> to vector<8x128xf32>
    %381 = arith.negf %380 : vector<8x128xf32>
    %382 = math.exp %381 : vector<8x128xf32>
    %cst_179 = arith.constant 1.000000e+00 : f32
    %383 = vector.broadcast %cst_179 : f32 to vector<8x128xf32>
    %384 = arith.addf %383, %382 : vector<8x128xf32>
    %385 = arith.divf %383, %384 : vector<8x128xf32>
    %386 = vector.extract_strided_slice %379 {offsets = [0, 128], sizes = [8, 128], strides = [1, 1]} : vector<8x512xf32> to vector<8x128xf32>
    %387 = arith.negf %386 : vector<8x128xf32>
    %388 = math.exp %387 : vector<8x128xf32>
    %cst_180 = arith.constant 1.000000e+00 : f32
    %389 = vector.broadcast %cst_180 : f32 to vector<8x128xf32>
    %390 = arith.addf %389, %388 : vector<8x128xf32>
    %391 = arith.divf %389, %390 : vector<8x128xf32>
    %392 = vector.extract_strided_slice %379 {offsets = [0, 256], sizes = [8, 128], strides = [1, 1]} : vector<8x512xf32> to vector<8x128xf32>
    %393 = math.tanh %392 : vector<8x128xf32>
    %394 = vector.extract_strided_slice %379 {offsets = [0, 384], sizes = [8, 128], strides = [1, 1]} : vector<8x512xf32> to vector<8x128xf32>
    %395 = arith.negf %394 : vector<8x128xf32>
    %396 = math.exp %395 : vector<8x128xf32>
    %cst_181 = arith.constant 1.000000e+00 : f32
    %397 = vector.broadcast %cst_181 : f32 to vector<8x128xf32>
    %398 = arith.addf %397, %396 : vector<8x128xf32>
    %399 = arith.divf %397, %398 : vector<8x128xf32>
    %400 = arith.mulf %391, %335 : vector<8x128xf32>
    %401 = arith.mulf %385, %393 : vector<8x128xf32>
    %402 = arith.addf %400, %401 : vector<8x128xf32>
    %403 = math.tanh %402 : vector<8x128xf32>
    %404 = arith.mulf %399, %403 : vector<8x128xf32>
    %405 = arith.truncf %404 : vector<8x128xf32> to vector<8x128xbf16>
    %c0_182 = arith.constant 0 : index
    %c0_183 = arith.constant 0 : index
    %406 = vector.load %arg6[%c0_182, %c0_183] : memref<128x512xbf16, #tpu.memory_space<vmem>>, vector<128x512xbf16>
    %cst_184 = arith.constant dense<0.000000e+00> : vector<8x512xf32>
    %407 = tpu.matmul %405, %406, %cst_184 {dimension_numbers = #tpu.dot_dimension_numbers<[1], [0], [0], [1], [0, 0, 1, 1], [], []>} : vector<8x128xbf16>, vector<128x512xbf16>, vector<8x512xf32> -> vector<8x512xf32>
    %408 = arith.addf %372, %407 : vector<8x512xf32>
    %409 = vector.extract_strided_slice %408 {offsets = [0, 0], sizes = [8, 128], strides = [1, 1]} : vector<8x512xf32> to vector<8x128xf32>
    %410 = arith.negf %409 : vector<8x128xf32>
    %411 = math.exp %410 : vector<8x128xf32>
    %cst_185 = arith.constant 1.000000e+00 : f32
    %412 = vector.broadcast %cst_185 : f32 to vector<8x128xf32>
    %413 = arith.addf %412, %411 : vector<8x128xf32>
    %414 = arith.divf %412, %413 : vector<8x128xf32>
    %415 = vector.extract_strided_slice %408 {offsets = [0, 128], sizes = [8, 128], strides = [1, 1]} : vector<8x512xf32> to vector<8x128xf32>
    %416 = arith.negf %415 : vector<8x128xf32>
    %417 = math.exp %416 : vector<8x128xf32>
    %cst_186 = arith.constant 1.000000e+00 : f32
    %418 = vector.broadcast %cst_186 : f32 to vector<8x128xf32>
    %419 = arith.addf %418, %417 : vector<8x128xf32>
    %420 = arith.divf %418, %419 : vector<8x128xf32>
    %421 = vector.extract_strided_slice %408 {offsets = [0, 256], sizes = [8, 128], strides = [1, 1]} : vector<8x512xf32> to vector<8x128xf32>
    %422 = math.tanh %421 : vector<8x128xf32>
    %423 = vector.extract_strided_slice %408 {offsets = [0, 384], sizes = [8, 128], strides = [1, 1]} : vector<8x512xf32> to vector<8x128xf32>
    %424 = arith.negf %423 : vector<8x128xf32>
    %425 = math.exp %424 : vector<8x128xf32>
    %cst_187 = arith.constant 1.000000e+00 : f32
    %426 = vector.broadcast %cst_187 : f32 to vector<8x128xf32>
    %427 = arith.addf %426, %425 : vector<8x128xf32>
    %428 = arith.divf %426, %427 : vector<8x128xf32>
    %429 = arith.mulf %420, %364 : vector<8x128xf32>
    %430 = arith.mulf %414, %422 : vector<8x128xf32>
    %431 = arith.addf %429, %430 : vector<8x128xf32>
    %432 = math.tanh %431 : vector<8x128xf32>
    %433 = arith.mulf %428, %432 : vector<8x128xf32>
    %c5_i32 = arith.constant 5 : i32
    %434 = arith.truncf %433 : vector<8x128xf32> to vector<8x128xbf16>
    %c0_188 = arith.constant 0 : index
    %c0_189 = arith.constant 0 : index
    %435 = vector.load %arg7[%c0_188, %c0_189] : memref<128x512xbf16, #tpu.memory_space<vmem>>, vector<128x512xbf16>
    %cst_190 = arith.constant dense<0.000000e+00> : vector<8x512xf32>
    %436 = tpu.matmul %434, %435, %cst_190 {dimension_numbers = #tpu.dot_dimension_numbers<[1], [0], [0], [1], [0, 0, 1, 1], [], []>} : vector<8x128xbf16>, vector<128x512xbf16>, vector<8x512xf32> -> vector<8x512xf32>
    %c0_191 = arith.constant 0 : index
    %c0_192 = arith.constant 0 : index
    %437 = vector.load %arg8[%c0_191, %c0_192] : memref<1x512xf32, #tpu.memory_space<vmem>>, vector<1x512xf32>
    %438 = vector.broadcast %437 : vector<1x512xf32> to vector<8x512xf32>
    %439 = arith.addf %436, %438 : vector<8x512xf32>
    %440 = arith.index_cast %c5_i32 : i32 to index
    %c0_193 = arith.constant 0 : index
    %c0_194 = arith.constant 0 : index
    %441 = vector.load %arg14[%440, %c0_193, %c0_194] : memref<8x8x512xf32, #tpu.memory_space<vmem>>, vector<1x8x512xf32>
    %442 = vector.shape_cast %441 : vector<1x8x512xf32> to vector<8x512xf32>
    %443 = arith.truncf %404 : vector<8x128xf32> to vector<8x128xbf16>
    %c0_195 = arith.constant 0 : index
    %c0_196 = arith.constant 0 : index
    %444 = vector.load %arg5[%c0_195, %c0_196] : memref<128x512xbf16, #tpu.memory_space<vmem>>, vector<128x512xbf16>
    %cst_197 = arith.constant dense<0.000000e+00> : vector<8x512xf32>
    %445 = tpu.matmul %443, %444, %cst_197 {dimension_numbers = #tpu.dot_dimension_numbers<[1], [0], [0], [1], [0, 0, 1, 1], [], []>} : vector<8x128xbf16>, vector<128x512xbf16>, vector<8x512xf32> -> vector<8x512xf32>
    %446 = arith.addf %442, %445 : vector<8x512xf32>
    %447 = vector.extract_strided_slice %446 {offsets = [0, 0], sizes = [8, 128], strides = [1, 1]} : vector<8x512xf32> to vector<8x128xf32>
    %448 = arith.negf %447 : vector<8x128xf32>
    %449 = math.exp %448 : vector<8x128xf32>
    %cst_198 = arith.constant 1.000000e+00 : f32
    %450 = vector.broadcast %cst_198 : f32 to vector<8x128xf32>
    %451 = arith.addf %450, %449 : vector<8x128xf32>
    %452 = arith.divf %450, %451 : vector<8x128xf32>
    %453 = vector.extract_strided_slice %446 {offsets = [0, 128], sizes = [8, 128], strides = [1, 1]} : vector<8x512xf32> to vector<8x128xf32>
    %454 = arith.negf %453 : vector<8x128xf32>
    %455 = math.exp %454 : vector<8x128xf32>
    %cst_199 = arith.constant 1.000000e+00 : f32
    %456 = vector.broadcast %cst_199 : f32 to vector<8x128xf32>
    %457 = arith.addf %456, %455 : vector<8x128xf32>
    %458 = arith.divf %456, %457 : vector<8x128xf32>
    %459 = vector.extract_strided_slice %446 {offsets = [0, 256], sizes = [8, 128], strides = [1, 1]} : vector<8x512xf32> to vector<8x128xf32>
    %460 = math.tanh %459 : vector<8x128xf32>
    %461 = vector.extract_strided_slice %446 {offsets = [0, 384], sizes = [8, 128], strides = [1, 1]} : vector<8x512xf32> to vector<8x128xf32>
    %462 = arith.negf %461 : vector<8x128xf32>
    %463 = math.exp %462 : vector<8x128xf32>
    %cst_200 = arith.constant 1.000000e+00 : f32
    %464 = vector.broadcast %cst_200 : f32 to vector<8x128xf32>
    %465 = arith.addf %464, %463 : vector<8x128xf32>
    %466 = arith.divf %464, %465 : vector<8x128xf32>
    %467 = arith.mulf %458, %402 : vector<8x128xf32>
    %468 = arith.mulf %452, %460 : vector<8x128xf32>
    %469 = arith.addf %467, %468 : vector<8x128xf32>
    %470 = math.tanh %469 : vector<8x128xf32>
    %471 = arith.mulf %466, %470 : vector<8x128xf32>
    %472 = arith.truncf %471 : vector<8x128xf32> to vector<8x128xbf16>
    %c0_201 = arith.constant 0 : index
    %c0_202 = arith.constant 0 : index
    %473 = vector.load %arg6[%c0_201, %c0_202] : memref<128x512xbf16, #tpu.memory_space<vmem>>, vector<128x512xbf16>
    %cst_203 = arith.constant dense<0.000000e+00> : vector<8x512xf32>
    %474 = tpu.matmul %472, %473, %cst_203 {dimension_numbers = #tpu.dot_dimension_numbers<[1], [0], [0], [1], [0, 0, 1, 1], [], []>} : vector<8x128xbf16>, vector<128x512xbf16>, vector<8x512xf32> -> vector<8x512xf32>
    %475 = arith.addf %439, %474 : vector<8x512xf32>
    %476 = vector.extract_strided_slice %475 {offsets = [0, 0], sizes = [8, 128], strides = [1, 1]} : vector<8x512xf32> to vector<8x128xf32>
    %477 = arith.negf %476 : vector<8x128xf32>
    %478 = math.exp %477 : vector<8x128xf32>
    %cst_204 = arith.constant 1.000000e+00 : f32
    %479 = vector.broadcast %cst_204 : f32 to vector<8x128xf32>
    %480 = arith.addf %479, %478 : vector<8x128xf32>
    %481 = arith.divf %479, %480 : vector<8x128xf32>
    %482 = vector.extract_strided_slice %475 {offsets = [0, 128], sizes = [8, 128], strides = [1, 1]} : vector<8x512xf32> to vector<8x128xf32>
    %483 = arith.negf %482 : vector<8x128xf32>
    %484 = math.exp %483 : vector<8x128xf32>
    %cst_205 = arith.constant 1.000000e+00 : f32
    %485 = vector.broadcast %cst_205 : f32 to vector<8x128xf32>
    %486 = arith.addf %485, %484 : vector<8x128xf32>
    %487 = arith.divf %485, %486 : vector<8x128xf32>
    %488 = vector.extract_strided_slice %475 {offsets = [0, 256], sizes = [8, 128], strides = [1, 1]} : vector<8x512xf32> to vector<8x128xf32>
    %489 = math.tanh %488 : vector<8x128xf32>
    %490 = vector.extract_strided_slice %475 {offsets = [0, 384], sizes = [8, 128], strides = [1, 1]} : vector<8x512xf32> to vector<8x128xf32>
    %491 = arith.negf %490 : vector<8x128xf32>
    %492 = math.exp %491 : vector<8x128xf32>
    %cst_206 = arith.constant 1.000000e+00 : f32
    %493 = vector.broadcast %cst_206 : f32 to vector<8x128xf32>
    %494 = arith.addf %493, %492 : vector<8x128xf32>
    %495 = arith.divf %493, %494 : vector<8x128xf32>
    %496 = arith.mulf %487, %431 : vector<8x128xf32>
    %497 = arith.mulf %481, %489 : vector<8x128xf32>
    %498 = arith.addf %496, %497 : vector<8x128xf32>
    %499 = math.tanh %498 : vector<8x128xf32>
    %500 = arith.mulf %495, %499 : vector<8x128xf32>
    %c6_i32 = arith.constant 6 : i32
    %501 = arith.truncf %500 : vector<8x128xf32> to vector<8x128xbf16>
    %c0_207 = arith.constant 0 : index
    %c0_208 = arith.constant 0 : index
    %502 = vector.load %arg7[%c0_207, %c0_208] : memref<128x512xbf16, #tpu.memory_space<vmem>>, vector<128x512xbf16>
    %cst_209 = arith.constant dense<0.000000e+00> : vector<8x512xf32>
    %503 = tpu.matmul %501, %502, %cst_209 {dimension_numbers = #tpu.dot_dimension_numbers<[1], [0], [0], [1], [0, 0, 1, 1], [], []>} : vector<8x128xbf16>, vector<128x512xbf16>, vector<8x512xf32> -> vector<8x512xf32>
    %c0_210 = arith.constant 0 : index
    %c0_211 = arith.constant 0 : index
    %504 = vector.load %arg8[%c0_210, %c0_211] : memref<1x512xf32, #tpu.memory_space<vmem>>, vector<1x512xf32>
    %505 = vector.broadcast %504 : vector<1x512xf32> to vector<8x512xf32>
    %506 = arith.addf %503, %505 : vector<8x512xf32>
    %507 = arith.index_cast %c6_i32 : i32 to index
    %c0_212 = arith.constant 0 : index
    %c0_213 = arith.constant 0 : index
    %508 = vector.load %arg14[%507, %c0_212, %c0_213] : memref<8x8x512xf32, #tpu.memory_space<vmem>>, vector<1x8x512xf32>
    %509 = vector.shape_cast %508 : vector<1x8x512xf32> to vector<8x512xf32>
    %510 = arith.truncf %471 : vector<8x128xf32> to vector<8x128xbf16>
    %c0_214 = arith.constant 0 : index
    %c0_215 = arith.constant 0 : index
    %511 = vector.load %arg5[%c0_214, %c0_215] : memref<128x512xbf16, #tpu.memory_space<vmem>>, vector<128x512xbf16>
    %cst_216 = arith.constant dense<0.000000e+00> : vector<8x512xf32>
    %512 = tpu.matmul %510, %511, %cst_216 {dimension_numbers = #tpu.dot_dimension_numbers<[1], [0], [0], [1], [0, 0, 1, 1], [], []>} : vector<8x128xbf16>, vector<128x512xbf16>, vector<8x512xf32> -> vector<8x512xf32>
    %513 = arith.addf %509, %512 : vector<8x512xf32>
    %514 = vector.extract_strided_slice %513 {offsets = [0, 0], sizes = [8, 128], strides = [1, 1]} : vector<8x512xf32> to vector<8x128xf32>
    %515 = arith.negf %514 : vector<8x128xf32>
    %516 = math.exp %515 : vector<8x128xf32>
    %cst_217 = arith.constant 1.000000e+00 : f32
    %517 = vector.broadcast %cst_217 : f32 to vector<8x128xf32>
    %518 = arith.addf %517, %516 : vector<8x128xf32>
    %519 = arith.divf %517, %518 : vector<8x128xf32>
    %520 = vector.extract_strided_slice %513 {offsets = [0, 128], sizes = [8, 128], strides = [1, 1]} : vector<8x512xf32> to vector<8x128xf32>
    %521 = arith.negf %520 : vector<8x128xf32>
    %522 = math.exp %521 : vector<8x128xf32>
    %cst_218 = arith.constant 1.000000e+00 : f32
    %523 = vector.broadcast %cst_218 : f32 to vector<8x128xf32>
    %524 = arith.addf %523, %522 : vector<8x128xf32>
    %525 = arith.divf %523, %524 : vector<8x128xf32>
    %526 = vector.extract_strided_slice %513 {offsets = [0, 256], sizes = [8, 128], strides = [1, 1]} : vector<8x512xf32> to vector<8x128xf32>
    %527 = math.tanh %526 : vector<8x128xf32>
    %528 = vector.extract_strided_slice %513 {offsets = [0, 384], sizes = [8, 128], strides = [1, 1]} : vector<8x512xf32> to vector<8x128xf32>
    %529 = arith.negf %528 : vector<8x128xf32>
    %530 = math.exp %529 : vector<8x128xf32>
    %cst_219 = arith.constant 1.000000e+00 : f32
    %531 = vector.broadcast %cst_219 : f32 to vector<8x128xf32>
    %532 = arith.addf %531, %530 : vector<8x128xf32>
    %533 = arith.divf %531, %532 : vector<8x128xf32>
    %534 = arith.mulf %525, %469 : vector<8x128xf32>
    %535 = arith.mulf %519, %527 : vector<8x128xf32>
    %536 = arith.addf %534, %535 : vector<8x128xf32>
    %537 = math.tanh %536 : vector<8x128xf32>
    %538 = arith.mulf %533, %537 : vector<8x128xf32>
    %539 = arith.truncf %538 : vector<8x128xf32> to vector<8x128xbf16>
    %c0_220 = arith.constant 0 : index
    %c0_221 = arith.constant 0 : index
    %540 = vector.load %arg6[%c0_220, %c0_221] : memref<128x512xbf16, #tpu.memory_space<vmem>>, vector<128x512xbf16>
    %cst_222 = arith.constant dense<0.000000e+00> : vector<8x512xf32>
    %541 = tpu.matmul %539, %540, %cst_222 {dimension_numbers = #tpu.dot_dimension_numbers<[1], [0], [0], [1], [0, 0, 1, 1], [], []>} : vector<8x128xbf16>, vector<128x512xbf16>, vector<8x512xf32> -> vector<8x512xf32>
    %542 = arith.addf %506, %541 : vector<8x512xf32>
    %543 = vector.extract_strided_slice %542 {offsets = [0, 0], sizes = [8, 128], strides = [1, 1]} : vector<8x512xf32> to vector<8x128xf32>
    %544 = arith.negf %543 : vector<8x128xf32>
    %545 = math.exp %544 : vector<8x128xf32>
    %cst_223 = arith.constant 1.000000e+00 : f32
    %546 = vector.broadcast %cst_223 : f32 to vector<8x128xf32>
    %547 = arith.addf %546, %545 : vector<8x128xf32>
    %548 = arith.divf %546, %547 : vector<8x128xf32>
    %549 = vector.extract_strided_slice %542 {offsets = [0, 128], sizes = [8, 128], strides = [1, 1]} : vector<8x512xf32> to vector<8x128xf32>
    %550 = arith.negf %549 : vector<8x128xf32>
    %551 = math.exp %550 : vector<8x128xf32>
    %cst_224 = arith.constant 1.000000e+00 : f32
    %552 = vector.broadcast %cst_224 : f32 to vector<8x128xf32>
    %553 = arith.addf %552, %551 : vector<8x128xf32>
    %554 = arith.divf %552, %553 : vector<8x128xf32>
    %555 = vector.extract_strided_slice %542 {offsets = [0, 256], sizes = [8, 128], strides = [1, 1]} : vector<8x512xf32> to vector<8x128xf32>
    %556 = math.tanh %555 : vector<8x128xf32>
    %557 = vector.extract_strided_slice %542 {offsets = [0, 384], sizes = [8, 128], strides = [1, 1]} : vector<8x512xf32> to vector<8x128xf32>
    %558 = arith.negf %557 : vector<8x128xf32>
    %559 = math.exp %558 : vector<8x128xf32>
    %cst_225 = arith.constant 1.000000e+00 : f32
    %560 = vector.broadcast %cst_225 : f32 to vector<8x128xf32>
    %561 = arith.addf %560, %559 : vector<8x128xf32>
    %562 = arith.divf %560, %561 : vector<8x128xf32>
    %563 = arith.mulf %554, %498 : vector<8x128xf32>
    %564 = arith.mulf %548, %556 : vector<8x128xf32>
    %565 = arith.addf %563, %564 : vector<8x128xf32>
    %566 = math.tanh %565 : vector<8x128xf32>
    %567 = arith.mulf %562, %566 : vector<8x128xf32>
    %c7_i32 = arith.constant 7 : i32
    %568 = arith.truncf %567 : vector<8x128xf32> to vector<8x128xbf16>
    %c0_226 = arith.constant 0 : index
    %c0_227 = arith.constant 0 : index
    %569 = vector.load %arg7[%c0_226, %c0_227] : memref<128x512xbf16, #tpu.memory_space<vmem>>, vector<128x512xbf16>
    %cst_228 = arith.constant dense<0.000000e+00> : vector<8x512xf32>
    %570 = tpu.matmul %568, %569, %cst_228 {dimension_numbers = #tpu.dot_dimension_numbers<[1], [0], [0], [1], [0, 0, 1, 1], [], []>} : vector<8x128xbf16>, vector<128x512xbf16>, vector<8x512xf32> -> vector<8x512xf32>
    %c0_229 = arith.constant 0 : index
    %c0_230 = arith.constant 0 : index
    %571 = vector.load %arg8[%c0_229, %c0_230] : memref<1x512xf32, #tpu.memory_space<vmem>>, vector<1x512xf32>
    %572 = vector.broadcast %571 : vector<1x512xf32> to vector<8x512xf32>
    %573 = arith.addf %570, %572 : vector<8x512xf32>
    %574 = arith.index_cast %c7_i32 : i32 to index
    %c0_231 = arith.constant 0 : index
    %c0_232 = arith.constant 0 : index
    %575 = vector.load %arg14[%574, %c0_231, %c0_232] : memref<8x8x512xf32, #tpu.memory_space<vmem>>, vector<1x8x512xf32>
    %576 = vector.shape_cast %575 : vector<1x8x512xf32> to vector<8x512xf32>
    %577 = arith.truncf %538 : vector<8x128xf32> to vector<8x128xbf16>
    %c0_233 = arith.constant 0 : index
    %c0_234 = arith.constant 0 : index
    %578 = vector.load %arg5[%c0_233, %c0_234] : memref<128x512xbf16, #tpu.memory_space<vmem>>, vector<128x512xbf16>
    %cst_235 = arith.constant dense<0.000000e+00> : vector<8x512xf32>
    %579 = tpu.matmul %577, %578, %cst_235 {dimension_numbers = #tpu.dot_dimension_numbers<[1], [0], [0], [1], [0, 0, 1, 1], [], []>} : vector<8x128xbf16>, vector<128x512xbf16>, vector<8x512xf32> -> vector<8x512xf32>
    %580 = arith.addf %576, %579 : vector<8x512xf32>
    %581 = vector.extract_strided_slice %580 {offsets = [0, 0], sizes = [8, 128], strides = [1, 1]} : vector<8x512xf32> to vector<8x128xf32>
    %582 = arith.negf %581 : vector<8x128xf32>
    %583 = math.exp %582 : vector<8x128xf32>
    %cst_236 = arith.constant 1.000000e+00 : f32
    %584 = vector.broadcast %cst_236 : f32 to vector<8x128xf32>
    %585 = arith.addf %584, %583 : vector<8x128xf32>
    %586 = arith.divf %584, %585 : vector<8x128xf32>
    %587 = vector.extract_strided_slice %580 {offsets = [0, 128], sizes = [8, 128], strides = [1, 1]} : vector<8x512xf32> to vector<8x128xf32>
    %588 = arith.negf %587 : vector<8x128xf32>
    %589 = math.exp %588 : vector<8x128xf32>
    %cst_237 = arith.constant 1.000000e+00 : f32
    %590 = vector.broadcast %cst_237 : f32 to vector<8x128xf32>
    %591 = arith.addf %590, %589 : vector<8x128xf32>
    %592 = arith.divf %590, %591 : vector<8x128xf32>
    %593 = vector.extract_strided_slice %580 {offsets = [0, 256], sizes = [8, 128], strides = [1, 1]} : vector<8x512xf32> to vector<8x128xf32>
    %594 = math.tanh %593 : vector<8x128xf32>
    %595 = vector.extract_strided_slice %580 {offsets = [0, 384], sizes = [8, 128], strides = [1, 1]} : vector<8x512xf32> to vector<8x128xf32>
    %596 = arith.negf %595 : vector<8x128xf32>
    %597 = math.exp %596 : vector<8x128xf32>
    %cst_238 = arith.constant 1.000000e+00 : f32
    %598 = vector.broadcast %cst_238 : f32 to vector<8x128xf32>
    %599 = arith.addf %598, %597 : vector<8x128xf32>
    %600 = arith.divf %598, %599 : vector<8x128xf32>
    %601 = arith.mulf %592, %536 : vector<8x128xf32>
    %602 = arith.mulf %586, %594 : vector<8x128xf32>
    %603 = arith.addf %601, %602 : vector<8x128xf32>
    %604 = math.tanh %603 : vector<8x128xf32>
    %605 = arith.mulf %600, %604 : vector<8x128xf32>
    %606 = arith.truncf %605 : vector<8x128xf32> to vector<8x128xbf16>
    %c0_239 = arith.constant 0 : index
    %c0_240 = arith.constant 0 : index
    %607 = vector.load %arg6[%c0_239, %c0_240] : memref<128x512xbf16, #tpu.memory_space<vmem>>, vector<128x512xbf16>
    %cst_241 = arith.constant dense<0.000000e+00> : vector<8x512xf32>
    %608 = tpu.matmul %606, %607, %cst_241 {dimension_numbers = #tpu.dot_dimension_numbers<[1], [0], [0], [1], [0, 0, 1, 1], [], []>} : vector<8x128xbf16>, vector<128x512xbf16>, vector<8x512xf32> -> vector<8x512xf32>
    %609 = arith.addf %573, %608 : vector<8x512xf32>
    %610 = vector.extract_strided_slice %609 {offsets = [0, 0], sizes = [8, 128], strides = [1, 1]} : vector<8x512xf32> to vector<8x128xf32>
    %611 = arith.negf %610 : vector<8x128xf32>
    %612 = math.exp %611 : vector<8x128xf32>
    %cst_242 = arith.constant 1.000000e+00 : f32
    %613 = vector.broadcast %cst_242 : f32 to vector<8x128xf32>
    %614 = arith.addf %613, %612 : vector<8x128xf32>
    %615 = arith.divf %613, %614 : vector<8x128xf32>
    %616 = vector.extract_strided_slice %609 {offsets = [0, 128], sizes = [8, 128], strides = [1, 1]} : vector<8x512xf32> to vector<8x128xf32>
    %617 = arith.negf %616 : vector<8x128xf32>
    %618 = math.exp %617 : vector<8x128xf32>
    %cst_243 = arith.constant 1.000000e+00 : f32
    %619 = vector.broadcast %cst_243 : f32 to vector<8x128xf32>
    %620 = arith.addf %619, %618 : vector<8x128xf32>
    %621 = arith.divf %619, %620 : vector<8x128xf32>
    %622 = vector.extract_strided_slice %609 {offsets = [0, 256], sizes = [8, 128], strides = [1, 1]} : vector<8x512xf32> to vector<8x128xf32>
    %623 = math.tanh %622 : vector<8x128xf32>
    %624 = vector.extract_strided_slice %609 {offsets = [0, 384], sizes = [8, 128], strides = [1, 1]} : vector<8x512xf32> to vector<8x128xf32>
    %625 = arith.negf %624 : vector<8x128xf32>
    %626 = math.exp %625 : vector<8x128xf32>
    %cst_244 = arith.constant 1.000000e+00 : f32
    %627 = vector.broadcast %cst_244 : f32 to vector<8x128xf32>
    %628 = arith.addf %627, %626 : vector<8x128xf32>
    %629 = arith.divf %627, %628 : vector<8x128xf32>
    %630 = arith.mulf %621, %565 : vector<8x128xf32>
    %631 = arith.mulf %615, %623 : vector<8x128xf32>
    %632 = arith.addf %630, %631 : vector<8x128xf32>
    %633 = math.tanh %632 : vector<8x128xf32>
    %634 = arith.mulf %629, %633 : vector<8x128xf32>
    %c8_i32 = arith.constant 8 : i32
    %c0_245 = arith.constant 0 : index
    %c0_246 = arith.constant 0 : index
    %c0_247 = arith.constant 0 : index
    %635 = vector.load %arg15[%c0_245, %c0_246, %c0_247] : memref<2x8x128xf32, #tpu.memory_space<vmem>>, vector<1x8x128xf32>
    %636 = vector.shape_cast %635 : vector<1x8x128xf32> to vector<8x128xf32>
    %637 = vector.shape_cast %605 : vector<8x128xf32> to vector<1x8x128xf32>
    tpu.vector_store %arg15[%c0_245, %c0_246, %c0_247], %637 {strides = array<i32>} : memref<2x8x128xf32, #tpu.memory_space<vmem>>, vector<1x8x128xf32>,
    %c0_248 = arith.constant 0 : index
    %c0_249 = arith.constant 0 : index
    %c0_250 = arith.constant 0 : index
    %638 = vector.load %arg16[%c0_248, %c0_249, %c0_250] : memref<2x8x128xf32, #tpu.memory_space<vmem>>, vector<1x8x128xf32>
    %639 = vector.shape_cast %638 : vector<1x8x128xf32> to vector<8x128xf32>
    %640 = vector.shape_cast %603 : vector<8x128xf32> to vector<1x8x128xf32>
    tpu.vector_store %arg16[%c0_248, %c0_249, %c0_250], %640 {strides = array<i32>} : memref<2x8x128xf32, #tpu.memory_space<vmem>>, vector<1x8x128xf32>,
    %c1_251 = arith.constant 1 : index
    %c0_252 = arith.constant 0 : index
    %c0_253 = arith.constant 0 : index
    %641 = vector.load %arg15[%c1_251, %c0_252, %c0_253] : memref<2x8x128xf32, #tpu.memory_space<vmem>>, vector<1x8x128xf32>
    %642 = vector.shape_cast %641 : vector<1x8x128xf32> to vector<8x128xf32>
    %643 = vector.shape_cast %634 : vector<8x128xf32> to vector<1x8x128xf32>
    tpu.vector_store %arg15[%c1_251, %c0_252, %c0_253], %643 {strides = array<i32>} : memref<2x8x128xf32, #tpu.memory_space<vmem>>, vector<1x8x128xf32>,
    %c1_254 = arith.constant 1 : index
    %c0_255 = arith.constant 0 : index
    %c0_256 = arith.constant 0 : index
    %644 = vector.load %arg16[%c1_254, %c0_255, %c0_256] : memref<2x8x128xf32, #tpu.memory_space<vmem>>, vector<1x8x128xf32>
    %645 = vector.shape_cast %644 : vector<1x8x128xf32> to vector<8x128xf32>
    %646 = vector.shape_cast %632 : vector<8x128xf32> to vector<1x8x128xf32>
    tpu.vector_store %arg16[%c1_254, %c0_255, %c0_256], %646 {strides = array<i32>} : memref<2x8x128xf32, #tpu.memory_space<vmem>>, vector<1x8x128xf32>,
    %c0_i32_257 = arith.constant 0 : i32
    %647 = arith.cmpi eq, %arg1, %c0_i32_257 : i32
    %648 = arith.extui %647 : i1 to i32
    %c0_i32_258 = arith.constant 0 : i32
    %649 = arith.cmpi ne, %648, %c0_i32_258 : i32
    scf.if %649 {
      %650 = arith.truncf %634 : vector<8x128xf32> to vector<8x128xbf16>
      %c0_259 = arith.constant 0 : index
      %c0_260 = arith.constant 0 : index
      %651 = vector.load %arg9[%c0_259, %c0_260] : memref<128x128xbf16, #tpu.memory_space<vmem>>, vector<128x128xbf16>
      %cst_261 = arith.constant dense<0.000000e+00> : vector<8x128xf32>
      %652 = tpu.matmul %650, %651, %cst_261 {dimension_numbers = #tpu.dot_dimension_numbers<[1], [0], [0], [1], [0, 0, 1, 1], [], []>} : vector<8x128xbf16>, vector<128x128xbf16>, vector<8x128xf32> -> vector<8x128xf32>
      %c0_262 = arith.constant 0 : index
      %c0_263 = arith.constant 0 : index
      %653 = vector.load %arg10[%c0_262, %c0_263] : memref<1x128xf32, #tpu.memory_space<vmem>>, vector<1x128xf32>
      %654 = vector.broadcast %653 : vector<1x128xf32> to vector<8x128xf32>
      %655 = arith.addf %652, %654 : vector<8x128xf32>
      %cst_264 = arith.constant 0.000000e+00 : f32
      %656 = vector.broadcast %cst_264 : f32 to vector<8x128xf32>
      %657 = arith.maximumf %655, %656 : vector<8x128xf32>
      %658 = arith.truncf %657 : vector<8x128xf32> to vector<8x128xbf16>
      %c0_265 = arith.constant 0 : index
      %c0_266 = arith.constant 0 : index
      %659 = vector.load %arg11[%c0_265, %c0_266] : memref<128x2xbf16, #tpu.memory_space<vmem>>, vector<128x2xbf16>
      %cst_267 = arith.constant dense<0.000000e+00> : vector<8x2xf32>
      %660 = tpu.matmul %658, %659, %cst_267 {dimension_numbers = #tpu.dot_dimension_numbers<[1], [0], [0], [1], [0, 0, 1, 1], [], []>} : vector<8x128xbf16>, vector<128x2xbf16>, vector<8x2xf32> -> vector<8x2xf32>
      %c0_268 = arith.constant 0 : index
      %c0_269 = arith.constant 0 : index
      %661 = vector.load %arg12[%c0_268, %c0_269] : memref<1x2xf32, #tpu.memory_space<vmem>>, vector<1x2xf32>
      %662 = vector.broadcast %661 : vector<1x2xf32> to vector<8x2xf32>
      %663 = arith.addf %660, %662 : vector<8x2xf32>
      %664 = tpu.iota {dimensions = array<i32: 1>} : vector<8x2xi32>
      %c1_i32_270 = arith.constant 1 : i32
      %665 = vector.broadcast %c1_i32_270 : i32 to vector<8x2xi32>
      %666 = arith.cmpi eq, %664, %665 : vector<8x2xi32>
      %667 = arith.negf %663 : vector<8x2xf32>
      %668 = math.exp %667 : vector<8x2xf32>
      %cst_271 = arith.constant 1.000000e+00 : f32
      %669 = vector.broadcast %cst_271 : f32 to vector<8x2xf32>
      %670 = arith.addf %669, %668 : vector<8x2xf32>
      %671 = arith.divf %669, %670 : vector<8x2xf32>
      %672 = arith.select %666, %671, %663 : vector<8x2xi1>, vector<8x2xf32>
      %c0_272 = arith.constant 0 : index
      %c0_273 = arith.constant 0 : index
      %673 = vector.load %arg13[%c0_272, %c0_273] : memref<8x2xf32, #tpu.memory_space<vmem>>, vector<8x2xf32>
      tpu.vector_store %arg13[%c0_272, %c0_273], %672 {strides = array<i32>} : memref<8x2xf32, #tpu.memory_space<vmem>>, vector<8x2xf32>,
    } else {
    }
    return
  }
  func.func @transform_0(%arg0: i32, %arg1: i32) -> (i32, i32, i32) {
    %c0_i32 = arith.constant 0 : i32
    %c0_i32_0 = arith.constant 0 : i32
    return %arg1, %arg0, %c0_i32 : i32, i32, i32
  }
  func.func @transform_1(%arg0: i32, %arg1: i32) -> (i32, i32) {
    %c0_i32 = arith.constant 0 : i32
    %c0_i32_0 = arith.constant 0 : i32
    %c0_i32_1 = arith.constant 0 : i32
    return %c0_i32, %c0_i32_0 : i32, i32
  }
  func.func @transform_2(%arg0: i32, %arg1: i32) -> (i32, i32) {
    %c0_i32 = arith.constant 0 : i32
    %c0_i32_0 = arith.constant 0 : i32
    %c0_i32_1 = arith.constant 0 : i32
    return %c0_i32, %c0_i32_0 : i32, i32
  }
  func.func @transform_3(%arg0: i32, %arg1: i32) -> (i32, i32) {
    %c0_i32 = arith.constant 0 : i32
    %c0_i32_0 = arith.constant 0 : i32
    %c0_i32_1 = arith.constant 0 : i32
    return %c0_i32, %c0_i32_0 : i32, i32
  }
  func.func @transform_4(%arg0: i32, %arg1: i32) -> (i32, i32) {
    %c0_i32 = arith.constant 0 : i32
    %c0_i32_0 = arith.constant 0 : i32
    %c0_i32_1 = arith.constant 0 : i32
    return %c0_i32, %c0_i32_0 : i32, i32
  }
  func.func @transform_5(%arg0: i32, %arg1: i32) -> (i32, i32) {
    %c0_i32 = arith.constant 0 : i32
    %c0_i32_0 = arith.constant 0 : i32
    %c0_i32_1 = arith.constant 0 : i32
    return %c0_i32, %c0_i32_0 : i32, i32
  }
  func.func @transform_6(%arg0: i32, %arg1: i32) -> (i32, i32) {
    %c0_i32 = arith.constant 0 : i32
    %c0_i32_0 = arith.constant 0 : i32
    %c0_i32_1 = arith.constant 0 : i32
    return %c0_i32, %c0_i32_0 : i32, i32
  }
  func.func @transform_7(%arg0: i32, %arg1: i32) -> (i32, i32) {
    %c0_i32 = arith.constant 0 : i32
    %c0_i32_0 = arith.constant 0 : i32
    %c0_i32_1 = arith.constant 0 : i32
    return %c0_i32, %c0_i32_0 : i32, i32
  }
  func.func @transform_8(%arg0: i32, %arg1: i32) -> (i32, i32) {
    %c0_i32 = arith.constant 0 : i32
    %c0_i32_0 = arith.constant 0 : i32
    %c0_i32_1 = arith.constant 0 : i32
    return %c0_i32, %c0_i32_0 : i32, i32
  }
  func.func @transform_9(%arg0: i32, %arg1: i32) -> (i32, i32) {
    %c0_i32 = arith.constant 0 : i32
    %c0_i32_0 = arith.constant 0 : i32
    %c0_i32_1 = arith.constant 0 : i32
    return %c0_i32, %c0_i32_0 : i32, i32
  }
  func.func @transform_10(%arg0: i32, %arg1: i32) -> (i32, i32) {
    %c0_i32 = arith.constant 0 : i32
    %c0_i32_0 = arith.constant 0 : i32
    %c0_i32_1 = arith.constant 0 : i32
    return %c0_i32, %c0_i32_0 : i32, i32
  }
  func.func @transform_11(%arg0: i32, %arg1: i32) -> (i32, i32) {
    %c0_i32 = arith.constant 0 : i32
    %c0_i32_0 = arith.constant 0 : i32
    return %arg0, %c0_i32 : i32, i32
  }
}

</mosaic_0001>

<llo_original>
// kernel: tpu_custom_call.1
$region0: #{tpu_custom_call.1}
  #allocation0 [shape = 'u32[]', space=smem, size = 0x4, offset = 0x4, fixed_abs, tag = 'smem constant byte address 0x4 - core index']
  #allocation1 [shape = 'u32[72,128]{1,0:T(1,128)}', space=vmem, size = 0x9000, scoped, tag = 'internal scratch']
  #allocation2 [shape = 'f32[8,8,512]{2,1,0:T(8,128)}', space=vmem, size = 0x20000, scoped, tag = 'scratch operand']
  #allocation3 [shape = 'f32[2,8,128]{2,1,0:T(8,128)}', space=vmem, size = 0x2000, scoped, tag = 'scratch operand']
  #allocation4 [shape = 'f32[2,8,128]{2,1,0:T(8,128)}', space=vmem, size = 0x2000, scoped, tag = 'scratch operand']
  %s0 = inlined_call_operand.vmem [shape: f32[8,8,16], index: 0, kind: input, shape index: {}]
  %s1 = inlined_call_operand.hbm [shape: bf16[16,512], index: 1, kind: input, shape index: {}]
  %s2 = inlined_call_operand.hbm [shape: f32[1,512], index: 2, kind: input, shape index: {}]
  %s3 = inlined_call_operand.hbm [shape: bf16[128,512], index: 3, kind: input, shape index: {}]
  %s4 = inlined_call_operand.hbm [shape: bf16[128,512], index: 4, kind: input, shape index: {}]
  %s5 = inlined_call_operand.hbm [shape: bf16[128,512], index: 5, kind: input, shape index: {}]
  %s6 = inlined_call_operand.vmem [shape: f32[1,512], index: 6, kind: input, shape index: {}]
  %s7 = inlined_call_operand.hbm [shape: bf16[128,128], index: 7, kind: input, shape index: {}]
  %s8 = inlined_call_operand.vmem [shape: f32[1,128], index: 8, kind: input, shape index: {}]
  %s9 = inlined_call_operand.vmem [shape: bf16[128,2], index: 9, kind: input, shape index: {}]
  %s10 = inlined_call_operand.vmem [shape: f32[1,2], index: 10, kind: input, shape index: {}]
  %s11 = inlined_call_operand.vmem [shape: f32[8,2], index: 11, kind: output, shape index: {}]
  %s12 = sld [smem:[#allocation0]]
  $region86: #{tpu_custom_call.1} parent=0
    _
  %s14 = ssub.s32 1, %s12
  %s15 = scalar_select 0, %s14, %s12
  $region1: #{tpu_custom_call.1} parent=0
    #allocation5 [shape = 'u8[16384]{0}', space=vmem, size = 0x4000, scoped, tag = 'input window, operand 1, single buffered']
    #allocation6 [shape = 's32[1]{0}', space=sflag, size = 0x4, scoped, tag = 'scoped memory for tpu_custom_call.1']
    #allocation7 [shape = 'u8[2048]{0}', space=vmem, size = 0x800, scoped, tag = 'input window, operand 2, single buffered']
    #allocation8 [shape = 's32[1]{0}', space=sflag, size = 0x4, scoped, tag = 'scoped memory for tpu_custom_call.1']
    #allocation9 [shape = 'u8[131072]{0}', space=vmem, size = 0x20000, scoped, tag = 'input window, operand 3, single buffered']
    #allocation10 [shape = 'u8[131072]{0}', space=vmem, size = 0x20000, scoped, tag = 'input window, operand 4, single buffered']
    #allocation11 [shape = 's32[1]{0}', space=sflag, size = 0x4, scoped, tag = 'scoped memory for tpu_custom_call.1']
    #allocation12 [shape = 'u8[131072]{0}', space=vmem, size = 0x20000, scoped, tag = 'input window, operand 5, single buffered']
    #allocation13 [shape = 'u8[32768]{0}', space=vmem, size = 0x8000, scoped, tag = 'input window, operand 7, single buffered']
    #allocation14 [shape = 's32[1]{0}', space=sflag, size = 0x4, scoped, tag = 'scoped memory for tpu_custom_call.1']
    %16 = vsyncpa [#allocation6], 0
    %17 = vsyncpa [#allocation8], 0
    %18 = vsyncpa [#allocation11], 0
    %19 = vsyncpa [#allocation14], 0
    // Predicated region
    $region2: #{tpu_custom_call.1} parent=1 // pred_check
      _
    $region3: #{tpu_custom_call.1} parent=1 // pred_check_branch
      %21 = sbr.rel (0) target = $region5
    $region4: #{tpu_custom_call.1} parent=1 // pred_region
      _
    $region5: #{tpu_custom_call.1} parent=1 // pred_fallthru
      _
    // Predicated region
    $region6: #{tpu_custom_call.1} parent=1 // pred_check
      _
    $region7: #{tpu_custom_call.1} parent=1 // pred_check_branch
      %23 = sbr.rel (0) target = $region9
    $region8: #{tpu_custom_call.1} parent=1 // pred_region
      %25 = vsyncadd [#allocation6], 0
      %s26 = sshll.u32 %s1, 4
      %s27 = int_to_ptr.hbm [resolvable:$true] %s26
      %s28 = sshll.u32 [#allocation5], 4
      %s29 = int_to_ptr.vmem [resolvable:$true] %s28
      %34 = dma.hbm_to_vmem [thread:$0]  %s27, 512, %s29, [#allocation6], 256, 256, 16
    $region9: #{tpu_custom_call.1} parent=1 // pred_fallthru
      _
    // Predicated region
    $region10: #{tpu_custom_call.1} parent=1 // pred_check
      _
    $region11: #{tpu_custom_call.1} parent=1 // pred_check_branch
      %36 = sbr.rel (0) target = $region13
    $region12: #{tpu_custom_call.1} parent=1 // pred_region
      %38 = vsyncadd [#allocation8], 0
      %s40 = sshll.u32 %s2, 4
      %s41 = int_to_ptr.hbm [resolvable:$true] %s40
      %s42 = sshll.u32 [#allocation7], 4
      %s43 = int_to_ptr.vmem [resolvable:$true] %s42
      %45 = dma.hbm_to_vmem [thread:$0]  %s41, 64, %s43, [#allocation8]
    $region13: #{tpu_custom_call.1} parent=1 // pred_fallthru
      _
    // Predicated region
    $region14: #{tpu_custom_call.1} parent=1 // pred_check
      _
    $region15: #{tpu_custom_call.1} parent=1 // pred_check_branch
      %47 = sbr.rel (0) target = $region17
    $region16: #{tpu_custom_call.1} parent=1 // pred_region
      %49 = vsyncadd [#allocation8], 0
      %s50 = sshll.u32 %s3, 4
      %s51 = int_to_ptr.hbm [resolvable:$true] %s50
      %s52 = sshll.u32 [#allocation9], 4
      %s53 = int_to_ptr.vmem [resolvable:$true] %s52
      %58 = dma.hbm_to_vmem [thread:$0]  %s51, 4096, %s53, [#allocation8], 256, 256, 16
    $region17: #{tpu_custom_call.1} parent=1 // pred_fallthru
      _
    // Predicated region
    $region18: #{tpu_custom_call.1} parent=1 // pred_check
      _
    $region19: #{tpu_custom_call.1} parent=1 // pred_check_branch
      %60 = sbr.rel (0) target = $region21
    $region20: #{tpu_custom_call.1} parent=1 // pred_region
      %62 = vsyncadd [#allocation11], 0
      %s63 = sshll.u32 %s4, 4
      %s64 = int_to_ptr.hbm [resolvable:$true] %s63
      %s65 = sshll.u32 [#allocation10], 4
      %s66 = int_to_ptr.vmem [resolvable:$true] %s65
      %71 = dma.hbm_to_vmem [thread:$0]  %s64, 4096, %s66, [#allocation11], 256, 256, 16
    $region21: #{tpu_custom_call.1} parent=1 // pred_fallthru
      _
    // Predicated region
    $region22: #{tpu_custom_call.1} parent=1 // pred_check
      _
    $region23: #{tpu_custom_call.1} parent=1 // pred_check_branch
      %73 = sbr.rel (0) target = $region25
    $region24: #{tpu_custom_call.1} parent=1 // pred_region
      %75 = vsyncadd [#allocation11], 0
      %s76 = sshll.u32 %s5, 4
      %s77 = int_to_ptr.hbm [resolvable:$true] %s76
      %s78 = sshll.u32 [#allocation12], 4
      %s79 = int_to_ptr.vmem [resolvable:$true] %s78
      %84 = dma.hbm_to_vmem [thread:$0]  %s77, 4096, %s79, [#allocation11], 256, 256, 16
    $region25: #{tpu_custom_call.1} parent=1 // pred_fallthru
      _
    // Predicated region
    $region26: #{tpu_custom_call.1} parent=1 // pred_check
      _
    $region27: #{tpu_custom_call.1} parent=1 // pred_check_branch
      %86 = sbr.rel (0) target = $region29
    $region28: #{tpu_custom_call.1} parent=1 // pred_region
      _
    $region29: #{tpu_custom_call.1} parent=1 // pred_fallthru
      _
    // Predicated region
    $region30: #{tpu_custom_call.1} parent=1 // pred_check
      _
    $region31: #{tpu_custom_call.1} parent=1 // pred_check_branch
      %88 = sbr.rel (0) target = $region33
    $region32: #{tpu_custom_call.1} parent=1 // pred_region
      %90 = vsyncadd [#allocation14], 0
      %s91 = sshll.u32 %s7, 4
      %s92 = int_to_ptr.hbm [resolvable:$true] %s91
      %s93 = sshll.u32 [#allocation13], 4
      %s94 = int_to_ptr.vmem [resolvable:$true] %s93
      %99 = dma.hbm_to_vmem [thread:$0]  %s92, 1024, %s94, [#allocation14], 64, 64, 4
    $region33: #{tpu_custom_call.1} parent=1 // pred_fallthru
      _
    // Predicated region
    $region34: #{tpu_custom_call.1} parent=1 // pred_check
      _
    $region35: #{tpu_custom_call.1} parent=1 // pred_check_branch
      %101 = sbr.rel (0) target = $region37
    $region36: #{tpu_custom_call.1} parent=1 // pred_region
      _
    $region37: #{tpu_custom_call.1} parent=1 // pred_fallthru
      _
    // Predicated region
    $region38: #{tpu_custom_call.1} parent=1 // pred_check
      _
    $region39: #{tpu_custom_call.1} parent=1 // pred_check_branch
      %103 = sbr.rel (0) target = $region41
    $region40: #{tpu_custom_call.1} parent=1 // pred_region
      _
    $region41: #{tpu_custom_call.1} parent=1 // pred_fallthru
      _
    // Predicated region
    $region42: #{tpu_custom_call.1} parent=1 // pred_check
      _
    $region43: #{tpu_custom_call.1} parent=1 // pred_check_branch
      %105 = sbr.rel (0) target = $region45
    $region44: #{tpu_custom_call.1} parent=1 // pred_region
      _
    $region45: #{tpu_custom_call.1} parent=1 // pred_fallthru
      _
    // Predicated region
    $region46: #{tpu_custom_call.1} parent=1 // pred_check
      _
    $region47: #{tpu_custom_call.1} parent=1 // pred_check_branch
      %107 = sbr.rel (0) target = $region49
    $region48: #{tpu_custom_call.1} parent=1 // pred_region
      %109 = dma.done [#allocation6], 512
    $region49: #{tpu_custom_call.1} parent=1 // pred_fallthru
      _
    // Predicated region
    $region50: #{tpu_custom_call.1} parent=1 // pred_check
      _
    $region51: #{tpu_custom_call.1} parent=1 // pred_check_branch
      %111 = sbr.rel (0) target = $region53
    $region52: #{tpu_custom_call.1} parent=1 // pred_region
      %113 = dma.done [#allocation8], 64
    $region53: #{tpu_custom_call.1} parent=1 // pred_fallthru
      _
    // Predicated region
    $region54: #{tpu_custom_call.1} parent=1 // pred_check
      _
    $region55: #{tpu_custom_call.1} parent=1 // pred_check_branch
      %115 = sbr.rel (0) target = $region57
    $region56: #{tpu_custom_call.1} parent=1 // pred_region
      %117 = dma.done [#allocation8], 4096
    $region57: #{tpu_custom_call.1} parent=1 // pred_fallthru
      _
    // Predicated region
    $region58: #{tpu_custom_call.1} parent=1 // pred_check
      _
    $region59: #{tpu_custom_call.1} parent=1 // pred_check_branch
      %119 = sbr.rel (0) target = $region61
    $region60: #{tpu_custom_call.1} parent=1 // pred_region
      %121 = dma.done [#allocation11], 4096
    $region61: #{tpu_custom_call.1} parent=1 // pred_fallthru
      _
    // Predicated region
    $region62: #{tpu_custom_call.1} parent=1 // pred_check
      _
    $region63: #{tpu_custom_call.1} parent=1 // pred_check_branch
      %123 = sbr.rel (0) target = $region65
    $region64: #{tpu_custom_call.1} parent=1 // pred_region
      %125 = dma.done [#allocation11], 4096
    $region65: #{tpu_custom_call.1} parent=1 // pred_fallthru
      _
    // Predicated region
    $region66: #{tpu_custom_call.1} parent=1 // pred_check
      _
    $region67: #{tpu_custom_call.1} parent=1 // pred_check_branch
      %127 = sbr.rel (0) target = $region69
    $region68: #{tpu_custom_call.1} parent=1 // pred_region
      %129 = dma.done [#allocation14], 1024
    $region69: #{tpu_custom_call.1} parent=1 // pred_fallthru
      _
    %p131 = scmp.eq.s32.totalorder 0, 0
    // Predicated region
    $region70: #{tpu_custom_call.1} parent=1 // pred_check
      %p132 = pneg %p131
    $region71: #{tpu_custom_call.1} parent=1 // pred_check_branch
      %134 = sbr.rel (%p132) target = $region73
    $region72: #{tpu_custom_call.1} parent=1 // pred_region
      %135 = vst [vmem:[#allocation3] sm:$0xff] 0.0
      %136 = vst [vmem:[#allocation3 + $0x8] sm:$0xff] 0.0
      %137 = vst [vmem:[#allocation4] sm:$0xff] 0.0
      %138 = vst [vmem:[#allocation4 + $0x8] sm:$0xff] 0.0
    $region73: #{tpu_custom_call.1} parent=1 // pred_fallthru
      _
    %v139 = vld [vmem:[%s0] sm:$0xff]
    %v140 = vpack.c.bf16 %v139, %v139
    %v141 = vld [vmem:[#allocation5] sm:$0xff]
    %v142 = vld [vmem:[#allocation5 + $0x8] sm:$0xff]
    %v143 = vld [vmem:[#allocation5 + $0x10] sm:$0xff]
    %v144 = vld [vmem:[#allocation5 + $0x18] sm:$0xff]
    %v145 = vld [vmem:[#allocation7] sm:$0xf]
    %v147 = vperm.slane %v145, 0
    %v148 = vperm.slane %v145, 1
    %v149 = vperm.slane %v145, 2
    %v150 = vperm.slane %v145, 3
    %v159 = vunpack.c.l.b16 %v141
    %v160 = vunpack.c.h.b16 %v141
    %v161 = vunpack.c.l.b16 %v142
    %v162 = vunpack.c.h.b16 %v142
    %v163 = vunpack.c.l.b16 %v143
    %v164 = vunpack.c.h.b16 %v143
    %v165 = vunpack.c.l.b16 %v144
    %v166 = vunpack.c.h.b16 %v144
    %v167 = vpack.c.b16 %v163, %v159
    %v168 = vpack.c.b16 %v164, %v160
    %v169 = vpack.c.b16 %v165, %v161
    %v170 = vpack.c.b16 %v166, %v162
    %vm175 = vcmask 130048
    %v177 = vsel %vm175, %v140, 0
    %179 = vmatpush.bf16.msra.mxu0 0
    %180 = vmatpush.bf16.msra.mxu0 0
    %181 = vmatpush.bf16.msra.mxu0 0
    %182 = vmatpush.bf16.msra.mxu0 0
    %183 = vmatpush.bf16.msra.mxu0 0
    %184 = vmatpush.bf16.msra.mxu0 0
    %185 = vmatpush.bf16.msra.mxu0 0
    %186 = vmatpush.bf16.msra.mxu0 %v167
    %187 = vmatmul.bf16.gmra.mxu0 %v177
    %v188 = vpop.f32.mrf.mxu0
    %v189 = vadd.f32 %v147, %v188
    %v190 = vpop.f32.mrf.mxu0
    %191 = vdwg.mxu0
    %192 = vmatpush.bf16.msra.mxu0 0
    %193 = vmatpush.bf16.msra.mxu0 0
    %194 = vmatpush.bf16.msra.mxu0 0
    %195 = vmatpush.bf16.msra.mxu0 0
    %196 = vmatpush.bf16.msra.mxu0 0
    %197 = vmatpush.bf16.msra.mxu0 0
    %198 = vmatpush.bf16.msra.mxu0 0
    %199 = vmatpush.bf16.msra.mxu0 %v168
    %200 = vmatmul.bf16.gmra.mxu0 %v177
    %v201 = vpop.f32.mrf.mxu0
    %v202 = vadd.f32 %v148, %v201
    %v203 = vpop.f32.mrf.mxu0
    %204 = vdwg.mxu0
    %205 = vmatpush.bf16.msra.mxu0 0
    %206 = vmatpush.bf16.msra.mxu0 0
    %207 = vmatpush.bf16.msra.mxu0 0
    %208 = vmatpush.bf16.msra.mxu0 0
    %209 = vmatpush.bf16.msra.mxu0 0
    %210 = vmatpush.bf16.msra.mxu0 0
    %211 = vmatpush.bf16.msra.mxu0 0
    %212 = vmatpush.bf16.msra.mxu0 %v169
    %213 = vmatmul.bf16.gmra.mxu0 %v177
    %v214 = vpop.f32.mrf.mxu0
    %v215 = vadd.f32 %v149, %v214
    %v216 = vpop.f32.mrf.mxu0
    %217 = vdwg.mxu0
    %218 = vmatpush.bf16.msra.mxu0 0
    %219 = vmatpush.bf16.msra.mxu0 0
    %220 = vmatpush.bf16.msra.mxu0 0
    %221 = vmatpush.bf16.msra.mxu0 0
    %222 = vmatpush.bf16.msra.mxu0 0
    %223 = vmatpush.bf16.msra.mxu0 0
    %224 = vmatpush.bf16.msra.mxu0 0
    %225 = vmatpush.bf16.msra.mxu0 %v170
    %226 = vmatmul.bf16.gmra.mxu0 %v177
    %v227 = vpop.f32.mrf.mxu0
    %v228 = vadd.f32 %v150, %v227
    %v229 = vpop.f32.mrf.mxu0
    %230 = vdwg.mxu0
    %231 = vst [vmem:[#allocation2] sm:$0xff] %v189
    %232 = vst [vmem:[#allocation2 + $0x8] sm:$0xff] %v202
    %233 = vst [vmem:[#allocation2 + $0x10] sm:$0xff] %v215
    %234 = vst [vmem:[#allocation2 + $0x18] sm:$0xff] %v228
    %s235 = scalar_lea.vmem %s0, 8
    %v236 = vld [vmem:[%s235] sm:$0xff]
    %v237 = vpack.c.bf16 %v236, %v236
    %v238 = vld [vmem:[#allocation5] sm:$0xff]
    %v239 = vld [vmem:[#allocation5 + $0x8] sm:$0xff]
    %v240 = vld [vmem:[#allocation5 + $0x10] sm:$0xff]
    %v241 = vld [vmem:[#allocation5 + $0x18] sm:$0xff]
    %v242 = vld [vmem:[#allocation7] sm:$0xf]
    %v244 = vperm.slane %v242, 0
    %v245 = vperm.slane %v242, 1
    %v246 = vperm.slane %v242, 2
    %v247 = vperm.slane %v242, 3
    %v256 = vunpack.c.l.b16 %v238
    %v257 = vunpack.c.h.b16 %v238
    %v258 = vunpack.c.l.b16 %v239
    %v259 = vunpack.c.h.b16 %v239
    %v260 = vunpack.c.l.b16 %v240
    %v261 = vunpack.c.h.b16 %v240
    %v262 = vunpack.c.l.b16 %v241
    %v263 = vunpack.c.h.b16 %v241
    %v264 = vpack.c.b16 %v260, %v256
    %v265 = vpack.c.b16 %v261, %v257
    %v266 = vpack.c.b16 %v262, %v258
    %v267 = vpack.c.b16 %v263, %v259
    %v273 = vsel %vm175, %v237, 0
    %275 = vmatpush.bf16.msra.mxu0 0
    %276 = vmatpush.bf16.msra.mxu0 0
    %277 = vmatpush.bf16.msra.mxu0 0
    %278 = vmatpush.bf16.msra.mxu0 0
    %279 = vmatpush.bf16.msra.mxu0 0
    %280 = vmatpush.bf16.msra.mxu0 0
    %281 = vmatpush.bf16.msra.mxu0 0
    %282 = vmatpush.bf16.msra.mxu0 %v264
    %283 = vmatmul.bf16.gmra.mxu0 %v273
    %v284 = vpop.f32.mrf.mxu0
    %v285 = vadd.f32 %v244, %v284
    %v286 = vpop.f32.mrf.mxu0
    %287 = vdwg.mxu0
    %288 = vmatpush.bf16.msra.mxu0 0
    %289 = vmatpush.bf16.msra.mxu0 0
    %290 = vmatpush.bf16.msra.mxu0 0
    %291 = vmatpush.bf16.msra.mxu0 0
    %292 = vmatpush.bf16.msra.mxu0 0
    %293 = vmatpush.bf16.msra.mxu0 0
    %294 = vmatpush.bf16.msra.mxu0 0
    %295 = vmatpush.bf16.msra.mxu0 %v265
    %296 = vmatmul.bf16.gmra.mxu0 %v273
    %v297 = vpop.f32.mrf.mxu0
    %v298 = vadd.f32 %v245, %v297
    %v299 = vpop.f32.mrf.mxu0
    %300 = vdwg.mxu0
    %301 = vmatpush.bf16.msra.mxu0 0
    %302 = vmatpush.bf16.msra.mxu0 0
    %303 = vmatpush.bf16.msra.mxu0 0
    %304 = vmatpush.bf16.msra.mxu0 0
    %305 = vmatpush.bf16.msra.mxu0 0
    %306 = vmatpush.bf16.msra.mxu0 0
    %307 = vmatpush.bf16.msra.mxu0 0
    %308 = vmatpush.bf16.msra.mxu0 %v266
    %309 = vmatmul.bf16.gmra.mxu0 %v273
    %v310 = vpop.f32.mrf.mxu0
    %v311 = vadd.f32 %v246, %v310
    %v312 = vpop.f32.mrf.mxu0
    %313 = vdwg.mxu0
    %314 = vmatpush.bf16.msra.mxu0 0
    %315 = vmatpush.bf16.msra.mxu0 0
    %316 = vmatpush.bf16.msra.mxu0 0
    %317 = vmatpush.bf16.msra.mxu0 0
    %318 = vmatpush.bf16.msra.mxu0 0
    %319 = vmatpush.bf16.msra.mxu0 0
    %320 = vmatpush.bf16.msra.mxu0 0
    %321 = vmatpush.bf16.msra.mxu0 %v267
    %322 = vmatmul.bf16.gmra.mxu0 %v273
    %v323 = vpop.f32.mrf.mxu0
    %v324 = vadd.f32 %v247, %v323
    %v325 = vpop.f32.mrf.mxu0
    %326 = vdwg.mxu0
    %s327 = scalar_lea.vmem [#allocation2], 32
    %328 = vst [vmem:[%s327] sm:$0xff] %v285
    %329 = vst [vmem:[%s327 + $0x8] sm:$0xff] %v298
    %330 = vst [vmem:[%s327 + $0x10] sm:$0xff] %v311
    %331 = vst [vmem:[%s327 + $0x18] sm:$0xff] %v324
    %s332 = scalar_lea.vmem %s0, 16
    %v333 = vld [vmem:[%s332] sm:$0xff]
    %v334 = vpack.c.bf16 %v333, %v333
    %v335 = vld [vmem:[#allocation5] sm:$0xff]
    %v336 = vld [vmem:[#allocation5 + $0x8] sm:$0xff]
    %v337 = vld [vmem:[#allocation5 + $0x10] sm:$0xff]
    %v338 = vld [vmem:[#allocation5 + $0x18] sm:$0xff]
    %v339 = vld [vmem:[#allocation7] sm:$0xf]
    %v341 = vperm.slane %v339, 0
    %v342 = vperm.slane %v339, 1
    %v343 = vperm.slane %v339, 2
    %v344 = vperm.slane %v339, 3
    %v353 = vunpack.c.l.b16 %v335
    %v354 = vunpack.c.h.b16 %v335
    %v355 = vunpack.c.l.b16 %v336
    %v356 = vunpack.c.h.b16 %v336
    %v357 = vunpack.c.l.b16 %v337
    %v358 = vunpack.c.h.b16 %v337
    %v359 = vunpack.c.l.b16 %v338
    %v360 = vunpack.c.h.b16 %v338
    %v361 = vpack.c.b16 %v357, %v353
    %v362 = vpack.c.b16 %v358, %v354
    %v363 = vpack.c.b16 %v359, %v355
    %v364 = vpack.c.b16 %v360, %v356
    %v370 = vsel %vm175, %v334, 0
    %372 = vmatpush.bf16.msra.mxu0 0
    %373 = vmatpush.bf16.msra.mxu0 0
    %374 = vmatpush.bf16.msra.mxu0 0
    %375 = vmatpush.bf16.msra.mxu0 0
    %376 = vmatpush.bf16.msra.mxu0 0
    %377 = vmatpush.bf16.msra.mxu0 0
    %378 = vmatpush.bf16.msra.mxu0 0
    %379 = vmatpush.bf16.msra.mxu0 %v361
    %380 = vmatmul.bf16.gmra.mxu0 %v370
    %v381 = vpop.f32.mrf.mxu0
    %v382 = vadd.f32 %v341, %v381
    %v383 = vpop.f32.mrf.mxu0
    %384 = vdwg.mxu0
    %385 = vmatpush.bf16.msra.mxu0 0
    %386 = vmatpush.bf16.msra.mxu0 0
    %387 = vmatpush.bf16.msra.mxu0 0
    %388 = vmatpush.bf16.msra.mxu0 0
    %389 = vmatpush.bf16.msra.mxu0 0
    %390 = vmatpush.bf16.msra.mxu0 0
    %391 = vmatpush.bf16.msra.mxu0 0
    %392 = vmatpush.bf16.msra.mxu0 %v362
    %393 = vmatmul.bf16.gmra.mxu0 %v370
    %v394 = vpop.f32.mrf.mxu0
    %v395 = vadd.f32 %v342, %v394
    %v396 = vpop.f32.mrf.mxu0
    %397 = vdwg.mxu0
    %398 = vmatpush.bf16.msra.mxu0 0
    %399 = vmatpush.bf16.msra.mxu0 0
    %400 = vmatpush.bf16.msra.mxu0 0
    %401 = vmatpush.bf16.msra.mxu0 0
    %402 = vmatpush.bf16.msra.mxu0 0
    %403 = vmatpush.bf16.msra.mxu0 0
    %404 = vmatpush.bf16.msra.mxu0 0
    %405 = vmatpush.bf16.msra.mxu0 %v363
    %406 = vmatmul.bf16.gmra.mxu0 %v370
    %v407 = vpop.f32.mrf.mxu0
    %v408 = vadd.f32 %v343, %v407
    %v409 = vpop.f32.mrf.mxu0
    %410 = vdwg.mxu0
    %411 = vmatpush.bf16.msra.mxu0 0
    %412 = vmatpush.bf16.msra.mxu0 0
    %413 = vmatpush.bf16.msra.mxu0 0
    %414 = vmatpush.bf16.msra.mxu0 0
    %415 = vmatpush.bf16.msra.mxu0 0
    %416 = vmatpush.bf16.msra.mxu0 0
    %417 = vmatpush.bf16.msra.mxu0 0
    %418 = vmatpush.bf16.msra.mxu0 %v364
    %419 = vmatmul.bf16.gmra.mxu0 %v370
    %v420 = vpop.f32.mrf.mxu0
    %v421 = vadd.f32 %v344, %v420
    %v422 = vpop.f32.mrf.mxu0
    %423 = vdwg.mxu0
    %s424 = scalar_lea.vmem [#allocation2], 64
    %425 = vst [vmem:[%s424] sm:$0xff] %v382
    %426 = vst [vmem:[%s424 + $0x8] sm:$0xff] %v395
    %427 = vst [vmem:[%s424 + $0x10] sm:$0xff] %v408
    %428 = vst [vmem:[%s424 + $0x18] sm:$0xff] %v421
    %s429 = scalar_lea.vmem %s0, 24
    %v430 = vld [vmem:[%s429] sm:$0xff]
    %v431 = vpack.c.bf16 %v430, %v430
    %v432 = vld [vmem:[#allocation5] sm:$0xff]
    %v433 = vld [vmem:[#allocation5 + $0x8] sm:$0xff]
    %v434 = vld [vmem:[#allocation5 + $0x10] sm:$0xff]
    %v435 = vld [vmem:[#allocation5 + $0x18] sm:$0xff]
    %v436 = vld [vmem:[#allocation7] sm:$0xf]
    %v438 = vperm.slane %v436, 0
    %v439 = vperm.slane %v436, 1
    %v440 = vperm.slane %v436, 2
    %v441 = vperm.slane %v436, 3
    %v450 = vunpack.c.l.b16 %v432
    %v451 = vunpack.c.h.b16 %v432
    %v452 = vunpack.c.l.b16 %v433
    %v453 = vunpack.c.h.b16 %v433
    %v454 = vunpack.c.l.b16 %v434
    %v455 = vunpack.c.h.b16 %v434
    %v456 = vunpack.c.l.b16 %v435
    %v457 = vunpack.c.h.b16 %v435
    %v458 = vpack.c.b16 %v454, %v450
    %v459 = vpack.c.b16 %v455, %v451
    %v460 = vpack.c.b16 %v456, %v452
    %v461 = vpack.c.b16 %v457, %v453
    %v467 = vsel %vm175, %v431, 0
    %469 = vmatpush.bf16.msra.mxu0 0
    %470 = vmatpush.bf16.msra.mxu0 0
    %471 = vmatpush.bf16.msra.mxu0 0
    %472 = vmatpush.bf16.msra.mxu0 0
    %473 = vmatpush.bf16.msra.mxu0 0
    %474 = vmatpush.bf16.msra.mxu0 0
    %475 = vmatpush.bf16.msra.mxu0 0
    %476 = vmatpush.bf16.msra.mxu0 %v458
    %477 = vmatmul.bf16.gmra.mxu0 %v467
    %v478 = vpop.f32.mrf.mxu0
    %v479 = vadd.f32 %v438, %v478
    %v480 = vpop.f32.mrf.mxu0
    %481 = vdwg.mxu0
    %482 = vmatpush.bf16.msra.mxu0 0
    %483 = vmatpush.bf16.msra.mxu0 0
    %484 = vmatpush.bf16.msra.mxu0 0
    %485 = vmatpush.bf16.msra.mxu0 0
    %486 = vmatpush.bf16.msra.mxu0 0
    %487 = vmatpush.bf16.msra.mxu0 0
    %488 = vmatpush.bf16.msra.mxu0 0
    %489 = vmatpush.bf16.msra.mxu0 %v459
    %490 = vmatmul.bf16.gmra.mxu0 %v467
    %v491 = vpop.f32.mrf.mxu0
    %v492 = vadd.f32 %v439, %v491
    %v493 = vpop.f32.mrf.mxu0
    %494 = vdwg.mxu0
    %495 = vmatpush.bf16.msra.mxu0 0
    %496 = vmatpush.bf16.msra.mxu0 0
    %497 = vmatpush.bf16.msra.mxu0 0
    %498 = vmatpush.bf16.msra.mxu0 0
    %499 = vmatpush.bf16.msra.mxu0 0
    %500 = vmatpush.bf16.msra.mxu0 0
    %501 = vmatpush.bf16.msra.mxu0 0
    %502 = vmatpush.bf16.msra.mxu0 %v460
    %503 = vmatmul.bf16.gmra.mxu0 %v467
    %v504 = vpop.f32.mrf.mxu0
    %v505 = vadd.f32 %v440, %v504
    %v506 = vpop.f32.mrf.mxu0
    %507 = vdwg.mxu0
    %508 = vmatpush.bf16.msra.mxu0 0
    %509 = vmatpush.bf16.msra.mxu0 0
    %510 = vmatpush.bf16.msra.mxu0 0
    %511 = vmatpush.bf16.msra.mxu0 0
    %512 = vmatpush.bf16.msra.mxu0 0
    %513 = vmatpush.bf16.msra.mxu0 0
    %514 = vmatpush.bf16.msra.mxu0 0
    %515 = vmatpush.bf16.msra.mxu0 %v461
    %516 = vmatmul.bf16.gmra.mxu0 %v467
    %v517 = vpop.f32.mrf.mxu0
    %v518 = vadd.f32 %v441, %v517
    %v519 = vpop.f32.mrf.mxu0
    %520 = vdwg.mxu0
    %s521 = scalar_lea.vmem [#allocation2], 96
    %522 = vst [vmem:[%s521] sm:$0xff] %v479
    %523 = vst [vmem:[%s521 + $0x8] sm:$0xff] %v492
    %524 = vst [vmem:[%s521 + $0x10] sm:$0xff] %v505
    %525 = vst [vmem:[%s521 + $0x18] sm:$0xff] %v518
    %s526 = scalar_lea.vmem %s0, 32
    %v527 = vld [vmem:[%s526] sm:$0xff]
    %v528 = vpack.c.bf16 %v527, %v527
    %v529 = vld [vmem:[#allocation5] sm:$0xff]
    %v530 = vld [vmem:[#allocation5 + $0x8] sm:$0xff]
    %v531 = vld [vmem:[#allocation5 + $0x10] sm:$0xff]
    %v532 = vld [vmem:[#allocation5 + $0x18] sm:$0xff]
    %v533 = vld [vmem:[#allocation7] sm:$0xf]
    %v535 = vperm.slane %v533, 0
    %v536 = vperm.slane %v533, 1
    %v537 = vperm.slane %v533, 2
    %v538 = vperm.slane %v533, 3
    %v547 = vunpack.c.l.b16 %v529
    %v548 = vunpack.c.h.b16 %v529
    %v549 = vunpack.c.l.b16 %v530
    %v550 = vunpack.c.h.b16 %v530
    %v551 = vunpack.c.l.b16 %v531
    %v552 = vunpack.c.h.b16 %v531
    %v553 = vunpack.c.l.b16 %v532
    %v554 = vunpack.c.h.b16 %v532
    %v555 = vpack.c.b16 %v551, %v547
    %v556 = vpack.c.b16 %v552, %v548
    %v557 = vpack.c.b16 %v553, %v549
    %v558 = vpack.c.b16 %v554, %v550
    %v564 = vsel %vm175, %v528, 0
    %566 = vmatpush.bf16.msra.mxu0 0
    %567 = vmatpush.bf16.msra.mxu0 0
    %568 = vmatpush.bf16.msra.mxu0 0
    %569 = vmatpush.bf16.msra.mxu0 0
    %570 = vmatpush.bf16.msra.mxu0 0
    %571 = vmatpush.bf16.msra.mxu0 0
    %572 = vmatpush.bf16.msra.mxu0 0
    %573 = vmatpush.bf16.msra.mxu0 %v555
    %574 = vmatmul.bf16.gmra.mxu0 %v564
    %v575 = vpop.f32.mrf.mxu0
    %v576 = vadd.f32 %v535, %v575
    %v577 = vpop.f32.mrf.mxu0
    %578 = vdwg.mxu0
    %579 = vmatpush.bf16.msra.mxu0 0
    %580 = vmatpush.bf16.msra.mxu0 0
    %581 = vmatpush.bf16.msra.mxu0 0
    %582 = vmatpush.bf16.msra.mxu0 0
    %583 = vmatpush.bf16.msra.mxu0 0
    %584 = vmatpush.bf16.msra.mxu0 0
    %585 = vmatpush.bf16.msra.mxu0 0
    %586 = vmatpush.bf16.msra.mxu0 %v556
    %587 = vmatmul.bf16.gmra.mxu0 %v564
    %v588 = vpop.f32.mrf.mxu0
    %v589 = vadd.f32 %v536, %v588
    %v590 = vpop.f32.mrf.mxu0
    %591 = vdwg.mxu0
    %592 = vmatpush.bf16.msra.mxu0 0
    %593 = vmatpush.bf16.msra.mxu0 0
    %594 = vmatpush.bf16.msra.mxu0 0
    %595 = vmatpush.bf16.msra.mxu0 0
    %596 = vmatpush.bf16.msra.mxu0 0
    %597 = vmatpush.bf16.msra.mxu0 0
    %598 = vmatpush.bf16.msra.mxu0 0
    %599 = vmatpush.bf16.msra.mxu0 %v557
    %600 = vmatmul.bf16.gmra.mxu0 %v564
    %v601 = vpop.f32.mrf.mxu0
    %v602 = vadd.f32 %v537, %v601
    %v603 = vpop.f32.mrf.mxu0
    %604 = vdwg.mxu0
    %605 = vmatpush.bf16.msra.mxu0 0
    %606 = vmatpush.bf16.msra.mxu0 0
    %607 = vmatpush.bf16.msra.mxu0 0
    %608 = vmatpush.bf16.msra.mxu0 0
    %609 = vmatpush.bf16.msra.mxu0 0
    %610 = vmatpush.bf16.msra.mxu0 0
    %611 = vmatpush.bf16.msra.mxu0 0
    %612 = vmatpush.bf16.msra.mxu0 %v558
    %613 = vmatmul.bf16.gmra.mxu0 %v564
    %v614 = vpop.f32.mrf.mxu0
    %v615 = vadd.f32 %v538, %v614
    %v616 = vpop.f32.mrf.mxu0
    %617 = vdwg.mxu0
    %s618 = scalar_lea.vmem [#allocation2], 128
    %619 = vst [vmem:[%s618] sm:$0xff] %v576
    %620 = vst [vmem:[%s618 + $0x8] sm:$0xff] %v589
    %621 = vst [vmem:[%s618 + $0x10] sm:$0xff] %v602
    %622 = vst [vmem:[%s618 + $0x18] sm:$0xff] %v615
    %s623 = scalar_lea.vmem %s0, 40
    %v624 = vld [vmem:[%s623] sm:$0xff]
    %v625 = vpack.c.bf16 %v624, %v624
    %v626 = vld [vmem:[#allocation5] sm:$0xff]
    %v627 = vld [vmem:[#allocation5 + $0x8] sm:$0xff]
    %v628 = vld [vmem:[#allocation5 + $0x10] sm:$0xff]
    %v629 = vld [vmem:[#allocation5 + $0x18] sm:$0xff]
    %v630 = vld [vmem:[#allocation7] sm:$0xf]
    %v632 = vperm.slane %v630, 0
    %v633 = vperm.slane %v630, 1
    %v634 = vperm.slane %v630, 2
    %v635 = vperm.slane %v630, 3
    %v644 = vunpack.c.l.b16 %v626
    %v645 = vunpack.c.h.b16 %v626
    %v646 = vunpack.c.l.b16 %v627
    %v647 = vunpack.c.h.b16 %v627
    %v648 = vunpack.c.l.b16 %v628
    %v649 = vunpack.c.h.b16 %v628
    %v650 = vunpack.c.l.b16 %v629
    %v651 = vunpack.c.h.b16 %v629
    %v652 = vpack.c.b16 %v648, %v644
    %v653 = vpack.c.b16 %v649, %v645
    %v654 = vpack.c.b16 %v650, %v646
    %v655 = vpack.c.b16 %v651, %v647
    %v661 = vsel %vm175, %v625, 0
    %663 = vmatpush.bf16.msra.mxu0 0
    %664 = vmatpush.bf16.msra.mxu0 0
    %665 = vmatpush.bf16.msra.mxu0 0
    %666 = vmatpush.bf16.msra.mxu0 0
    %667 = vmatpush.bf16.msra.mxu0 0
    %668 = vmatpush.bf16.msra.mxu0 0
    %669 = vmatpush.bf16.msra.mxu0 0
    %670 = vmatpush.bf16.msra.mxu0 %v652
    %671 = vmatmul.bf16.gmra.mxu0 %v661
    %v672 = vpop.f32.mrf.mxu0
    %v673 = vadd.f32 %v632, %v672
    %v674 = vpop.f32.mrf.mxu0
    %675 = vdwg.mxu0
    %676 = vmatpush.bf16.msra.mxu0 0
    %677 = vmatpush.bf16.msra.mxu0 0
    %678 = vmatpush.bf16.msra.mxu0 0
    %679 = vmatpush.bf16.msra.mxu0 0
    %680 = vmatpush.bf16.msra.mxu0 0
    %681 = vmatpush.bf16.msra.mxu0 0
    %682 = vmatpush.bf16.msra.mxu0 0
    %683 = vmatpush.bf16.msra.mxu0 %v653
    %684 = vmatmul.bf16.gmra.mxu0 %v661
    %v685 = vpop.f32.mrf.mxu0
    %v686 = vadd.f32 %v633, %v685
    %v687 = vpop.f32.mrf.mxu0
    %688 = vdwg.mxu0
    %689 = vmatpush.bf16.msra.mxu0 0
    %690 = vmatpush.bf16.msra.mxu0 0
    %691 = vmatpush.bf16.msra.mxu0 0
    %692 = vmatpush.bf16.msra.mxu0 0
    %693 = vmatpush.bf16.msra.mxu0 0
    %694 = vmatpush.bf16.msra.mxu0 0
    %695 = vmatpush.bf16.msra.mxu0 0
    %696 = vmatpush.bf16.msra.mxu0 %v654
    %697 = vmatmul.bf16.gmra.mxu0 %v661
    %v698 = vpop.f32.mrf.mxu0
    %v699 = vadd.f32 %v634, %v698
    %v700 = vpop.f32.mrf.mxu0
    %701 = vdwg.mxu0
    %702 = vmatpush.bf16.msra.mxu0 0
    %703 = vmatpush.bf16.msra.mxu0 0
    %704 = vmatpush.bf16.msra.mxu0 0
    %705 = vmatpush.bf16.msra.mxu0 0
    %706 = vmatpush.bf16.msra.mxu0 0
    %707 = vmatpush.bf16.msra.mxu0 0
    %708 = vmatpush.bf16.msra.mxu0 0
    %709 = vmatpush.bf16.msra.mxu0 %v655
    %710 = vmatmul.bf16.gmra.mxu0 %v661
    %v711 = vpop.f32.mrf.mxu0
    %v712 = vadd.f32 %v635, %v711
    %v713 = vpop.f32.mrf.mxu0
    %714 = vdwg.mxu0
    %s715 = scalar_lea.vmem [#allocation2], 160
    %716 = vst [vmem:[%s715] sm:$0xff] %v673
    %717 = vst [vmem:[%s715 + $0x8] sm:$0xff] %v686
    %718 = vst [vmem:[%s715 + $0x10] sm:$0xff] %v699
    %719 = vst [vmem:[%s715 + $0x18] sm:$0xff] %v712
    %s720 = scalar_lea.vmem %s0, 48
    %v721 = vld [vmem:[%s720] sm:$0xff]
    %v722 = vpack.c.bf16 %v721, %v721
    %v723 = vld [vmem:[#allocation5] sm:$0xff]
    %v724 = vld [vmem:[#allocation5 + $0x8] sm:$0xff]
    %v725 = vld [vmem:[#allocation5 + $0x10] sm:$0xff]
    %v726 = vld [vmem:[#allocation5 + $0x18] sm:$0xff]
    %v727 = vld [vmem:[#allocation7] sm:$0xf]
    %v729 = vperm.slane %v727, 0
    %v730 = vperm.slane %v727, 1
    %v731 = vperm.slane %v727, 2
    %v732 = vperm.slane %v727, 3
    %v741 = vunpack.c.l.b16 %v723
    %v742 = vunpack.c.h.b16 %v723
    %v743 = vunpack.c.l.b16 %v724
    %v744 = vunpack.c.h.b16 %v724
    %v745 = vunpack.c.l.b16 %v725
    %v746 = vunpack.c.h.b16 %v725
    %v747 = vunpack.c.l.b16 %v726
    %v748 = vunpack.c.h.b16 %v726
    %v749 = vpack.c.b16 %v745, %v741
    %v750 = vpack.c.b16 %v746, %v742
    %v751 = vpack.c.b16 %v747, %v743
    %v752 = vpack.c.b16 %v748, %v744
    %v758 = vsel %vm175, %v722, 0
    %760 = vmatpush.bf16.msra.mxu0 0
    %761 = vmatpush.bf16.msra.mxu0 0
    %762 = vmatpush.bf16.msra.mxu0 0
    %763 = vmatpush.bf16.msra.mxu0 0
    %764 = vmatpush.bf16.msra.mxu0 0
    %765 = vmatpush.bf16.msra.mxu0 0
    %766 = vmatpush.bf16.msra.mxu0 0
    %767 = vmatpush.bf16.msra.mxu0 %v749
    %768 = vmatmul.bf16.gmra.mxu0 %v758
    %v769 = vpop.f32.mrf.mxu0
    %v770 = vadd.f32 %v729, %v769
    %v771 = vpop.f32.mrf.mxu0
    %772 = vdwg.mxu0
    %773 = vmatpush.bf16.msra.mxu0 0
    %774 = vmatpush.bf16.msra.mxu0 0
    %775 = vmatpush.bf16.msra.mxu0 0
    %776 = vmatpush.bf16.msra.mxu0 0
    %777 = vmatpush.bf16.msra.mxu0 0
    %778 = vmatpush.bf16.msra.mxu0 0
    %779 = vmatpush.bf16.msra.mxu0 0
    %780 = vmatpush.bf16.msra.mxu0 %v750
    %781 = vmatmul.bf16.gmra.mxu0 %v758
    %v782 = vpop.f32.mrf.mxu0
    %v783 = vadd.f32 %v730, %v782
    %v784 = vpop.f32.mrf.mxu0
    %785 = vdwg.mxu0
    %786 = vmatpush.bf16.msra.mxu0 0
    %787 = vmatpush.bf16.msra.mxu0 0
    %788 = vmatpush.bf16.msra.mxu0 0
    %789 = vmatpush.bf16.msra.mxu0 0
    %790 = vmatpush.bf16.msra.mxu0 0
    %791 = vmatpush.bf16.msra.mxu0 0
    %792 = vmatpush.bf16.msra.mxu0 0
    %793 = vmatpush.bf16.msra.mxu0 %v751
    %794 = vmatmul.bf16.gmra.mxu0 %v758
    %v795 = vpop.f32.mrf.mxu0
    %v796 = vadd.f32 %v731, %v795
    %v797 = vpop.f32.mrf.mxu0
    %798 = vdwg.mxu0
    %799 = vmatpush.bf16.msra.mxu0 0
    %800 = vmatpush.bf16.msra.mxu0 0
    %801 = vmatpush.bf16.msra.mxu0 0
    %802 = vmatpush.bf16.msra.mxu0 0
    %803 = vmatpush.bf16.msra.mxu0 0
    %804 = vmatpush.bf16.msra.mxu0 0
    %805 = vmatpush.bf16.msra.mxu0 0
    %806 = vmatpush.bf16.msra.mxu0 %v752
    %807 = vmatmul.bf16.gmra.mxu0 %v758
    %v808 = vpop.f32.mrf.mxu0
    %v809 = vadd.f32 %v732, %v808
    %v810 = vpop.f32.mrf.mxu0
    %811 = vdwg.mxu0
    %s812 = scalar_lea.vmem [#allocation2], 192
    %813 = vst [vmem:[%s812] sm:$0xff] %v770
    %814 = vst [vmem:[%s812 + $0x8] sm:$0xff] %v783
    %815 = vst [vmem:[%s812 + $0x10] sm:$0xff] %v796
    %816 = vst [vmem:[%s812 + $0x18] sm:$0xff] %v809
    %s817 = scalar_lea.vmem %s0, 56
    %v818 = vld [vmem:[%s817] sm:$0xff]
    %v819 = vpack.c.bf16 %v818, %v818
    %v820 = vld [vmem:[#allocation5] sm:$0xff]
    %v821 = vld [vmem:[#allocation5 + $0x8] sm:$0xff]
    %v822 = vld [vmem:[#allocation5 + $0x10] sm:$0xff]
    %v823 = vld [vmem:[#allocation5 + $0x18] sm:$0xff]
    %v824 = vld [vmem:[#allocation7] sm:$0xf]
    %v826 = vperm.slane %v824, 0
    %v827 = vperm.slane %v824, 1
    %v828 = vperm.slane %v824, 2
    %v829 = vperm.slane %v824, 3
    %v838 = vunpack.c.l.b16 %v820
    %v839 = vunpack.c.h.b16 %v820
    %v840 = vunpack.c.l.b16 %v821
    %v841 = vunpack.c.h.b16 %v821
    %v842 = vunpack.c.l.b16 %v822
    %v843 = vunpack.c.h.b16 %v822
    %v844 = vunpack.c.l.b16 %v823
    %v845 = vunpack.c.h.b16 %v823
    %v846 = vpack.c.b16 %v842, %v838
    %v847 = vpack.c.b16 %v843, %v839
    %v848 = vpack.c.b16 %v844, %v840
    %v849 = vpack.c.b16 %v845, %v841
    %v855 = vsel %vm175, %v819, 0
    %857 = vmatpush.bf16.msra.mxu0 0
    %858 = vmatpush.bf16.msra.mxu0 0
    %859 = vmatpush.bf16.msra.mxu0 0
    %860 = vmatpush.bf16.msra.mxu0 0
    %861 = vmatpush.bf16.msra.mxu0 0
    %862 = vmatpush.bf16.msra.mxu0 0
    %863 = vmatpush.bf16.msra.mxu0 0
    %864 = vmatpush.bf16.msra.mxu0 %v846
    %865 = vmatmul.bf16.gmra.mxu0 %v855
    %v866 = vpop.f32.mrf.mxu0
    %v867 = vadd.f32 %v826, %v866
    %v868 = vpop.f32.mrf.mxu0
    %869 = vdwg.mxu0
    %870 = vmatpush.bf16.msra.mxu0 0
    %871 = vmatpush.bf16.msra.mxu0 0
    %872 = vmatpush.bf16.msra.mxu0 0
    %873 = vmatpush.bf16.msra.mxu0 0
    %874 = vmatpush.bf16.msra.mxu0 0
    %875 = vmatpush.bf16.msra.mxu0 0
    %876 = vmatpush.bf16.msra.mxu0 0
    %877 = vmatpush.bf16.msra.mxu0 %v847
    %878 = vmatmul.bf16.gmra.mxu0 %v855
    %v879 = vpop.f32.mrf.mxu0
    %v880 = vadd.f32 %v827, %v879
    %v881 = vpop.f32.mrf.mxu0
    %882 = vdwg.mxu0
    %883 = vmatpush.bf16.msra.mxu0 0
    %884 = vmatpush.bf16.msra.mxu0 0
    %885 = vmatpush.bf16.msra.mxu0 0
    %886 = vmatpush.bf16.msra.mxu0 0
    %887 = vmatpush.bf16.msra.mxu0 0
    %888 = vmatpush.bf16.msra.mxu0 0
    %889 = vmatpush.bf16.msra.mxu0 0
    %890 = vmatpush.bf16.msra.mxu0 %v848
    %891 = vmatmul.bf16.gmra.mxu0 %v855
    %v892 = vpop.f32.mrf.mxu0
    %v893 = vadd.f32 %v828, %v892
    %v894 = vpop.f32.mrf.mxu0
    %895 = vdwg.mxu0
    %896 = vmatpush.bf16.msra.mxu0 0
    %897 = vmatpush.bf16.msra.mxu0 0
    %898 = vmatpush.bf16.msra.mxu0 0
    %899 = vmatpush.bf16.msra.mxu0 0
    %900 = vmatpush.bf16.msra.mxu0 0
    %901 = vmatpush.bf16.msra.mxu0 0
    %902 = vmatpush.bf16.msra.mxu0 0
    %903 = vmatpush.bf16.msra.mxu0 %v849
    %904 = vmatmul.bf16.gmra.mxu0 %v855
    %v905 = vpop.f32.mrf.mxu0
    %v906 = vadd.f32 %v829, %v905
    %v907 = vpop.f32.mrf.mxu0
    %908 = vdwg.mxu0
    %s909 = scalar_lea.vmem [#allocation2], 224
    %910 = vst [vmem:[%s909] sm:$0xff] %v867
    %911 = vst [vmem:[%s909 + $0x8] sm:$0xff] %v880
    %912 = vst [vmem:[%s909 + $0x10] sm:$0xff] %v893
    %913 = vst [vmem:[%s909 + $0x18] sm:$0xff] %v906
    %v914 = vld [vmem:[#allocation3] sm:$0xff]
    %v915 = vld [vmem:[#allocation4] sm:$0xff]
    %s916 = scalar_lea.vmem [#allocation3], 8
    %v917 = vld [vmem:[%s916] sm:$0xff]
    %s918 = scalar_lea.vmem [#allocation4], 8
    %v919 = vld [vmem:[%s918] sm:$0xff]
    %v920 = vpack.c.bf16 %v917, %v917
    %v921 = vld [vmem:[#allocation12] sm:$0xff]
    %v922 = vld [vmem:[#allocation12 + $0x8] sm:$0xff]
    %v923 = vld [vmem:[#allocation12 + $0x10] sm:$0xff]
    %v924 = vld [vmem:[#allocation12 + $0x18] sm:$0xff]
    %v925 = vld [vmem:[#allocation12 + $0x20] sm:$0xff]
    %v926 = vld [vmem:[#allocation12 + $0x28] sm:$0xff]
    %v927 = vld [vmem:[#allocation12 + $0x30] sm:$0xff]
    %v928 = vld [vmem:[#allocation12 + $0x38] sm:$0xff]
    %v929 = vld [vmem:[#allocation12 + $0x40] sm:$0xff]
    %v930 = vld [vmem:[#allocation12 + $0x48] sm:$0xff]
    %v931 = vld [vmem:[#allocation12 + $0x50] sm:$0xff]
    %v932 = vld [vmem:[#allocation12 + $0x58] sm:$0xff]
    %v933 = vld [vmem:[#allocation12 + $0x60] sm:$0xff]
    %v934 = vld [vmem:[#allocation12 + $0x68] sm:$0xff]
    %v935 = vld [vmem:[#allocation12 + $0x70] sm:$0xff]
    %v936 = vld [vmem:[#allocation12 + $0x78] sm:$0xff]
    %v937 = vld [vmem:[#allocation12 + $0x80] sm:$0xff]
    %v938 = vld [vmem:[#allocation12 + $0x88] sm:$0xff]
    %v939 = vld [vmem:[#allocation12 + $0x90] sm:$0xff]
    %v940 = vld [vmem:[#allocation12 + $0x98] sm:$0xff]
    %v941 = vld [vmem:[#allocation12 + $0xa0] sm:$0xff]
    %v942 = vld [vmem:[#allocation12 + $0xa8] sm:$0xff]
    %v943 = vld [vmem:[#allocation12 + $0xb0] sm:$0xff]
    %v944 = vld [vmem:[#allocation12 + $0xb8] sm:$0xff]
    %v945 = vld [vmem:[#allocation12 + $0xc0] sm:$0xff]
    %v946 = vld [vmem:[#allocation12 + $0xc8] sm:$0xff]
    %v947 = vld [vmem:[#allocation12 + $0xd0] sm:$0xff]
    %v948 = vld [vmem:[#allocation12 + $0xd8] sm:$0xff]
    %v949 = vld [vmem:[#allocation12 + $0xe0] sm:$0xff]
    %v950 = vld [vmem:[#allocation12 + $0xe8] sm:$0xff]
    %v951 = vld [vmem:[#allocation12 + $0xf0] sm:$0xff]
    %v952 = vld [vmem:[#allocation12 + $0xf8] sm:$0xff]
    %v953 = vld [vmem:[%s6] sm:$0xf]
    %v955 = vperm.slane %v953, 0
    %v956 = vperm.slane %v953, 1
    %v957 = vperm.slane %v953, 2
    %v958 = vperm.slane %v953, 3
    %v995 = vunpack.c.l.b16 %v921
    %v996 = vunpack.c.h.b16 %v921
    %v997 = vunpack.c.l.b16 %v922
    %v998 = vunpack.c.h.b16 %v922
    %v999 = vunpack.c.l.b16 %v923
    %v1000 = vunpack.c.h.b16 %v923
    %v1001 = vunpack.c.l.b16 %v924
    %v1002 = vunpack.c.h.b16 %v924
    %v1003 = vunpack.c.l.b16 %v925
    %v1004 = vunpack.c.h.b16 %v925
    %v1005 = vunpack.c.l.b16 %v926
    %v1006 = vunpack.c.h.b16 %v926
    %v1007 = vunpack.c.l.b16 %v927
    %v1008 = vunpack.c.h.b16 %v927
    %v1009 = vunpack.c.l.b16 %v928
    %v1010 = vunpack.c.h.b16 %v928
    %v1011 = vunpack.c.l.b16 %v929
    %v1012 = vunpack.c.h.b16 %v929
    %v1013 = vunpack.c.l.b16 %v930
    %v1014 = vunpack.c.h.b16 %v930
    %v1015 = vunpack.c.l.b16 %v931
    %v1016 = vunpack.c.h.b16 %v931
    %v1017 = vunpack.c.l.b16 %v932
    %v1018 = vunpack.c.h.b16 %v932
    %v1019 = vunpack.c.l.b16 %v933
    %v1020 = vunpack.c.h.b16 %v933
    %v1021 = vunpack.c.l.b16 %v934
    %v1022 = vunpack.c.h.b16 %v934
    %v1023 = vunpack.c.l.b16 %v935
    %v1024 = vunpack.c.h.b16 %v935
    %v1025 = vunpack.c.l.b16 %v936
    %v1026 = vunpack.c.h.b16 %v936
    %v1027 = vunpack.c.l.b16 %v937
    %v1028 = vunpack.c.h.b16 %v937
    %v1029 = vunpack.c.l.b16 %v938
    %v1030 = vunpack.c.h.b16 %v938
    %v1031 = vunpack.c.l.b16 %v939
    %v1032 = vunpack.c.h.b16 %v939
    %v1033 = vunpack.c.l.b16 %v940
    %v1034 = vunpack.c.h.b16 %v940
    %v1035 = vunpack.c.l.b16 %v941
    %v1036 = vunpack.c.h.b16 %v941
    %v1037 = vunpack.c.l.b16 %v942
    %v1038 = vunpack.c.h.b16 %v942
    %v1039 = vunpack.c.l.b16 %v943
    %v1040 = vunpack.c.h.b16 %v943
    %v1041 = vunpack.c.l.b16 %v944
    %v1042 = vunpack.c.h.b16 %v944
    %v1043 = vunpack.c.l.b16 %v945
    %v1044 = vunpack.c.h.b16 %v945
    %v1045 = vunpack.c.l.b16 %v946
    %v1046 = vunpack.c.h.b16 %v946
    %v1047 = vunpack.c.l.b16 %v947
    %v1048 = vunpack.c.h.b16 %v947
    %v1049 = vunpack.c.l.b16 %v948
    %v1050 = vunpack.c.h.b16 %v948
    %v1051 = vunpack.c.l.b16 %v949
    %v1052 = vunpack.c.h.b16 %v949
    %v1053 = vunpack.c.l.b16 %v950
    %v1054 = vunpack.c.h.b16 %v950
    %v1055 = vunpack.c.l.b16 %v951
    %v1056 = vunpack.c.h.b16 %v951
    %v1057 = vunpack.c.l.b16 %v952
    %v1058 = vunpack.c.h.b16 %v952
    %v1059 = vpack.c.b16 %v999, %v995
    %v1060 = vpack.c.b16 %v1000, %v996
    %v1061 = vpack.c.b16 %v1001, %v997
    %v1062 = vpack.c.b16 %v1002, %v998
    %v1063 = vpack.c.b16 %v1007, %v1003
    %v1064 = vpack.c.b16 %v1008, %v1004
    %v1065 = vpack.c.b16 %v1009, %v1005
    %v1066 = vpack.c.b16 %v1010, %v1006
    %v1067 = vpack.c.b16 %v1015, %v1011
    %v1068 = vpack.c.b16 %v1016, %v1012
    %v1069 = vpack.c.b16 %v1017, %v1013
    %v1070 = vpack.c.b16 %v1018, %v1014
    %v1071 = vpack.c.b16 %v1023, %v1019
    %v1072 = vpack.c.b16 %v1024, %v1020
    %v1073 = vpack.c.b16 %v1025, %v1021
    %v1074 = vpack.c.b16 %v1026, %v1022
    %v1075 = vpack.c.b16 %v1031, %v1027
    %v1076 = vpack.c.b16 %v1032, %v1028
    %v1077 = vpack.c.b16 %v1033, %v1029
    %v1078 = vpack.c.b16 %v1034, %v1030
    %v1079 = vpack.c.b16 %v1039, %v1035
    %v1080 = vpack.c.b16 %v1040, %v1036
    %v1081 = vpack.c.b16 %v1041, %v1037
    %v1082 = vpack.c.b16 %v1042, %v1038
    %v1083 = vpack.c.b16 %v1047, %v1043
    %v1084 = vpack.c.b16 %v1048, %v1044
    %v1085 = vpack.c.b16 %v1049, %v1045
    %v1086 = vpack.c.b16 %v1050, %v1046
    %v1087 = vpack.c.b16 %v1055, %v1051
    %v1088 = vpack.c.b16 %v1056, %v1052
    %v1089 = vpack.c.b16 %v1057, %v1053
    %v1090 = vpack.c.b16 %v1058, %v1054
    %1123 = vmatpush.bf16.msra.mxu0 %v1087
    %1124 = vmatpush.bf16.msra.mxu0 %v1083
    %1125 = vmatpush.bf16.msra.mxu0 %v1079
    %1126 = vmatpush.bf16.msra.mxu0 %v1075
    %1127 = vmatpush.bf16.msra.mxu0 %v1071
    %1128 = vmatpush.bf16.msra.mxu0 %v1067
    %1129 = vmatpush.bf16.msra.mxu0 %v1063
    %1130 = vmatpush.bf16.msra.mxu0 %v1059
    %1131 = vmatmul.bf16.gmra.mxu0 %v920
    %v1132 = vpop.f32.mrf.mxu0
    %v1133 = vadd.f32 %v955, %v1132
    %v1134 = vpop.f32.mrf.mxu0
    %1135 = vdwg.mxu0
    %1136 = vmatpush.bf16.msra.mxu0 %v1088
    %1137 = vmatpush.bf16.msra.mxu0 %v1084
    %1138 = vmatpush.bf16.msra.mxu0 %v1080
    %1139 = vmatpush.bf16.msra.mxu0 %v1076
    %1140 = vmatpush.bf16.msra.mxu0 %v1072
    %1141 = vmatpush.bf16.msra.mxu0 %v1068
    %1142 = vmatpush.bf16.msra.mxu0 %v1064
    %1143 = vmatpush.bf16.msra.mxu0 %v1060
    %1144 = vmatmul.bf16.gmra.mxu0 %v920
    %v1145 = vpop.f32.mrf.mxu0
    %v1146 = vadd.f32 %v956, %v1145
    %v1147 = vpop.f32.mrf.mxu0
    %1148 = vdwg.mxu0
    %1149 = vmatpush.bf16.msra.mxu0 %v1089
    %1150 = vmatpush.bf16.msra.mxu0 %v1085
    %1151 = vmatpush.bf16.msra.mxu0 %v1081
    %1152 = vmatpush.bf16.msra.mxu0 %v1077
    %1153 = vmatpush.bf16.msra.mxu0 %v1073
    %1154 = vmatpush.bf16.msra.mxu0 %v1069
    %1155 = vmatpush.bf16.msra.mxu0 %v1065
    %1156 = vmatpush.bf16.msra.mxu0 %v1061
    %1157 = vmatmul.bf16.gmra.mxu0 %v920
    %v1158 = vpop.f32.mrf.mxu0
    %v1159 = vadd.f32 %v957, %v1158
    %v1160 = vpop.f32.mrf.mxu0
    %1161 = vdwg.mxu0
    %1162 = vmatpush.bf16.msra.mxu0 %v1090
    %1163 = vmatpush.bf16.msra.mxu0 %v1086
    %1164 = vmatpush.bf16.msra.mxu0 %v1082
    %1165 = vmatpush.bf16.msra.mxu0 %v1078
    %1166 = vmatpush.bf16.msra.mxu0 %v1074
    %1167 = vmatpush.bf16.msra.mxu0 %v1070
    %1168 = vmatpush.bf16.msra.mxu0 %v1066
    %1169 = vmatpush.bf16.msra.mxu0 %v1062
    %1170 = vmatmul.bf16.gmra.mxu0 %v920
    %v1171 = vpop.f32.mrf.mxu0
    %v1172 = vadd.f32 %v958, %v1171
    %v1173 = vpop.f32.mrf.mxu0
    %1174 = vdwg.mxu0
    %v1175 = vld [vmem:[#allocation2] sm:$0xff]
    %v1176 = vld [vmem:[#allocation2 + $0x8] sm:$0xff]
    %v1177 = vld [vmem:[#allocation2 + $0x10] sm:$0xff]
    %v1178 = vld [vmem:[#allocation2 + $0x18] sm:$0xff]
    %v1179 = vpack.c.bf16 %v914, %v914
    %v1180 = vld [vmem:[#allocation9] sm:$0xff]
    %v1181 = vld [vmem:[#allocation9 + $0x8] sm:$0xff]
    %v1182 = vld [vmem:[#allocation9 + $0x10] sm:$0xff]
    %v1183 = vld [vmem:[#allocation9 + $0x18] sm:$0xff]
    %v1184 = vld [vmem:[#allocation9 + $0x20] sm:$0xff]
    %v1185 = vld [vmem:[#allocation9 + $0x28] sm:$0xff]
    %v1186 = vld [vmem:[#allocation9 + $0x30] sm:$0xff]
    %v1187 = vld [vmem:[#allocation9 + $0x38] sm:$0xff]
    %v1188 = vld [vmem:[#allocation9 + $0x40] sm:$0xff]
    %v1189 = vld [vmem:[#allocation9 + $0x48] sm:$0xff]
    %v1190 = vld [vmem:[#allocation9 + $0x50] sm:$0xff]
    %v1191 = vld [vmem:[#allocation9 + $0x58] sm:$0xff]
    %v1192 = vld [vmem:[#allocation9 + $0x60] sm:$0xff]
    %v1193 = vld [vmem:[#allocation9 + $0x68] sm:$0xff]
    %v1194 = vld [vmem:[#allocation9 + $0x70] sm:$0xff]
    %v1195 = vld [vmem:[#allocation9 + $0x78] sm:$0xff]
    %v1196 = vld [vmem:[#allocation9 + $0x80] sm:$0xff]
    %v1197 = vld [vmem:[#allocation9 + $0x88] sm:$0xff]
    %v1198 = vld [vmem:[#allocation9 + $0x90] sm:$0xff]
    %v1199 = vld [vmem:[#allocation9 + $0x98] sm:$0xff]
    %v1200 = vld [vmem:[#allocation9 + $0xa0] sm:$0xff]
    %v1201 = vld [vmem:[#allocation9 + $0xa8] sm:$0xff]
    %v1202 = vld [vmem:[#allocation9 + $0xb0] sm:$0xff]
    %v1203 = vld [vmem:[#allocation9 + $0xb8] sm:$0xff]
    %v1204 = vld [vmem:[#allocation9 + $0xc0] sm:$0xff]
    %v1205 = vld [vmem:[#allocation9 + $0xc8] sm:$0xff]
    %v1206 = vld [vmem:[#allocation9 + $0xd0] sm:$0xff]
    %v1207 = vld [vmem:[#allocation9 + $0xd8] sm:$0xff]
    %v1208 = vld [vmem:[#allocation9 + $0xe0] sm:$0xff]
    %v1209 = vld [vmem:[#allocation9 + $0xe8] sm:$0xff]
    %v1210 = vld [vmem:[#allocation9 + $0xf0] sm:$0xff]
    %v1211 = vld [vmem:[#allocation9 + $0xf8] sm:$0xff]
    %v1244 = vunpack.c.l.b16 %v1180
    %v1245 = vunpack.c.h.b16 %v1180
    %v1246 = vunpack.c.l.b16 %v1181
    %v1247 = vunpack.c.h.b16 %v1181
    %v1248 = vunpack.c.l.b16 %v1182
    %v1249 = vunpack.c.h.b16 %v1182
    %v1250 = vunpack.c.l.b16 %v1183
    %v1251 = vunpack.c.h.b16 %v1183
    %v1252 = vunpack.c.l.b16 %v1184
    %v1253 = vunpack.c.h.b16 %v1184
    %v1254 = vunpack.c.l.b16 %v1185
    %v1255 = vunpack.c.h.b16 %v1185
    %v1256 = vunpack.c.l.b16 %v1186
    %v1257 = vunpack.c.h.b16 %v1186
    %v1258 = vunpack.c.l.b16 %v1187
    %v1259 = vunpack.c.h.b16 %v1187
    %v1260 = vunpack.c.l.b16 %v1188
    %v1261 = vunpack.c.h.b16 %v1188
    %v1262 = vunpack.c.l.b16 %v1189
    %v1263 = vunpack.c.h.b16 %v1189
    %v1264 = vunpack.c.l.b16 %v1190
    %v1265 = vunpack.c.h.b16 %v1190
    %v1266 = vunpack.c.l.b16 %v1191
    %v1267 = vunpack.c.h.b16 %v1191
    %v1268 = vunpack.c.l.b16 %v1192
    %v1269 = vunpack.c.h.b16 %v1192
    %v1270 = vunpack.c.l.b16 %v1193
    %v1271 = vunpack.c.h.b16 %v1193
    %v1272 = vunpack.c.l.b16 %v1194
    %v1273 = vunpack.c.h.b16 %v1194
    %v1274 = vunpack.c.l.b16 %v1195
    %v1275 = vunpack.c.h.b16 %v1195
    %v1276 = vunpack.c.l.b16 %v1196
    %v1277 = vunpack.c.h.b16 %v1196
    %v1278 = vunpack.c.l.b16 %v1197
    %v1279 = vunpack.c.h.b16 %v1197
    %v1280 = vunpack.c.l.b16 %v1198
    %v1281 = vunpack.c.h.b16 %v1198
    %v1282 = vunpack.c.l.b16 %v1199
    %v1283 = vunpack.c.h.b16 %v1199
    %v1284 = vunpack.c.l.b16 %v1200
    %v1285 = vunpack.c.h.b16 %v1200
    %v1286 = vunpack.c.l.b16 %v1201
    %v1287 = vunpack.c.h.b16 %v1201
    %v1288 = vunpack.c.l.b16 %v1202
    %v1289 = vunpack.c.h.b16 %v1202
    %v1290 = vunpack.c.l.b16 %v1203
    %v1291 = vunpack.c.h.b16 %v1203
    %v1292 = vunpack.c.l.b16 %v1204
    %v1293 = vunpack.c.h.b16 %v1204
    %v1294 = vunpack.c.l.b16 %v1205
    %v1295 = vunpack.c.h.b16 %v1205
    %v1296 = vunpack.c.l.b16 %v1206
    %v1297 = vunpack.c.h.b16 %v1206
    %v1298 = vunpack.c.l.b16 %v1207
    %v1299 = vunpack.c.h.b16 %v1207
    %v1300 = vunpack.c.l.b16 %v1208
    %v1301 = vunpack.c.h.b16 %v1208
    %v1302 = vunpack.c.l.b16 %v1209
    %v1303 = vunpack.c.h.b16 %v1209
    %v1304 = vunpack.c.l.b16 %v1210
    %v1305 = vunpack.c.h.b16 %v1210
    %v1306 = vunpack.c.l.b16 %v1211
    %v1307 = vunpack.c.h.b16 %v1211
    %v1308 = vpack.c.b16 %v1248, %v1244
    %v1309 = vpack.c.b16 %v1249, %v1245
    %v1310 = vpack.c.b16 %v1250, %v1246
    %v1311 = vpack.c.b16 %v1251, %v1247
    %v1312 = vpack.c.b16 %v1256, %v1252
    %v1313 = vpack.c.b16 %v1257, %v1253
    %v1314 = vpack.c.b16 %v1258, %v1254
    %v1315 = vpack.c.b16 %v1259, %v1255
    %v1316 = vpack.c.b16 %v1264, %v1260
    %v1317 = vpack.c.b16 %v1265, %v1261
    %v1318 = vpack.c.b16 %v1266, %v1262
    %v1319 = vpack.c.b16 %v1267, %v1263
    %v1320 = vpack.c.b16 %v1272, %v1268
    %v1321 = vpack.c.b16 %v1273, %v1269
    %v1322 = vpack.c.b16 %v1274, %v1270
    %v1323 = vpack.c.b16 %v1275, %v1271
    %v1324 = vpack.c.b16 %v1280, %v1276
    %v1325 = vpack.c.b16 %v1281, %v1277
    %v1326 = vpack.c.b16 %v1282, %v1278
    %v1327 = vpack.c.b16 %v1283, %v1279
    %v1328 = vpack.c.b16 %v1288, %v1284
    %v1329 = vpack.c.b16 %v1289, %v1285
    %v1330 = vpack.c.b16 %v1290, %v1286
    %v1331 = vpack.c.b16 %v1291, %v1287
    %v1332 = vpack.c.b16 %v1296, %v1292
    %v1333 = vpack.c.b16 %v1297, %v1293
    %v1334 = vpack.c.b16 %v1298, %v1294
    %v1335 = vpack.c.b16 %v1299, %v1295
    %v1336 = vpack.c.b16 %v1304, %v1300
    %v1337 = vpack.c.b16 %v1305, %v1301
    %v1338 = vpack.c.b16 %v1306, %v1302
    %v1339 = vpack.c.b16 %v1307, %v1303
    %1372 = vmatpush.bf16.msra.mxu0 %v1336
    %1373 = vmatpush.bf16.msra.mxu0 %v1332
    %1374 = vmatpush.bf16.msra.mxu0 %v1328
    %1375 = vmatpush.bf16.msra.mxu0 %v1324
    %1376 = vmatpush.bf16.msra.mxu0 %v1320
    %1377 = vmatpush.bf16.msra.mxu0 %v1316
    %1378 = vmatpush.bf16.msra.mxu0 %v1312
    %1379 = vmatpush.bf16.msra.mxu0 %v1308
    %1380 = vmatmul.bf16.gmra.mxu0 %v1179
    %v1381 = vpop.f32.mrf.mxu0
    %v1382 = vadd.f32 0.0, %v1381
    %v1383 = vpop.f32.mrf.mxu0
    %1384 = vdwg.mxu0
    %1385 = vmatpush.bf16.msra.mxu0 %v1337
    %1386 = vmatpush.bf16.msra.mxu0 %v1333
    %1387 = vmatpush.bf16.msra.mxu0 %v1329
    %1388 = vmatpush.bf16.msra.mxu0 %v1325
    %1389 = vmatpush.bf16.msra.mxu0 %v1321
    %1390 = vmatpush.bf16.msra.mxu0 %v1317
    %1391 = vmatpush.bf16.msra.mxu0 %v1313
    %1392 = vmatpush.bf16.msra.mxu0 %v1309
    %1393 = vmatmul.bf16.gmra.mxu0 %v1179
    %v1394 = vpop.f32.mrf.mxu0
    %v1395 = vadd.f32 0.0, %v1394
    %v1396 = vpop.f32.mrf.mxu0
    %1397 = vdwg.mxu0
    %1398 = vmatpush.bf16.msra.mxu0 %v1338
    %1399 = vmatpush.bf16.msra.mxu0 %v1334
    %1400 = vmatpush.bf16.msra.mxu0 %v1330
    %1401 = vmatpush.bf16.msra.mxu0 %v1326
    %1402 = vmatpush.bf16.msra.mxu0 %v1322
    %1403 = vmatpush.bf16.msra.mxu0 %v1318
    %1404 = vmatpush.bf16.msra.mxu0 %v1314
    %1405 = vmatpush.bf16.msra.mxu0 %v1310
    %1406 = vmatmul.bf16.gmra.mxu0 %v1179
    %v1407 = vpop.f32.mrf.mxu0
    %v1408 = vadd.f32 0.0, %v1407
    %v1409 = vpop.f32.mrf.mxu0
    %1410 = vdwg.mxu0
    %1411 = vmatpush.bf16.msra.mxu0 %v1339
    %1412 = vmatpush.bf16.msra.mxu0 %v1335
    %1413 = vmatpush.bf16.msra.mxu0 %v1331
    %1414 = vmatpush.bf16.msra.mxu0 %v1327
    %1415 = vmatpush.bf16.msra.mxu0 %v1323
    %1416 = vmatpush.bf16.msra.mxu0 %v1319
    %1417 = vmatpush.bf16.msra.mxu0 %v1315
    %1418 = vmatpush.bf16.msra.mxu0 %v1311
    %1419 = vmatmul.bf16.gmra.mxu0 %v1179
    %v1420 = vpop.f32.mrf.mxu0
    %v1421 = vadd.f32 0.0, %v1420
    %v1422 = vpop.f32.mrf.mxu0
    %1423 = vdwg.mxu0
    %v1424 = vadd.f32 %v1175, %v1382
    %v1425 = vadd.f32 %v1176, %v1395
    %v1426 = vadd.f32 %v1177, %v1408
    %v1427 = vadd.f32 %v1178, %v1421
    %v1428 = vxor.u32 %v1424, 2147483648
    %v1429 = vmul.f32 %v1428, 1.442695
    %v1430 = vpow.pop %v1429
    %v1431 = vadd.f32 %v1430, 1.0
    %v1432 = vrcp.pop %v1431
    %v1433 = vmul.f32 %v1431, %v1432
    %v1434 = vsub.f32 1.0, %v1433
    %v1435 = vmul.f32 %v1432, %v1434
    %v1436 = vadd.f32 %v1432, %v1435
    %vm1437 = vweird.f32 %v1431
    %vm1438 = vweird.f32 %v1432
    %vm1439 = vmor %vm1437, %vm1438
    %v1440 = vsel %vm1439, %v1432, %v1436
    %v1441 = vand.u32 2147483647, %v1431
    %vm1442 = vcmp.eq.f32.partialorder %v1441, 8.507059e+37
    %v1443 = vand.u32 %v1431, 2147483648
    %v1444 = vor.u32 1.1754944e-38, %v1443
    %v1445 = vsel %vm1442, %v1444, %v1440
    %v1446 = vmul.f32 1.0, %v1445
    %v1447 = vxor.u32 %v1425, 2147483648
    %v1448 = vmul.f32 %v1447, 1.442695
    %v1449 = vpow.pop %v1448
    %v1450 = vadd.f32 %v1449, 1.0
    %v1451 = vrcp.pop %v1450
    %v1452 = vmul.f32 %v1450, %v1451
    %v1453 = vsub.f32 1.0, %v1452
    %v1454 = vmul.f32 %v1451, %v1453
    %v1455 = vadd.f32 %v1451, %v1454
    %vm1456 = vweird.f32 %v1450
    %vm1457 = vweird.f32 %v1451
    %vm1458 = vmor %vm1456, %vm1457
    %v1459 = vsel %vm1458, %v1451, %v1455
    %v1460 = vand.u32 2147483647, %v1450
    %vm1461 = vcmp.eq.f32.partialorder %v1460, 8.507059e+37
    %v1462 = vand.u32 %v1450, 2147483648
    %v1463 = vor.u32 1.1754944e-38, %v1462
    %v1464 = vsel %vm1461, %v1463, %v1459
    %v1465 = vmul.f32 1.0, %v1464
    %v1466 = vtanh.pop %v1426
    %v1467 = vxor.u32 %v1427, 2147483648
    %v1468 = vmul.f32 %v1467, 1.442695
    %v1469 = vpow.pop %v1468
    %v1470 = vadd.f32 %v1469, 1.0
    %v1471 = vrcp.pop %v1470
    %v1472 = vmul.f32 %v1470, %v1471
    %v1473 = vsub.f32 1.0, %v1472
    %v1474 = vmul.f32 %v1471, %v1473
    %v1475 = vadd.f32 %v1471, %v1474
    %vm1476 = vweird.f32 %v1470
    %vm1477 = vweird.f32 %v1471
    %vm1478 = vmor %vm1476, %vm1477
    %v1479 = vsel %vm1478, %v1471, %v1475
    %v1480 = vand.u32 2147483647, %v1470
    %vm1481 = vcmp.eq.f32.partialorder %v1480, 8.507059e+37
    %v1482 = vand.u32 %v1470, 2147483648
    %v1483 = vor.u32 1.1754944e-38, %v1482
    %v1484 = vsel %vm1481, %v1483, %v1479
    %v1485 = vmul.f32 1.0, %v1484
    %v1486 = vmul.f32 %v1465, %v915
    %v1487 = vmul.f32 %v1446, %v1466
    %v1488 = vadd.f32 %v1486, %v1487
    %v1489 = vtanh.pop %v1488
    %v1490 = vmul.f32 %v1485, %v1489
    %v1491 = vpack.c.bf16 %v1490, %v1490
    %v1492 = vld [vmem:[#allocation10] sm:$0xff]
    %v1493 = vld [vmem:[#allocation10 + $0x8] sm:$0xff]
    %v1494 = vld [vmem:[#allocation10 + $0x10] sm:$0xff]
    %v1495 = vld [vmem:[#allocation10 + $0x18] sm:$0xff]
    %v1496 = vld [vmem:[#allocation10 + $0x20] sm:$0xff]
    %v1497 = vld [vmem:[#allocation10 + $0x28] sm:$0xff]
    %v1498 = vld [vmem:[#allocation10 + $0x30] sm:$0xff]
    %v1499 = vld [vmem:[#allocation10 + $0x38] sm:$0xff]
    %v1500 = vld [vmem:[#allocation10 + $0x40] sm:$0xff]
    %v1501 = vld [vmem:[#allocation10 + $0x48] sm:$0xff]
    %v1502 = vld [vmem:[#allocation10 + $0x50] sm:$0xff]
    %v1503 = vld [vmem:[#allocation10 + $0x58] sm:$0xff]
    %v1504 = vld [vmem:[#allocation10 + $0x60] sm:$0xff]
    %v1505 = vld [vmem:[#allocation10 + $0x68] sm:$0xff]
    %v1506 = vld [vmem:[#allocation10 + $0x70] sm:$0xff]
    %v1507 = vld [vmem:[#allocation10 + $0x78] sm:$0xff]
    %v1508 = vld [vmem:[#allocation10 + $0x80] sm:$0xff]
    %v1509 = vld [vmem:[#allocation10 + $0x88] sm:$0xff]
    %v1510 = vld [vmem:[#allocation10 + $0x90] sm:$0xff]
    %v1511 = vld [vmem:[#allocation10 + $0x98] sm:$0xff]
    %v1512 = vld [vmem:[#allocation10 + $0xa0] sm:$0xff]
    %v1513 = vld [vmem:[#allocation10 + $0xa8] sm:$0xff]
    %v1514 = vld [vmem:[#allocation10 + $0xb0] sm:$0xff]
    %v1515 = vld [vmem:[#allocation10 + $0xb8] sm:$0xff]
    %v1516 = vld [vmem:[#allocation10 + $0xc0] sm:$0xff]
    %v1517 = vld [vmem:[#allocation10 + $0xc8] sm:$0xff]
    %v1518 = vld [vmem:[#allocation10 + $0xd0] sm:$0xff]
    %v1519 = vld [vmem:[#allocation10 + $0xd8] sm:$0xff]
    %v1520 = vld [vmem:[#allocation10 + $0xe0] sm:$0xff]
    %v1521 = vld [vmem:[#allocation10 + $0xe8] sm:$0xff]
    %v1522 = vld [vmem:[#allocation10 + $0xf0] sm:$0xff]
    %v1523 = vld [vmem:[#allocation10 + $0xf8] sm:$0xff]
    %v1556 = vunpack.c.l.b16 %v1492
    %v1557 = vunpack.c.h.b16 %v1492
    %v1558 = vunpack.c.l.b16 %v1493
    %v1559 = vunpack.c.h.b16 %v1493
    %v1560 = vunpack.c.l.b16 %v1494
    %v1561 = vunpack.c.h.b16 %v1494
    %v1562 = vunpack.c.l.b16 %v1495
    %v1563 = vunpack.c.h.b16 %v1495
    %v1564 = vunpack.c.l.b16 %v1496
    %v1565 = vunpack.c.h.b16 %v1496
    %v1566 = vunpack.c.l.b16 %v1497
    %v1567 = vunpack.c.h.b16 %v1497
    %v1568 = vunpack.c.l.b16 %v1498
    %v1569 = vunpack.c.h.b16 %v1498
    %v1570 = vunpack.c.l.b16 %v1499
    %v1571 = vunpack.c.h.b16 %v1499
    %v1572 = vunpack.c.l.b16 %v1500
    %v1573 = vunpack.c.h.b16 %v1500
    %v1574 = vunpack.c.l.b16 %v1501
    %v1575 = vunpack.c.h.b16 %v1501
    %v1576 = vunpack.c.l.b16 %v1502
    %v1577 = vunpack.c.h.b16 %v1502
    %v1578 = vunpack.c.l.b16 %v1503
    %v1579 = vunpack.c.h.b16 %v1503
    %v1580 = vunpack.c.l.b16 %v1504
    %v1581 = vunpack.c.h.b16 %v1504
    %v1582 = vunpack.c.l.b16 %v1505
    %v1583 = vunpack.c.h.b16 %v1505
    %v1584 = vunpack.c.l.b16 %v1506
    %v1585 = vunpack.c.h.b16 %v1506
    %v1586 = vunpack.c.l.b16 %v1507
    %v1587 = vunpack.c.h.b16 %v1507
    %v1588 = vunpack.c.l.b16 %v1508
    %v1589 = vunpack.c.h.b16 %v1508
    %v1590 = vunpack.c.l.b16 %v1509
    %v1591 = vunpack.c.h.b16 %v1509
    %v1592 = vunpack.c.l.b16 %v1510
    %v1593 = vunpack.c.h.b16 %v1510
    %v1594 = vunpack.c.l.b16 %v1511
    %v1595 = vunpack.c.h.b16 %v1511
    %v1596 = vunpack.c.l.b16 %v1512
    %v1597 = vunpack.c.h.b16 %v1512
    %v1598 = vunpack.c.l.b16 %v1513
    %v1599 = vunpack.c.h.b16 %v1513
    %v1600 = vunpack.c.l.b16 %v1514
    %v1601 = vunpack.c.h.b16 %v1514
    %v1602 = vunpack.c.l.b16 %v1515
    %v1603 = vunpack.c.h.b16 %v1515
    %v1604 = vunpack.c.l.b16 %v1516
    %v1605 = vunpack.c.h.b16 %v1516
    %v1606 = vunpack.c.l.b16 %v1517
    %v1607 = vunpack.c.h.b16 %v1517
    %v1608 = vunpack.c.l.b16 %v1518
    %v1609 = vunpack.c.h.b16 %v1518
    %v1610 = vunpack.c.l.b16 %v1519
    %v1611 = vunpack.c.h.b16 %v1519
    %v1612 = vunpack.c.l.b16 %v1520
    %v1613 = vunpack.c.h.b16 %v1520
    %v1614 = vunpack.c.l.b16 %v1521
    %v1615 = vunpack.c.h.b16 %v1521
    %v1616 = vunpack.c.l.b16 %v1522
    %v1617 = vunpack.c.h.b16 %v1522
    %v1618 = vunpack.c.l.b16 %v1523
    %v1619 = vunpack.c.h.b16 %v1523
    %v1620 = vpack.c.b16 %v1560, %v1556
    %v1621 = vpack.c.b16 %v1561, %v1557
    %v1622 = vpack.c.b16 %v1562, %v1558
    %v1623 = vpack.c.b16 %v1563, %v1559
    %v1624 = vpack.c.b16 %v1568, %v1564
    %v1625 = vpack.c.b16 %v1569, %v1565
    %v1626 = vpack.c.b16 %v1570, %v1566
    %v1627 = vpack.c.b16 %v1571, %v1567
    %v1628 = vpack.c.b16 %v1576, %v1572
    %v1629 = vpack.c.b16 %v1577, %v1573
    %v1630 = vpack.c.b16 %v1578, %v1574
    %v1631 = vpack.c.b16 %v1579, %v1575
    %v1632 = vpack.c.b16 %v1584, %v1580
    %v1633 = vpack.c.b16 %v1585, %v1581
    %v1634 = vpack.c.b16 %v1586, %v1582
    %v1635 = vpack.c.b16 %v1587, %v1583
    %v1636 = vpack.c.b16 %v1592, %v1588
    %v1637 = vpack.c.b16 %v1593, %v1589
    %v1638 = vpack.c.b16 %v1594, %v1590
    %v1639 = vpack.c.b16 %v1595, %v1591
    %v1640 = vpack.c.b16 %v1600, %v1596
    %v1641 = vpack.c.b16 %v1601, %v1597
    %v1642 = vpack.c.b16 %v1602, %v1598
    %v1643 = vpack.c.b16 %v1603, %v1599
    %v1644 = vpack.c.b16 %v1608, %v1604
    %v1645 = vpack.c.b16 %v1609, %v1605
    %v1646 = vpack.c.b16 %v1610, %v1606
    %v1647 = vpack.c.b16 %v1611, %v1607
    %v1648 = vpack.c.b16 %v1616, %v1612
    %v1649 = vpack.c.b16 %v1617, %v1613
    %v1650 = vpack.c.b16 %v1618, %v1614
    %v1651 = vpack.c.b16 %v1619, %v1615
    %1684 = vmatpush.bf16.msra.mxu0 %v1648
    %1685 = vmatpush.bf16.msra.mxu0 %v1644
    %1686 = vmatpush.bf16.msra.mxu0 %v1640
    %1687 = vmatpush.bf16.msra.mxu0 %v1636
    %1688 = vmatpush.bf16.msra.mxu0 %v1632
    %1689 = vmatpush.bf16.msra.mxu0 %v1628
    %1690 = vmatpush.bf16.msra.mxu0 %v1624
    %1691 = vmatpush.bf16.msra.mxu0 %v1620
    %1692 = vmatmul.bf16.gmra.mxu0 %v1491
    %v1693 = vpop.f32.mrf.mxu0
    %v1694 = vadd.f32 0.0, %v1693
    %v1695 = vpop.f32.mrf.mxu0
    %1696 = vdwg.mxu0
    %1697 = vmatpush.bf16.msra.mxu0 %v1649
    %1698 = vmatpush.bf16.msra.mxu0 %v1645
    %1699 = vmatpush.bf16.msra.mxu0 %v1641
    %1700 = vmatpush.bf16.msra.mxu0 %v1637
    %1701 = vmatpush.bf16.msra.mxu0 %v1633
    %1702 = vmatpush.bf16.msra.mxu0 %v1629
    %1703 = vmatpush.bf16.msra.mxu0 %v1625
    %1704 = vmatpush.bf16.msra.mxu0 %v1621
    %1705 = vmatmul.bf16.gmra.mxu0 %v1491
    %v1706 = vpop.f32.mrf.mxu0
    %v1707 = vadd.f32 0.0, %v1706
    %v1708 = vpop.f32.mrf.mxu0
    %1709 = vdwg.mxu0
    %1710 = vmatpush.bf16.msra.mxu0 %v1650
    %1711 = vmatpush.bf16.msra.mxu0 %v1646
    %1712 = vmatpush.bf16.msra.mxu0 %v1642
    %1713 = vmatpush.bf16.msra.mxu0 %v1638
    %1714 = vmatpush.bf16.msra.mxu0 %v1634
    %1715 = vmatpush.bf16.msra.mxu0 %v1630
    %1716 = vmatpush.bf16.msra.mxu0 %v1626
    %1717 = vmatpush.bf16.msra.mxu0 %v1622
    %1718 = vmatmul.bf16.gmra.mxu0 %v1491
    %v1719 = vpop.f32.mrf.mxu0
    %v1720 = vadd.f32 0.0, %v1719
    %v1721 = vpop.f32.mrf.mxu0
    %1722 = vdwg.mxu0
    %1723 = vmatpush.bf16.msra.mxu0 %v1651
    %1724 = vmatpush.bf16.msra.mxu0 %v1647
    %1725 = vmatpush.bf16.msra.mxu0 %v1643
    %1726 = vmatpush.bf16.msra.mxu0 %v1639
    %1727 = vmatpush.bf16.msra.mxu0 %v1635
    %1728 = vmatpush.bf16.msra.mxu0 %v1631
    %1729 = vmatpush.bf16.msra.mxu0 %v1627
    %1730 = vmatpush.bf16.msra.mxu0 %v1623
    %1731 = vmatmul.bf16.gmra.mxu0 %v1491
    %v1732 = vpop.f32.mrf.mxu0
    %v1733 = vadd.f32 0.0, %v1732
    %v1734 = vpop.f32.mrf.mxu0
    %1735 = vdwg.mxu0
    %v1736 = vadd.f32 %v1133, %v1694
    %v1737 = vadd.f32 %v1146, %v1707
    %v1738 = vadd.f32 %v1159, %v1720
    %v1739 = vadd.f32 %v1172, %v1733
    %v1740 = vxor.u32 %v1736, 2147483648
    %v1741 = vmul.f32 %v1740, 1.442695
    %v1742 = vpow.pop %v1741
    %v1743 = vadd.f32 %v1742, 1.0
    %v1744 = vrcp.pop %v1743
    %v1745 = vmul.f32 %v1743, %v1744
    %v1746 = vsub.f32 1.0, %v1745
    %v1747 = vmul.f32 %v1744, %v1746
    %v1748 = vadd.f32 %v1744, %v1747
    %vm1749 = vweird.f32 %v1743
    %vm1750 = vweird.f32 %v1744
    %vm1751 = vmor %vm1749, %vm1750
    %v1752 = vsel %vm1751, %v1744, %v1748
    %v1753 = vand.u32 2147483647, %v1743
    %vm1754 = vcmp.eq.f32.partialorder %v1753, 8.507059e+37
    %v1755 = vand.u32 %v1743, 2147483648
    %v1756 = vor.u32 1.1754944e-38, %v1755
    %v1757 = vsel %vm1754, %v1756, %v1752
    %v1758 = vmul.f32 1.0, %v1757
    %v1759 = vxor.u32 %v1737, 2147483648
    %v1760 = vmul.f32 %v1759, 1.442695
    %v1761 = vpow.pop %v1760
    %v1762 = vadd.f32 %v1761, 1.0
    %v1763 = vrcp.pop %v1762
    %v1764 = vmul.f32 %v1762, %v1763
    %v1765 = vsub.f32 1.0, %v1764
    %v1766 = vmul.f32 %v1763, %v1765
    %v1767 = vadd.f32 %v1763, %v1766
    %vm1768 = vweird.f32 %v1762
    %vm1769 = vweird.f32 %v1763
    %vm1770 = vmor %vm1768, %vm1769
    %v1771 = vsel %vm1770, %v1763, %v1767
    %v1772 = vand.u32 2147483647, %v1762
    %vm1773 = vcmp.eq.f32.partialorder %v1772, 8.507059e+37
    %v1774 = vand.u32 %v1762, 2147483648
    %v1775 = vor.u32 1.1754944e-38, %v1774
    %v1776 = vsel %vm1773, %v1775, %v1771
    %v1777 = vmul.f32 1.0, %v1776
    %v1778 = vtanh.pop %v1738
    %v1779 = vxor.u32 %v1739, 2147483648
    %v1780 = vmul.f32 %v1779, 1.442695
    %v1781 = vpow.pop %v1780
    %v1782 = vadd.f32 %v1781, 1.0
    %v1783 = vrcp.pop %v1782
    %v1784 = vmul.f32 %v1782, %v1783
    %v1785 = vsub.f32 1.0, %v1784
    %v1786 = vmul.f32 %v1783, %v1785
    %v1787 = vadd.f32 %v1783, %v1786
    %vm1788 = vweird.f32 %v1782
    %vm1789 = vweird.f32 %v1783
    %vm1790 = vmor %vm1788, %vm1789
    %v1791 = vsel %vm1790, %v1783, %v1787
    %v1792 = vand.u32 2147483647, %v1782
    %vm1793 = vcmp.eq.f32.partialorder %v1792, 8.507059e+37
    %v1794 = vand.u32 %v1782, 2147483648
    %v1795 = vor.u32 1.1754944e-38, %v1794
    %v1796 = vsel %vm1793, %v1795, %v1791
    %v1797 = vmul.f32 1.0, %v1796
    %v1798 = vmul.f32 %v1777, %v919
    %v1799 = vmul.f32 %v1758, %v1778
    %v1800 = vadd.f32 %v1798, %v1799
    %v1801 = vtanh.pop %v1800
    %v1802 = vmul.f32 %v1797, %v1801
    %v1803 = vpack.c.bf16 %v1802, %v1802
    %1804 = vmatpush.bf16.msra.mxu0 %v1087
    %1805 = vmatpush.bf16.msra.mxu0 %v1083
    %1806 = vmatpush.bf16.msra.mxu0 %v1079
    %1807 = vmatpush.bf16.msra.mxu0 %v1075
    %1808 = vmatpush.bf16.msra.mxu0 %v1071
    %1809 = vmatpush.bf16.msra.mxu0 %v1067
    %1810 = vmatpush.bf16.msra.mxu0 %v1063
    %1811 = vmatpush.bf16.msra.mxu0 %v1059
    %1812 = vmatmul.bf16.gmra.mxu0 %v1803
    %v1813 = vpop.f32.mrf.mxu0
    %v1814 = vadd.f32 %v955, %v1813
    %v1815 = vpop.f32.mrf.mxu0
    %1816 = vdwg.mxu0
    %1817 = vmatpush.bf16.msra.mxu0 %v1088
    %1818 = vmatpush.bf16.msra.mxu0 %v1084
    %1819 = vmatpush.bf16.msra.mxu0 %v1080
    %1820 = vmatpush.bf16.msra.mxu0 %v1076
    %1821 = vmatpush.bf16.msra.mxu0 %v1072
    %1822 = vmatpush.bf16.msra.mxu0 %v1068
    %1823 = vmatpush.bf16.msra.mxu0 %v1064
    %1824 = vmatpush.bf16.msra.mxu0 %v1060
    %1825 = vmatmul.bf16.gmra.mxu0 %v1803
    %v1826 = vpop.f32.mrf.mxu0
    %v1827 = vadd.f32 %v956, %v1826
    %v1828 = vpop.f32.mrf.mxu0
    %1829 = vdwg.mxu0
    %1830 = vmatpush.bf16.msra.mxu0 %v1089
    %1831 = vmatpush.bf16.msra.mxu0 %v1085
    %1832 = vmatpush.bf16.msra.mxu0 %v1081
    %1833 = vmatpush.bf16.msra.mxu0 %v1077
    %1834 = vmatpush.bf16.msra.mxu0 %v1073
    %1835 = vmatpush.bf16.msra.mxu0 %v1069
    %1836 = vmatpush.bf16.msra.mxu0 %v1065
    %1837 = vmatpush.bf16.msra.mxu0 %v1061
    %1838 = vmatmul.bf16.gmra.mxu0 %v1803
    %v1839 = vpop.f32.mrf.mxu0
    %v1840 = vadd.f32 %v957, %v1839
    %v1841 = vpop.f32.mrf.mxu0
    %1842 = vdwg.mxu0
    %1843 = vmatpush.bf16.msra.mxu0 %v1090
    %1844 = vmatpush.bf16.msra.mxu0 %v1086
    %1845 = vmatpush.bf16.msra.mxu0 %v1082
    %1846 = vmatpush.bf16.msra.mxu0 %v1078
    %1847 = vmatpush.bf16.msra.mxu0 %v1074
    %1848 = vmatpush.bf16.msra.mxu0 %v1070
    %1849 = vmatpush.bf16.msra.mxu0 %v1066
    %1850 = vmatpush.bf16.msra.mxu0 %v1062
    %1851 = vmatmul.bf16.gmra.mxu0 %v1803
    %v1852 = vpop.f32.mrf.mxu0
    %v1853 = vadd.f32 %v958, %v1852
    %v1854 = vpop.f32.mrf.mxu0
    %1855 = vdwg.mxu0
    %v1856 = vld [vmem:[%s327] sm:$0xff]
    %v1857 = vld [vmem:[%s327 + $0x8] sm:$0xff]
    %v1858 = vld [vmem:[%s327 + $0x10] sm:$0xff]
    %v1859 = vld [vmem:[%s327 + $0x18] sm:$0xff]
    %1860 = vmatpush.bf16.msra.mxu0 %v1336
    %1861 = vmatpush.bf16.msra.mxu0 %v1332
    %1862 = vmatpush.bf16.msra.mxu0 %v1328
    %1863 = vmatpush.bf16.msra.mxu0 %v1324
    %1864 = vmatpush.bf16.msra.mxu0 %v1320
    %1865 = vmatpush.bf16.msra.mxu0 %v1316
    %1866 = vmatpush.bf16.msra.mxu0 %v1312
    %1867 = vmatpush.bf16.msra.mxu0 %v1308
    %1868 = vmatmul.bf16.gmra.mxu0 %v1491
    %v1869 = vpop.f32.mrf.mxu0
    %v1870 = vadd.f32 0.0, %v1869
    %v1871 = vpop.f32.mrf.mxu0
    %1872 = vdwg.mxu0
    %1873 = vmatpush.bf16.msra.mxu0 %v1337
    %1874 = vmatpush.bf16.msra.mxu0 %v1333
    %1875 = vmatpush.bf16.msra.mxu0 %v1329
    %1876 = vmatpush.bf16.msra.mxu0 %v1325
    %1877 = vmatpush.bf16.msra.mxu0 %v1321
    %1878 = vmatpush.bf16.msra.mxu0 %v1317
    %1879 = vmatpush.bf16.msra.mxu0 %v1313
    %1880 = vmatpush.bf16.msra.mxu0 %v1309
    %1881 = vmatmul.bf16.gmra.mxu0 %v1491
    %v1882 = vpop.f32.mrf.mxu0
    %v1883 = vadd.f32 0.0, %v1882
    %v1884 = vpop.f32.mrf.mxu0
    %1885 = vdwg.mxu0
    %1886 = vmatpush.bf16.msra.mxu0 %v1338
    %1887 = vmatpush.bf16.msra.mxu0 %v1334
    %1888 = vmatpush.bf16.msra.mxu0 %v1330
    %1889 = vmatpush.bf16.msra.mxu0 %v1326
    %1890 = vmatpush.bf16.msra.mxu0 %v1322
    %1891 = vmatpush.bf16.msra.mxu0 %v1318
    %1892 = vmatpush.bf16.msra.mxu0 %v1314
    %1893 = vmatpush.bf16.msra.mxu0 %v1310
    %1894 = vmatmul.bf16.gmra.mxu0 %v1491
    %v1895 = vpop.f32.mrf.mxu0
    %v1896 = vadd.f32 0.0, %v1895
    %v1897 = vpop.f32.mrf.mxu0
    %1898 = vdwg.mxu0
    %1899 = vmatpush.bf16.msra.mxu0 %v1339
    %1900 = vmatpush.bf16.msra.mxu0 %v1335
    %1901 = vmatpush.bf16.msra.mxu0 %v1331
    %1902 = vmatpush.bf16.msra.mxu0 %v1327
    %1903 = vmatpush.bf16.msra.mxu0 %v1323
    %1904 = vmatpush.bf16.msra.mxu0 %v1319
    %1905 = vmatpush.bf16.msra.mxu0 %v1315
    %1906 = vmatpush.bf16.msra.mxu0 %v1311
    %1907 = vmatmul.bf16.gmra.mxu0 %v1491
    %v1908 = vpop.f32.mrf.mxu0
    %v1909 = vadd.f32 0.0, %v1908
    %v1910 = vpop.f32.mrf.mxu0
    %1911 = vdwg.mxu0
    %v1912 = vadd.f32 %v1856, %v1870
    %v1913 = vadd.f32 %v1857, %v1883
    %v1914 = vadd.f32 %v1858, %v1896
    %v1915 = vadd.f32 %v1859, %v1909
    %v1916 = vxor.u32 %v1912, 2147483648
    %v1917 = vmul.f32 %v1916, 1.442695
    %v1918 = vpow.pop %v1917
    %v1919 = vadd.f32 %v1918, 1.0
    %v1920 = vrcp.pop %v1919
    %v1921 = vmul.f32 %v1919, %v1920
    %v1922 = vsub.f32 1.0, %v1921
    %v1923 = vmul.f32 %v1920, %v1922
    %v1924 = vadd.f32 %v1920, %v1923
    %vm1925 = vweird.f32 %v1919
    %vm1926 = vweird.f32 %v1920
    %vm1927 = vmor %vm1925, %vm1926
    %v1928 = vsel %vm1927, %v1920, %v1924
    %v1929 = vand.u32 2147483647, %v1919
    %vm1930 = vcmp.eq.f32.partialorder %v1929, 8.507059e+37
    %v1931 = vand.u32 %v1919, 2147483648
    %v1932 = vor.u32 1.1754944e-38, %v1931
    %v1933 = vsel %vm1930, %v1932, %v1928
    %v1934 = vmul.f32 1.0, %v1933
    %v1935 = vxor.u32 %v1913, 2147483648
    %v1936 = vmul.f32 %v1935, 1.442695
    %v1937 = vpow.pop %v1936
    %v1938 = vadd.f32 %v1937, 1.0
    %v1939 = vrcp.pop %v1938
    %v1940 = vmul.f32 %v1938, %v1939
    %v1941 = vsub.f32 1.0, %v1940
    %v1942 = vmul.f32 %v1939, %v1941
    %v1943 = vadd.f32 %v1939, %v1942
    %vm1944 = vweird.f32 %v1938
    %vm1945 = vweird.f32 %v1939
    %vm1946 = vmor %vm1944, %vm1945
    %v1947 = vsel %vm1946, %v1939, %v1943
    %v1948 = vand.u32 2147483647, %v1938
    %vm1949 = vcmp.eq.f32.partialorder %v1948, 8.507059e+37
    %v1950 = vand.u32 %v1938, 2147483648
    %v1951 = vor.u32 1.1754944e-38, %v1950
    %v1952 = vsel %vm1949, %v1951, %v1947
    %v1953 = vmul.f32 1.0, %v1952
    %v1954 = vtanh.pop %v1914
    %v1955 = vxor.u32 %v1915, 2147483648
    %v1956 = vmul.f32 %v1955, 1.442695
    %v1957 = vpow.pop %v1956
    %v1958 = vadd.f32 %v1957, 1.0
    %v1959 = vrcp.pop %v1958
    %v1960 = vmul.f32 %v1958, %v1959
    %v1961 = vsub.f32 1.0, %v1960
    %v1962 = vmul.f32 %v1959, %v1961
    %v1963 = vadd.f32 %v1959, %v1962
    %vm1964 = vweird.f32 %v1958
    %vm1965 = vweird.f32 %v1959
    %vm1966 = vmor %vm1964, %vm1965
    %v1967 = vsel %vm1966, %v1959, %v1963
    %v1968 = vand.u32 2147483647, %v1958
    %vm1969 = vcmp.eq.f32.partialorder %v1968, 8.507059e+37
    %v1970 = vand.u32 %v1958, 2147483648
    %v1971 = vor.u32 1.1754944e-38, %v1970
    %v1972 = vsel %vm1969, %v1971, %v1967
    %v1973 = vmul.f32 1.0, %v1972
    %v1974 = vmul.f32 %v1953, %v1488
    %v1975 = vmul.f32 %v1934, %v1954
    %v1976 = vadd.f32 %v1974, %v1975
    %v1977 = vtanh.pop %v1976
    %v1978 = vmul.f32 %v1973, %v1977
    %v1979 = vpack.c.bf16 %v1978, %v1978
    %1980 = vmatpush.bf16.msra.mxu0 %v1648
    %1981 = vmatpush.bf16.msra.mxu0 %v1644
    %1982 = vmatpush.bf16.msra.mxu0 %v1640
    %1983 = vmatpush.bf16.msra.mxu0 %v1636
    %1984 = vmatpush.bf16.msra.mxu0 %v1632
    %1985 = vmatpush.bf16.msra.mxu0 %v1628
    %1986 = vmatpush.bf16.msra.mxu0 %v1624
    %1987 = vmatpush.bf16.msra.mxu0 %v1620
    %1988 = vmatmul.bf16.gmra.mxu0 %v1979
    %v1989 = vpop.f32.mrf.mxu0
    %v1990 = vadd.f32 0.0, %v1989
    %v1991 = vpop.f32.mrf.mxu0
    %1992 = vdwg.mxu0
    %1993 = vmatpush.bf16.msra.mxu0 %v1649
    %1994 = vmatpush.bf16.msra.mxu0 %v1645
    %1995 = vmatpush.bf16.msra.mxu0 %v1641
    %1996 = vmatpush.bf16.msra.mxu0 %v1637
    %1997 = vmatpush.bf16.msra.mxu0 %v1633
    %1998 = vmatpush.bf16.msra.mxu0 %v1629
    %1999 = vmatpush.bf16.msra.mxu0 %v1625
    %2000 = vmatpush.bf16.msra.mxu0 %v1621
    %2001 = vmatmul.bf16.gmra.mxu0 %v1979
    %v2002 = vpop.f32.mrf.mxu0
    %v2003 = vadd.f32 0.0, %v2002
    %v2004 = vpop.f32.mrf.mxu0
    %2005 = vdwg.mxu0
    %2006 = vmatpush.bf16.msra.mxu0 %v1650
    %2007 = vmatpush.bf16.msra.mxu0 %v1646
    %2008 = vmatpush.bf16.msra.mxu0 %v1642
    %2009 = vmatpush.bf16.msra.mxu0 %v1638
    %2010 = vmatpush.bf16.msra.mxu0 %v1634
    %2011 = vmatpush.bf16.msra.mxu0 %v1630
    %2012 = vmatpush.bf16.msra.mxu0 %v1626
    %2013 = vmatpush.bf16.msra.mxu0 %v1622
    %2014 = vmatmul.bf16.gmra.mxu0 %v1979
    %v2015 = vpop.f32.mrf.mxu0
    %v2016 = vadd.f32 0.0, %v2015
    %v2017 = vpop.f32.mrf.mxu0
    %2018 = vdwg.mxu0
    %2019 = vmatpush.bf16.msra.mxu0 %v1651
    %2020 = vmatpush.bf16.msra.mxu0 %v1647
    %2021 = vmatpush.bf16.msra.mxu0 %v1643
    %2022 = vmatpush.bf16.msra.mxu0 %v1639
    %2023 = vmatpush.bf16.msra.mxu0 %v1635
    %2024 = vmatpush.bf16.msra.mxu0 %v1631
    %2025 = vmatpush.bf16.msra.mxu0 %v1627
    %2026 = vmatpush.bf16.msra.mxu0 %v1623
    %2027 = vmatmul.bf16.gmra.mxu0 %v1979
    %v2028 = vpop.f32.mrf.mxu0
    %v2029 = vadd.f32 0.0, %v2028
    %v2030 = vpop.f32.mrf.mxu0
    %2031 = vdwg.mxu0
    %v2032 = vadd.f32 %v1814, %v1990
    %v2033 = vadd.f32 %v1827, %v2003
    %v2034 = vadd.f32 %v1840, %v2016
    %v2035 = vadd.f32 %v1853, %v2029
    %v2036 = vxor.u32 %v2032, 2147483648
    %v2037 = vmul.f32 %v2036, 1.442695
    %v2038 = vpow.pop %v2037
    %v2039 = vadd.f32 %v2038, 1.0
    %v2040 = vrcp.pop %v2039
    %v2041 = vmul.f32 %v2039, %v2040
    %v2042 = vsub.f32 1.0, %v2041
    %v2043 = vmul.f32 %v2040, %v2042
    %v2044 = vadd.f32 %v2040, %v2043
    %vm2045 = vweird.f32 %v2039
    %vm2046 = vweird.f32 %v2040
    %vm2047 = vmor %vm2045, %vm2046
    %v2048 = vsel %vm2047, %v2040, %v2044
    %v2049 = vand.u32 2147483647, %v2039
    %vm2050 = vcmp.eq.f32.partialorder %v2049, 8.507059e+37
    %v2051 = vand.u32 %v2039, 2147483648
    %v2052 = vor.u32 1.1754944e-38, %v2051
    %v2053 = vsel %vm2050, %v2052, %v2048
    %v2054 = vmul.f32 1.0, %v2053
    %v2055 = vxor.u32 %v2033, 2147483648
    %v2056 = vmul.f32 %v2055, 1.442695
    %v2057 = vpow.pop %v2056
    %v2058 = vadd.f32 %v2057, 1.0
    %v2059 = vrcp.pop %v2058
    %v2060 = vmul.f32 %v2058, %v2059
    %v2061 = vsub.f32 1.0, %v2060
    %v2062 = vmul.f32 %v2059, %v2061
    %v2063 = vadd.f32 %v2059, %v2062
    %vm2064 = vweird.f32 %v2058
    %vm2065 = vweird.f32 %v2059
    %vm2066 = vmor %vm2064, %vm2065
    %v2067 = vsel %vm2066, %v2059, %v2063
    %v2068 = vand.u32 2147483647, %v2058
    %vm2069 = vcmp.eq.f32.partialorder %v2068, 8.507059e+37
    %v2070 = vand.u32 %v2058, 2147483648
    %v2071 = vor.u32 1.1754944e-38, %v2070
    %v2072 = vsel %vm2069, %v2071, %v2067
    %v2073 = vmul.f32 1.0, %v2072
    %v2074 = vtanh.pop %v2034
    %v2075 = vxor.u32 %v2035, 2147483648
    %v2076 = vmul.f32 %v2075, 1.442695
    %v2077 = vpow.pop %v2076
    %v2078 = vadd.f32 %v2077, 1.0
    %v2079 = vrcp.pop %v2078
    %v2080 = vmul.f32 %v2078, %v2079
    %v2081 = vsub.f32 1.0, %v2080
    %v2082 = vmul.f32 %v2079, %v2081
    %v2083 = vadd.f32 %v2079, %v2082
    %vm2084 = vweird.f32 %v2078
    %vm2085 = vweird.f32 %v2079
    %vm2086 = vmor %vm2084, %vm2085
    %v2087 = vsel %vm2086, %v2079, %v2083
    %v2088 = vand.u32 2147483647, %v2078
    %vm2089 = vcmp.eq.f32.partialorder %v2088, 8.507059e+37
    %v2090 = vand.u32 %v2078, 2147483648
    %v2091 = vor.u32 1.1754944e-38, %v2090
    %v2092 = vsel %vm2089, %v2091, %v2087
    %v2093 = vmul.f32 1.0, %v2092
    %v2094 = vmul.f32 %v2073, %v1800
    %v2095 = vmul.f32 %v2054, %v2074
    %v2096 = vadd.f32 %v2094, %v2095
    %v2097 = vtanh.pop %v2096
    %v2098 = vmul.f32 %v2093, %v2097
    %v2099 = vpack.c.bf16 %v2098, %v2098
    %2100 = vmatpush.bf16.msra.mxu0 %v1087
    %2101 = vmatpush.bf16.msra.mxu0 %v1083
    %2102 = vmatpush.bf16.msra.mxu0 %v1079
    %2103 = vmatpush.bf16.msra.mxu0 %v1075
    %2104 = vmatpush.bf16.msra.mxu0 %v1071
    %2105 = vmatpush.bf16.msra.mxu0 %v1067
    %2106 = vmatpush.bf16.msra.mxu0 %v1063
    %2107 = vmatpush.bf16.msra.mxu0 %v1059
    %2108 = vmatmul.bf16.gmra.mxu0 %v2099
    %v2109 = vpop.f32.mrf.mxu0
    %v2110 = vadd.f32 %v955, %v2109
    %v2111 = vpop.f32.mrf.mxu0
    %2112 = vdwg.mxu0
    %2113 = vmatpush.bf16.msra.mxu0 %v1088
    %2114 = vmatpush.bf16.msra.mxu0 %v1084
    %2115 = vmatpush.bf16.msra.mxu0 %v1080
    %2116 = vmatpush.bf16.msra.mxu0 %v1076
    %2117 = vmatpush.bf16.msra.mxu0 %v1072
    %2118 = vmatpush.bf16.msra.mxu0 %v1068
    %2119 = vmatpush.bf16.msra.mxu0 %v1064
    %2120 = vmatpush.bf16.msra.mxu0 %v1060
    %2121 = vmatmul.bf16.gmra.mxu0 %v2099
    %v2122 = vpop.f32.mrf.mxu0
    %v2123 = vadd.f32 %v956, %v2122
    %v2124 = vpop.f32.mrf.mxu0
    %2125 = vdwg.mxu0
    %2126 = vmatpush.bf16.msra.mxu0 %v1089
    %2127 = vmatpush.bf16.msra.mxu0 %v1085
    %2128 = vmatpush.bf16.msra.mxu0 %v1081
    %2129 = vmatpush.bf16.msra.mxu0 %v1077
    %2130 = vmatpush.bf16.msra.mxu0 %v1073
    %2131 = vmatpush.bf16.msra.mxu0 %v1069
    %2132 = vmatpush.bf16.msra.mxu0 %v1065
    %2133 = vmatpush.bf16.msra.mxu0 %v1061
    %2134 = vmatmul.bf16.gmra.mxu0 %v2099
    %v2135 = vpop.f32.mrf.mxu0
    %v2136 = vadd.f32 %v957, %v2135
    %v2137 = vpop.f32.mrf.mxu0
    %2138 = vdwg.mxu0
    %2139 = vmatpush.bf16.msra.mxu0 %v1090
    %2140 = vmatpush.bf16.msra.mxu0 %v1086
    %2141 = vmatpush.bf16.msra.mxu0 %v1082
    %2142 = vmatpush.bf16.msra.mxu0 %v1078
    %2143 = vmatpush.bf16.msra.mxu0 %v1074
    %2144 = vmatpush.bf16.msra.mxu0 %v1070
    %2145 = vmatpush.bf16.msra.mxu0 %v1066
    %2146 = vmatpush.bf16.msra.mxu0 %v1062
    %2147 = vmatmul.bf16.gmra.mxu0 %v2099
    %v2148 = vpop.f32.mrf.mxu0
    %v2149 = vadd.f32 %v958, %v2148
    %v2150 = vpop.f32.mrf.mxu0
    %2151 = vdwg.mxu0
    %v2152 = vld [vmem:[%s424] sm:$0xff]
    %v2153 = vld [vmem:[%s424 + $0x8] sm:$0xff]
    %v2154 = vld [vmem:[%s424 + $0x10] sm:$0xff]
    %v2155 = vld [vmem:[%s424 + $0x18] sm:$0xff]
    %2156 = vmatpush.bf16.msra.mxu0 %v1336
    %2157 = vmatpush.bf16.msra.mxu0 %v1332
    %2158 = vmatpush.bf16.msra.mxu0 %v1328
    %2159 = vmatpush.bf16.msra.mxu0 %v1324
    %2160 = vmatpush.bf16.msra.mxu0 %v1320
    %2161 = vmatpush.bf16.msra.mxu0 %v1316
    %2162 = vmatpush.bf16.msra.mxu0 %v1312
    %2163 = vmatpush.bf16.msra.mxu0 %v1308
    %2164 = vmatmul.bf16.gmra.mxu0 %v1979
    %v2165 = vpop.f32.mrf.mxu0
    %v2166 = vadd.f32 0.0, %v2165
    %v2167 = vpop.f32.mrf.mxu0
    %2168 = vdwg.mxu0
    %2169 = vmatpush.bf16.msra.mxu0 %v1337
    %2170 = vmatpush.bf16.msra.mxu0 %v1333
    %2171 = vmatpush.bf16.msra.mxu0 %v1329
    %2172 = vmatpush.bf16.msra.mxu0 %v1325
    %2173 = vmatpush.bf16.msra.mxu0 %v1321
    %2174 = vmatpush.bf16.msra.mxu0 %v1317
    %2175 = vmatpush.bf16.msra.mxu0 %v1313
    %2176 = vmatpush.bf16.msra.mxu0 %v1309
    %2177 = vmatmul.bf16.gmra.mxu0 %v1979
    %v2178 = vpop.f32.mrf.mxu0
    %v2179 = vadd.f32 0.0, %v2178
    %v2180 = vpop.f32.mrf.mxu0
    %2181 = vdwg.mxu0
    %2182 = vmatpush.bf16.msra.mxu0 %v1338
    %2183 = vmatpush.bf16.msra.mxu0 %v1334
    %2184 = vmatpush.bf16.msra.mxu0 %v1330
    %2185 = vmatpush.bf16.msra.mxu0 %v1326
    %2186 = vmatpush.bf16.msra.mxu0 %v1322
    %2187 = vmatpush.bf16.msra.mxu0 %v1318
    %2188 = vmatpush.bf16.msra.mxu0 %v1314
    %2189 = vmatpush.bf16.msra.mxu0 %v1310
    %2190 = vmatmul.bf16.gmra.mxu0 %v1979
    %v2191 = vpop.f32.mrf.mxu0
    %v2192 = vadd.f32 0.0, %v2191
    %v2193 = vpop.f32.mrf.mxu0
    %2194 = vdwg.mxu0
    %2195 = vmatpush.bf16.msra.mxu0 %v1339
    %2196 = vmatpush.bf16.msra.mxu0 %v1335
    %2197 = vmatpush.bf16.msra.mxu0 %v1331
    %2198 = vmatpush.bf16.msra.mxu0 %v1327
    %2199 = vmatpush.bf16.msra.mxu0 %v1323
    %2200 = vmatpush.bf16.msra.mxu0 %v1319
    %2201 = vmatpush.bf16.msra.mxu0 %v1315
    %2202 = vmatpush.bf16.msra.mxu0 %v1311
    %2203 = vmatmul.bf16.gmra.mxu0 %v1979
    %v2204 = vpop.f32.mrf.mxu0
    %v2205 = vadd.f32 0.0, %v2204
    %v2206 = vpop.f32.mrf.mxu0
    %2207 = vdwg.mxu0
    %v2208 = vadd.f32 %v2152, %v2166
    %v2209 = vadd.f32 %v2153, %v2179
    %v2210 = vadd.f32 %v2154, %v2192
    %v2211 = vadd.f32 %v2155, %v2205
    %v2212 = vxor.u32 %v2208, 2147483648
    %v2213 = vmul.f32 %v2212, 1.442695
    %v2214 = vpow.pop %v2213
    %v2215 = vadd.f32 %v2214, 1.0
    %v2216 = vrcp.pop %v2215
    %v2217 = vmul.f32 %v2215, %v2216
    %v2218 = vsub.f32 1.0, %v2217
    %v2219 = vmul.f32 %v2216, %v2218
    %v2220 = vadd.f32 %v2216, %v2219
    %vm2221 = vweird.f32 %v2215
    %vm2222 = vweird.f32 %v2216
    %vm2223 = vmor %vm2221, %vm2222
    %v2224 = vsel %vm2223, %v2216, %v2220
    %v2225 = vand.u32 2147483647, %v2215
    %vm2226 = vcmp.eq.f32.partialorder %v2225, 8.507059e+37
    %v2227 = vand.u32 %v2215, 2147483648
    %v2228 = vor.u32 1.1754944e-38, %v2227
    %v2229 = vsel %vm2226, %v2228, %v2224
    %v2230 = vmul.f32 1.0, %v2229
    %v2231 = vxor.u32 %v2209, 2147483648
    %v2232 = vmul.f32 %v2231, 1.442695
    %v2233 = vpow.pop %v2232
    %v2234 = vadd.f32 %v2233, 1.0
    %v2235 = vrcp.pop %v2234
    %v2236 = vmul.f32 %v2234, %v2235
    %v2237 = vsub.f32 1.0, %v2236
    %v2238 = vmul.f32 %v2235, %v2237
    %v2239 = vadd.f32 %v2235, %v2238
    %vm2240 = vweird.f32 %v2234
    %vm2241 = vweird.f32 %v2235
    %vm2242 = vmor %vm2240, %vm2241
    %v2243 = vsel %vm2242, %v2235, %v2239
    %v2244 = vand.u32 2147483647, %v2234
    %vm2245 = vcmp.eq.f32.partialorder %v2244, 8.507059e+37
    %v2246 = vand.u32 %v2234, 2147483648
    %v2247 = vor.u32 1.1754944e-38, %v2246
    %v2248 = vsel %vm2245, %v2247, %v2243
    %v2249 = vmul.f32 1.0, %v2248
    %v2250 = vtanh.pop %v2210
    %v2251 = vxor.u32 %v2211, 2147483648
    %v2252 = vmul.f32 %v2251, 1.442695
    %v2253 = vpow.pop %v2252
    %v2254 = vadd.f32 %v2253, 1.0
    %v2255 = vrcp.pop %v2254
    %v2256 = vmul.f32 %v2254, %v2255
    %v2257 = vsub.f32 1.0, %v2256
    %v2258 = vmul.f32 %v2255, %v2257
    %v2259 = vadd.f32 %v2255, %v2258
    %vm2260 = vweird.f32 %v2254
    %vm2261 = vweird.f32 %v2255
    %vm2262 = vmor %vm2260, %vm2261
    %v2263 = vsel %vm2262, %v2255, %v2259
    %v2264 = vand.u32 2147483647, %v2254
    %vm2265 = vcmp.eq.f32.partialorder %v2264, 8.507059e+37
    %v2266 = vand.u32 %v2254, 2147483648
    %v2267 = vor.u32 1.1754944e-38, %v2266
    %v2268 = vsel %vm2265, %v2267, %v2263
    %v2269 = vmul.f32 1.0, %v2268
    %v2270 = vmul.f32 %v2249, %v1976
    %v2271 = vmul.f32 %v2230, %v2250
    %v2272 = vadd.f32 %v2270, %v2271
    %v2273 = vtanh.pop %v2272
    %v2274 = vmul.f32 %v2269, %v2273
    %v2275 = vpack.c.bf16 %v2274, %v2274
    %2276 = vmatpush.bf16.msra.mxu0 %v1648
    %2277 = vmatpush.bf16.msra.mxu0 %v1644
    %2278 = vmatpush.bf16.msra.mxu0 %v1640
    %2279 = vmatpush.bf16.msra.mxu0 %v1636
    %2280 = vmatpush.bf16.msra.mxu0 %v1632
    %2281 = vmatpush.bf16.msra.mxu0 %v1628
    %2282 = vmatpush.bf16.msra.mxu0 %v1624
    %2283 = vmatpush.bf16.msra.mxu0 %v1620
    %2284 = vmatmul.bf16.gmra.mxu0 %v2275
    %v2285 = vpop.f32.mrf.mxu0
    %v2286 = vadd.f32 0.0, %v2285
    %v2287 = vpop.f32.mrf.mxu0
    %2288 = vdwg.mxu0
    %2289 = vmatpush.bf16.msra.mxu0 %v1649
    %2290 = vmatpush.bf16.msra.mxu0 %v1645
    %2291 = vmatpush.bf16.msra.mxu0 %v1641
    %2292 = vmatpush.bf16.msra.mxu0 %v1637
    %2293 = vmatpush.bf16.msra.mxu0 %v1633
    %2294 = vmatpush.bf16.msra.mxu0 %v1629
    %2295 = vmatpush.bf16.msra.mxu0 %v1625
    %2296 = vmatpush.bf16.msra.mxu0 %v1621
    %2297 = vmatmul.bf16.gmra.mxu0 %v2275
    %v2298 = vpop.f32.mrf.mxu0
    %v2299 = vadd.f32 0.0, %v2298
    %v2300 = vpop.f32.mrf.mxu0
    %2301 = vdwg.mxu0
    %2302 = vmatpush.bf16.msra.mxu0 %v1650
    %2303 = vmatpush.bf16.msra.mxu0 %v1646
    %2304 = vmatpush.bf16.msra.mxu0 %v1642
    %2305 = vmatpush.bf16.msra.mxu0 %v1638
    %2306 = vmatpush.bf16.msra.mxu0 %v1634
    %2307 = vmatpush.bf16.msra.mxu0 %v1630
    %2308 = vmatpush.bf16.msra.mxu0 %v1626
    %2309 = vmatpush.bf16.msra.mxu0 %v1622
    %2310 = vmatmul.bf16.gmra.mxu0 %v2275
    %v2311 = vpop.f32.mrf.mxu0
    %v2312 = vadd.f32 0.0, %v2311
    %v2313 = vpop.f32.mrf.mxu0
    %2314 = vdwg.mxu0
    %2315 = vmatpush.bf16.msra.mxu0 %v1651
    %2316 = vmatpush.bf16.msra.mxu0 %v1647
    %2317 = vmatpush.bf16.msra.mxu0 %v1643
    %2318 = vmatpush.bf16.msra.mxu0 %v1639
    %2319 = vmatpush.bf16.msra.mxu0 %v1635
    %2320 = vmatpush.bf16.msra.mxu0 %v1631
    %2321 = vmatpush.bf16.msra.mxu0 %v1627
    %2322 = vmatpush.bf16.msra.mxu0 %v1623
    %2323 = vmatmul.bf16.gmra.mxu0 %v2275
    %v2324 = vpop.f32.mrf.mxu0
    %v2325 = vadd.f32 0.0, %v2324
    %v2326 = vpop.f32.mrf.mxu0
    %2327 = vdwg.mxu0
    %v2328 = vadd.f32 %v2110, %v2286
    %v2329 = vadd.f32 %v2123, %v2299
    %v2330 = vadd.f32 %v2136, %v2312
    %v2331 = vadd.f32 %v2149, %v2325
    %v2332 = vxor.u32 %v2328, 2147483648
    %v2333 = vmul.f32 %v2332, 1.442695
    %v2334 = vpow.pop %v2333
    %v2335 = vadd.f32 %v2334, 1.0
    %v2336 = vrcp.pop %v2335
    %v2337 = vmul.f32 %v2335, %v2336
    %v2338 = vsub.f32 1.0, %v2337
    %v2339 = vmul.f32 %v2336, %v2338
    %v2340 = vadd.f32 %v2336, %v2339
    %vm2341 = vweird.f32 %v2335
    %vm2342 = vweird.f32 %v2336
    %vm2343 = vmor %vm2341, %vm2342
    %v2344 = vsel %vm2343, %v2336, %v2340
    %v2345 = vand.u32 2147483647, %v2335
    %vm2346 = vcmp.eq.f32.partialorder %v2345, 8.507059e+37
    %v2347 = vand.u32 %v2335, 2147483648
    %v2348 = vor.u32 1.1754944e-38, %v2347
    %v2349 = vsel %vm2346, %v2348, %v2344
    %v2350 = vmul.f32 1.0, %v2349
    %v2351 = vxor.u32 %v2329, 2147483648
    %v2352 = vmul.f32 %v2351, 1.442695
    %v2353 = vpow.pop %v2352
    %v2354 = vadd.f32 %v2353, 1.0
    %v2355 = vrcp.pop %v2354
    %v2356 = vmul.f32 %v2354, %v2355
    %v2357 = vsub.f32 1.0, %v2356
    %v2358 = vmul.f32 %v2355, %v2357
    %v2359 = vadd.f32 %v2355, %v2358
    %vm2360 = vweird.f32 %v2354
    %vm2361 = vweird.f32 %v2355
    %vm2362 = vmor %vm2360, %vm2361
    %v2363 = vsel %vm2362, %v2355, %v2359
    %v2364 = vand.u32 2147483647, %v2354
    %vm2365 = vcmp.eq.f32.partialorder %v2364, 8.507059e+37
    %v2366 = vand.u32 %v2354, 2147483648
    %v2367 = vor.u32 1.1754944e-38, %v2366
    %v2368 = vsel %vm2365, %v2367, %v2363
    %v2369 = vmul.f32 1.0, %v2368
    %v2370 = vtanh.pop %v2330
    %v2371 = vxor.u32 %v2331, 2147483648
    %v2372 = vmul.f32 %v2371, 1.442695
    %v2373 = vpow.pop %v2372
    %v2374 = vadd.f32 %v2373, 1.0
    %v2375 = vrcp.pop %v2374
    %v2376 = vmul.f32 %v2374, %v2375
    %v2377 = vsub.f32 1.0, %v2376
    %v2378 = vmul.f32 %v2375, %v2377
    %v2379 = vadd.f32 %v2375, %v2378
    %vm2380 = vweird.f32 %v2374
    %vm2381 = vweird.f32 %v2375
    %vm2382 = vmor %vm2380, %vm2381
    %v2383 = vsel %vm2382, %v2375, %v2379
    %v2384 = vand.u32 2147483647, %v2374
    %vm2385 = vcmp.eq.f32.partialorder %v2384, 8.507059e+37
    %v2386 = vand.u32 %v2374, 2147483648
    %v2387 = vor.u32 1.1754944e-38, %v2386
    %v2388 = vsel %vm2385, %v2387, %v2383
    %v2389 = vmul.f32 1.0, %v2388
    %v2390 = vmul.f32 %v2369, %v2096
    %v2391 = vmul.f32 %v2350, %v2370
    %v2392 = vadd.f32 %v2390, %v2391
    %v2393 = vtanh.pop %v2392
    %v2394 = vmul.f32 %v2389, %v2393
    %v2395 = vpack.c.bf16 %v2394, %v2394
    %2396 = vmatpush.bf16.msra.mxu0 %v1087
    %2397 = vmatpush.bf16.msra.mxu0 %v1083
    %2398 = vmatpush.bf16.msra.mxu0 %v1079
    %2399 = vmatpush.bf16.msra.mxu0 %v1075
    %2400 = vmatpush.bf16.msra.mxu0 %v1071
    %2401 = vmatpush.bf16.msra.mxu0 %v1067
    %2402 = vmatpush.bf16.msra.mxu0 %v1063
    %2403 = vmatpush.bf16.msra.mxu0 %v1059
    %2404 = vmatmul.bf16.gmra.mxu0 %v2395
    %v2405 = vpop.f32.mrf.mxu0
    %v2406 = vadd.f32 %v955, %v2405
    %v2407 = vpop.f32.mrf.mxu0
    %2408 = vdwg.mxu0
    %2409 = vmatpush.bf16.msra.mxu0 %v1088
    %2410 = vmatpush.bf16.msra.mxu0 %v1084
    %2411 = vmatpush.bf16.msra.mxu0 %v1080
    %2412 = vmatpush.bf16.msra.mxu0 %v1076
    %2413 = vmatpush.bf16.msra.mxu0 %v1072
    %2414 = vmatpush.bf16.msra.mxu0 %v1068
    %2415 = vmatpush.bf16.msra.mxu0 %v1064
    %2416 = vmatpush.bf16.msra.mxu0 %v1060
    %2417 = vmatmul.bf16.gmra.mxu0 %v2395
    %v2418 = vpop.f32.mrf.mxu0
    %v2419 = vadd.f32 %v956, %v2418
    %v2420 = vpop.f32.mrf.mxu0
    %2421 = vdwg.mxu0
    %2422 = vmatpush.bf16.msra.mxu0 %v1089
    %2423 = vmatpush.bf16.msra.mxu0 %v1085
    %2424 = vmatpush.bf16.msra.mxu0 %v1081
    %2425 = vmatpush.bf16.msra.mxu0 %v1077
    %2426 = vmatpush.bf16.msra.mxu0 %v1073
    %2427 = vmatpush.bf16.msra.mxu0 %v1069
    %2428 = vmatpush.bf16.msra.mxu0 %v1065
    %2429 = vmatpush.bf16.msra.mxu0 %v1061
    %2430 = vmatmul.bf16.gmra.mxu0 %v2395
    %v2431 = vpop.f32.mrf.mxu0
    %v2432 = vadd.f32 %v957, %v2431
    %v2433 = vpop.f32.mrf.mxu0
    %2434 = vdwg.mxu0
    %2435 = vmatpush.bf16.msra.mxu0 %v1090
    %2436 = vmatpush.bf16.msra.mxu0 %v1086
    %2437 = vmatpush.bf16.msra.mxu0 %v1082
    %2438 = vmatpush.bf16.msra.mxu0 %v1078
    %2439 = vmatpush.bf16.msra.mxu0 %v1074
    %2440 = vmatpush.bf16.msra.mxu0 %v1070
    %2441 = vmatpush.bf16.msra.mxu0 %v1066
    %2442 = vmatpush.bf16.msra.mxu0 %v1062
    %2443 = vmatmul.bf16.gmra.mxu0 %v2395
    %v2444 = vpop.f32.mrf.mxu0
    %v2445 = vadd.f32 %v958, %v2444
    %v2446 = vpop.f32.mrf.mxu0
    %2447 = vdwg.mxu0
    %v2448 = vld [vmem:[%s521] sm:$0xff]
    %v2449 = vld [vmem:[%s521 + $0x8] sm:$0xff]
    %v2450 = vld [vmem:[%s521 + $0x10] sm:$0xff]
    %v2451 = vld [vmem:[%s521 + $0x18] sm:$0xff]
    %2452 = vmatpush.bf16.msra.mxu0 %v1336
    %2453 = vmatpush.bf16.msra.mxu0 %v1332
    %2454 = vmatpush.bf16.msra.mxu0 %v1328
    %2455 = vmatpush.bf16.msra.mxu0 %v1324
    %2456 = vmatpush.bf16.msra.mxu0 %v1320
    %2457 = vmatpush.bf16.msra.mxu0 %v1316
    %2458 = vmatpush.bf16.msra.mxu0 %v1312
    %2459 = vmatpush.bf16.msra.mxu0 %v1308
    %2460 = vmatmul.bf16.gmra.mxu0 %v2275
    %v2461 = vpop.f32.mrf.mxu0
    %v2462 = vadd.f32 0.0, %v2461
    %v2463 = vpop.f32.mrf.mxu0
    %2464 = vdwg.mxu0
    %2465 = vmatpush.bf16.msra.mxu0 %v1337
    %2466 = vmatpush.bf16.msra.mxu0 %v1333
    %2467 = vmatpush.bf16.msra.mxu0 %v1329
    %2468 = vmatpush.bf16.msra.mxu0 %v1325
    %2469 = vmatpush.bf16.msra.mxu0 %v1321
    %2470 = vmatpush.bf16.msra.mxu0 %v1317
    %2471 = vmatpush.bf16.msra.mxu0 %v1313
    %2472 = vmatpush.bf16.msra.mxu0 %v1309
    %2473 = vmatmul.bf16.gmra.mxu0 %v2275
    %v2474 = vpop.f32.mrf.mxu0
    %v2475 = vadd.f32 0.0, %v2474
    %v2476 = vpop.f32.mrf.mxu0
    %2477 = vdwg.mxu0
    %2478 = vmatpush.bf16.msra.mxu0 %v1338
    %2479 = vmatpush.bf16.msra.mxu0 %v1334
    %2480 = vmatpush.bf16.msra.mxu0 %v1330
    %2481 = vmatpush.bf16.msra.mxu0 %v1326
    %2482 = vmatpush.bf16.msra.mxu0 %v1322
    %2483 = vmatpush.bf16.msra.mxu0 %v1318
    %2484 = vmatpush.bf16.msra.mxu0 %v1314
    %2485 = vmatpush.bf16.msra.mxu0 %v1310
    %2486 = vmatmul.bf16.gmra.mxu0 %v2275
    %v2487 = vpop.f32.mrf.mxu0
    %v2488 = vadd.f32 0.0, %v2487
    %v2489 = vpop.f32.mrf.mxu0
    %2490 = vdwg.mxu0
    %2491 = vmatpush.bf16.msra.mxu0 %v1339
    %2492 = vmatpush.bf16.msra.mxu0 %v1335
    %2493 = vmatpush.bf16.msra.mxu0 %v1331
    %2494 = vmatpush.bf16.msra.mxu0 %v1327
    %2495 = vmatpush.bf16.msra.mxu0 %v1323
    %2496 = vmatpush.bf16.msra.mxu0 %v1319
    %2497 = vmatpush.bf16.msra.mxu0 %v1315
    %2498 = vmatpush.bf16.msra.mxu0 %v1311
    %2499 = vmatmul.bf16.gmra.mxu0 %v2275
    %v2500 = vpop.f32.mrf.mxu0
    %v2501 = vadd.f32 0.0, %v2500
    %v2502 = vpop.f32.mrf.mxu0
    %2503 = vdwg.mxu0
    %v2504 = vadd.f32 %v2448, %v2462
    %v2505 = vadd.f32 %v2449, %v2475
    %v2506 = vadd.f32 %v2450, %v2488
    %v2507 = vadd.f32 %v2451, %v2501
    %v2508 = vxor.u32 %v2504, 2147483648
    %v2509 = vmul.f32 %v2508, 1.442695
    %v2510 = vpow.pop %v2509
    %v2511 = vadd.f32 %v2510, 1.0
    %v2512 = vrcp.pop %v2511
    %v2513 = vmul.f32 %v2511, %v2512
    %v2514 = vsub.f32 1.0, %v2513
    %v2515 = vmul.f32 %v2512, %v2514
    %v2516 = vadd.f32 %v2512, %v2515
    %vm2517 = vweird.f32 %v2511
    %vm2518 = vweird.f32 %v2512
    %vm2519 = vmor %vm2517, %vm2518
    %v2520 = vsel %vm2519, %v2512, %v2516
    %v2521 = vand.u32 2147483647, %v2511
    %vm2522 = vcmp.eq.f32.partialorder %v2521, 8.507059e+37
    %v2523 = vand.u32 %v2511, 2147483648
    %v2524 = vor.u32 1.1754944e-38, %v2523
    %v2525 = vsel %vm2522, %v2524, %v2520
    %v2526 = vmul.f32 1.0, %v2525
    %v2527 = vxor.u32 %v2505, 2147483648
    %v2528 = vmul.f32 %v2527, 1.442695
    %v2529 = vpow.pop %v2528
    %v2530 = vadd.f32 %v2529, 1.0
    %v2531 = vrcp.pop %v2530
    %v2532 = vmul.f32 %v2530, %v2531
    %v2533 = vsub.f32 1.0, %v2532
    %v2534 = vmul.f32 %v2531, %v2533
    %v2535 = vadd.f32 %v2531, %v2534
    %vm2536 = vweird.f32 %v2530
    %vm2537 = vweird.f32 %v2531
    %vm2538 = vmor %vm2536, %vm2537
    %v2539 = vsel %vm2538, %v2531, %v2535
    %v2540 = vand.u32 2147483647, %v2530
    %vm2541 = vcmp.eq.f32.partialorder %v2540, 8.507059e+37
    %v2542 = vand.u32 %v2530, 2147483648
    %v2543 = vor.u32 1.1754944e-38, %v2542
    %v2544 = vsel %vm2541, %v2543, %v2539
    %v2545 = vmul.f32 1.0, %v2544
    %v2546 = vtanh.pop %v2506
    %v2547 = vxor.u32 %v2507, 2147483648
    %v2548 = vmul.f32 %v2547, 1.442695
    %v2549 = vpow.pop %v2548
    %v2550 = vadd.f32 %v2549, 1.0
    %v2551 = vrcp.pop %v2550
    %v2552 = vmul.f32 %v2550, %v2551
    %v2553 = vsub.f32 1.0, %v2552
    %v2554 = vmul.f32 %v2551, %v2553
    %v2555 = vadd.f32 %v2551, %v2554
    %vm2556 = vweird.f32 %v2550
    %vm2557 = vweird.f32 %v2551
    %vm2558 = vmor %vm2556, %vm2557
    %v2559 = vsel %vm2558, %v2551, %v2555
    %v2560 = vand.u32 2147483647, %v2550
    %vm2561 = vcmp.eq.f32.partialorder %v2560, 8.507059e+37
    %v2562 = vand.u32 %v2550, 2147483648
    %v2563 = vor.u32 1.1754944e-38, %v2562
    %v2564 = vsel %vm2561, %v2563, %v2559
    %v2565 = vmul.f32 1.0, %v2564
    %v2566 = vmul.f32 %v2545, %v2272
    %v2567 = vmul.f32 %v2526, %v2546
    %v2568 = vadd.f32 %v2566, %v2567
    %v2569 = vtanh.pop %v2568
    %v2570 = vmul.f32 %v2565, %v2569
    %v2571 = vpack.c.bf16 %v2570, %v2570
    %2572 = vmatpush.bf16.msra.mxu0 %v1648
    %2573 = vmatpush.bf16.msra.mxu0 %v1644
    %2574 = vmatpush.bf16.msra.mxu0 %v1640
    %2575 = vmatpush.bf16.msra.mxu0 %v1636
    %2576 = vmatpush.bf16.msra.mxu0 %v1632
    %2577 = vmatpush.bf16.msra.mxu0 %v1628
    %2578 = vmatpush.bf16.msra.mxu0 %v1624
    %2579 = vmatpush.bf16.msra.mxu0 %v1620
    %2580 = vmatmul.bf16.gmra.mxu0 %v2571
    %v2581 = vpop.f32.mrf.mxu0
    %v2582 = vadd.f32 0.0, %v2581
    %v2583 = vpop.f32.mrf.mxu0
    %2584 = vdwg.mxu0
    %2585 = vmatpush.bf16.msra.mxu0 %v1649
    %2586 = vmatpush.bf16.msra.mxu0 %v1645
    %2587 = vmatpush.bf16.msra.mxu0 %v1641
    %2588 = vmatpush.bf16.msra.mxu0 %v1637
    %2589 = vmatpush.bf16.msra.mxu0 %v1633
    %2590 = vmatpush.bf16.msra.mxu0 %v1629
    %2591 = vmatpush.bf16.msra.mxu0 %v1625
    %2592 = vmatpush.bf16.msra.mxu0 %v1621
    %2593 = vmatmul.bf16.gmra.mxu0 %v2571
    %v2594 = vpop.f32.mrf.mxu0
    %v2595 = vadd.f32 0.0, %v2594
    %v2596 = vpop.f32.mrf.mxu0
    %2597 = vdwg.mxu0
    %2598 = vmatpush.bf16.msra.mxu0 %v1650
    %2599 = vmatpush.bf16.msra.mxu0 %v1646
    %2600 = vmatpush.bf16.msra.mxu0 %v1642
    %2601 = vmatpush.bf16.msra.mxu0 %v1638
    %2602 = vmatpush.bf16.msra.mxu0 %v1634
    %2603 = vmatpush.bf16.msra.mxu0 %v1630
    %2604 = vmatpush.bf16.msra.mxu0 %v1626
    %2605 = vmatpush.bf16.msra.mxu0 %v1622
    %2606 = vmatmul.bf16.gmra.mxu0 %v2571
    %v2607 = vpop.f32.mrf.mxu0
    %v2608 = vadd.f32 0.0, %v2607
    %v2609 = vpop.f32.mrf.mxu0
    %2610 = vdwg.mxu0
    %2611 = vmatpush.bf16.msra.mxu0 %v1651
    %2612 = vmatpush.bf16.msra.mxu0 %v1647
    %2613 = vmatpush.bf16.msra.mxu0 %v1643
    %2614 = vmatpush.bf16.msra.mxu0 %v1639
    %2615 = vmatpush.bf16.msra.mxu0 %v1635
    %2616 = vmatpush.bf16.msra.mxu0 %v1631
    %2617 = vmatpush.bf16.msra.mxu0 %v1627
    %2618 = vmatpush.bf16.msra.mxu0 %v1623
    %2619 = vmatmul.bf16.gmra.mxu0 %v2571
    %v2620 = vpop.f32.mrf.mxu0
    %v2621 = vadd.f32 0.0, %v2620
    %v2622 = vpop.f32.mrf.mxu0
    %2623 = vdwg.mxu0
    %v2624 = vadd.f32 %v2406, %v2582
    %v2625 = vadd.f32 %v2419, %v2595
    %v2626 = vadd.f32 %v2432, %v2608
    %v2627 = vadd.f32 %v2445, %v2621
    %v2628 = vxor.u32 %v2624, 2147483648
    %v2629 = vmul.f32 %v2628, 1.442695
    %v2630 = vpow.pop %v2629
    %v2631 = vadd.f32 %v2630, 1.0
    %v2632 = vrcp.pop %v2631
    %v2633 = vmul.f32 %v2631, %v2632
    %v2634 = vsub.f32 1.0, %v2633
    %v2635 = vmul.f32 %v2632, %v2634
    %v2636 = vadd.f32 %v2632, %v2635
    %vm2637 = vweird.f32 %v2631
    %vm2638 = vweird.f32 %v2632
    %vm2639 = vmor %vm2637, %vm2638
    %v2640 = vsel %vm2639, %v2632, %v2636
    %v2641 = vand.u32 2147483647, %v2631
    %vm2642 = vcmp.eq.f32.partialorder %v2641, 8.507059e+37
    %v2643 = vand.u32 %v2631, 2147483648
    %v2644 = vor.u32 1.1754944e-38, %v2643
    %v2645 = vsel %vm2642, %v2644, %v2640
    %v2646 = vmul.f32 1.0, %v2645
    %v2647 = vxor.u32 %v2625, 2147483648
    %v2648 = vmul.f32 %v2647, 1.442695
    %v2649 = vpow.pop %v2648
    %v2650 = vadd.f32 %v2649, 1.0
    %v2651 = vrcp.pop %v2650
    %v2652 = vmul.f32 %v2650, %v2651
    %v2653 = vsub.f32 1.0, %v2652
    %v2654 = vmul.f32 %v2651, %v2653
    %v2655 = vadd.f32 %v2651, %v2654
    %vm2656 = vweird.f32 %v2650
    %vm2657 = vweird.f32 %v2651
    %vm2658 = vmor %vm2656, %vm2657
    %v2659 = vsel %vm2658, %v2651, %v2655
    %v2660 = vand.u32 2147483647, %v2650
    %vm2661 = vcmp.eq.f32.partialorder %v2660, 8.507059e+37
    %v2662 = vand.u32 %v2650, 2147483648
    %v2663 = vor.u32 1.1754944e-38, %v2662
    %v2664 = vsel %vm2661, %v2663, %v2659
    %v2665 = vmul.f32 1.0, %v2664
    %v2666 = vtanh.pop %v2626
    %v2667 = vxor.u32 %v2627, 2147483648
    %v2668 = vmul.f32 %v2667, 1.442695
    %v2669 = vpow.pop %v2668
    %v2670 = vadd.f32 %v2669, 1.0
    %v2671 = vrcp.pop %v2670
    %v2672 = vmul.f32 %v2670, %v2671
    %v2673 = vsub.f32 1.0, %v2672
    %v2674 = vmul.f32 %v2671, %v2673
    %v2675 = vadd.f32 %v2671, %v2674
    %vm2676 = vweird.f32 %v2670
    %vm2677 = vweird.f32 %v2671
    %vm2678 = vmor %vm2676, %vm2677
    %v2679 = vsel %vm2678, %v2671, %v2675
    %v2680 = vand.u32 2147483647, %v2670
    %vm2681 = vcmp.eq.f32.partialorder %v2680, 8.507059e+37
    %v2682 = vand.u32 %v2670, 2147483648
    %v2683 = vor.u32 1.1754944e-38, %v2682
    %v2684 = vsel %vm2681, %v2683, %v2679
    %v2685 = vmul.f32 1.0, %v2684
    %v2686 = vmul.f32 %v2665, %v2392
    %v2687 = vmul.f32 %v2646, %v2666
    %v2688 = vadd.f32 %v2686, %v2687
    %v2689 = vtanh.pop %v2688
    %v2690 = vmul.f32 %v2685, %v2689
    %v2691 = vpack.c.bf16 %v2690, %v2690
    %2692 = vmatpush.bf16.msra.mxu0 %v1087
    %2693 = vmatpush.bf16.msra.mxu0 %v1083
    %2694 = vmatpush.bf16.msra.mxu0 %v1079
    %2695 = vmatpush.bf16.msra.mxu0 %v1075
    %2696 = vmatpush.bf16.msra.mxu0 %v1071
    %2697 = vmatpush.bf16.msra.mxu0 %v1067
    %2698 = vmatpush.bf16.msra.mxu0 %v1063
    %2699 = vmatpush.bf16.msra.mxu0 %v1059
    %2700 = vmatmul.bf16.gmra.mxu0 %v2691
    %v2701 = vpop.f32.mrf.mxu0
    %v2702 = vadd.f32 %v955, %v2701
    %v2703 = vpop.f32.mrf.mxu0
    %2704 = vdwg.mxu0
    %2705 = vmatpush.bf16.msra.mxu0 %v1088
    %2706 = vmatpush.bf16.msra.mxu0 %v1084
    %2707 = vmatpush.bf16.msra.mxu0 %v1080
    %2708 = vmatpush.bf16.msra.mxu0 %v1076
    %2709 = vmatpush.bf16.msra.mxu0 %v1072
    %2710 = vmatpush.bf16.msra.mxu0 %v1068
    %2711 = vmatpush.bf16.msra.mxu0 %v1064
    %2712 = vmatpush.bf16.msra.mxu0 %v1060
    %2713 = vmatmul.bf16.gmra.mxu0 %v2691
    %v2714 = vpop.f32.mrf.mxu0
    %v2715 = vadd.f32 %v956, %v2714
    %v2716 = vpop.f32.mrf.mxu0
    %2717 = vdwg.mxu0
    %2718 = vmatpush.bf16.msra.mxu0 %v1089
    %2719 = vmatpush.bf16.msra.mxu0 %v1085
    %2720 = vmatpush.bf16.msra.mxu0 %v1081
    %2721 = vmatpush.bf16.msra.mxu0 %v1077
    %2722 = vmatpush.bf16.msra.mxu0 %v1073
    %2723 = vmatpush.bf16.msra.mxu0 %v1069
    %2724 = vmatpush.bf16.msra.mxu0 %v1065
    %2725 = vmatpush.bf16.msra.mxu0 %v1061
    %2726 = vmatmul.bf16.gmra.mxu0 %v2691
    %v2727 = vpop.f32.mrf.mxu0
    %v2728 = vadd.f32 %v957, %v2727
    %v2729 = vpop.f32.mrf.mxu0
    %2730 = vdwg.mxu0
    %2731 = vmatpush.bf16.msra.mxu0 %v1090
    %2732 = vmatpush.bf16.msra.mxu0 %v1086
    %2733 = vmatpush.bf16.msra.mxu0 %v1082
    %2734 = vmatpush.bf16.msra.mxu0 %v1078
    %2735 = vmatpush.bf16.msra.mxu0 %v1074
    %2736 = vmatpush.bf16.msra.mxu0 %v1070
    %2737 = vmatpush.bf16.msra.mxu0 %v1066
    %2738 = vmatpush.bf16.msra.mxu0 %v1062
    %2739 = vmatmul.bf16.gmra.mxu0 %v2691
    %v2740 = vpop.f32.mrf.mxu0
    %v2741 = vadd.f32 %v958, %v2740
    %v2742 = vpop.f32.mrf.mxu0
    %2743 = vdwg.mxu0
    %v2744 = vld [vmem:[%s618] sm:$0xff]
    %v2745 = vld [vmem:[%s618 + $0x8] sm:$0xff]
    %v2746 = vld [vmem:[%s618 + $0x10] sm:$0xff]
    %v2747 = vld [vmem:[%s618 + $0x18] sm:$0xff]
    %2748 = vmatpush.bf16.msra.mxu0 %v1336
    %2749 = vmatpush.bf16.msra.mxu0 %v1332
    %2750 = vmatpush.bf16.msra.mxu0 %v1328
    %2751 = vmatpush.bf16.msra.mxu0 %v1324
    %2752 = vmatpush.bf16.msra.mxu0 %v1320
    %2753 = vmatpush.bf16.msra.mxu0 %v1316
    %2754 = vmatpush.bf16.msra.mxu0 %v1312
    %2755 = vmatpush.bf16.msra.mxu0 %v1308
    %2756 = vmatmul.bf16.gmra.mxu0 %v2571
    %v2757 = vpop.f32.mrf.mxu0
    %v2758 = vadd.f32 0.0, %v2757
    %v2759 = vpop.f32.mrf.mxu0
    %2760 = vdwg.mxu0
    %2761 = vmatpush.bf16.msra.mxu0 %v1337
    %2762 = vmatpush.bf16.msra.mxu0 %v1333
    %2763 = vmatpush.bf16.msra.mxu0 %v1329
    %2764 = vmatpush.bf16.msra.mxu0 %v1325
    %2765 = vmatpush.bf16.msra.mxu0 %v1321
    %2766 = vmatpush.bf16.msra.mxu0 %v1317
    %2767 = vmatpush.bf16.msra.mxu0 %v1313
    %2768 = vmatpush.bf16.msra.mxu0 %v1309
    %2769 = vmatmul.bf16.gmra.mxu0 %v2571
    %v2770 = vpop.f32.mrf.mxu0
    %v2771 = vadd.f32 0.0, %v2770
    %v2772 = vpop.f32.mrf.mxu0
    %2773 = vdwg.mxu0
    %2774 = vmatpush.bf16.msra.mxu0 %v1338
    %2775 = vmatpush.bf16.msra.mxu0 %v1334
    %2776 = vmatpush.bf16.msra.mxu0 %v1330
    %2777 = vmatpush.bf16.msra.mxu0 %v1326
    %2778 = vmatpush.bf16.msra.mxu0 %v1322
    %2779 = vmatpush.bf16.msra.mxu0 %v1318
    %2780 = vmatpush.bf16.msra.mxu0 %v1314
    %2781 = vmatpush.bf16.msra.mxu0 %v1310
    %2782 = vmatmul.bf16.gmra.mxu0 %v2571
    %v2783 = vpop.f32.mrf.mxu0
    %v2784 = vadd.f32 0.0, %v2783
    %v2785 = vpop.f32.mrf.mxu0
    %2786 = vdwg.mxu0
    %2787 = vmatpush.bf16.msra.mxu0 %v1339
    %2788 = vmatpush.bf16.msra.mxu0 %v1335
    %2789 = vmatpush.bf16.msra.mxu0 %v1331
    %2790 = vmatpush.bf16.msra.mxu0 %v1327
    %2791 = vmatpush.bf16.msra.mxu0 %v1323
    %2792 = vmatpush.bf16.msra.mxu0 %v1319
    %2793 = vmatpush.bf16.msra.mxu0 %v1315
    %2794 = vmatpush.bf16.msra.mxu0 %v1311
    %2795 = vmatmul.bf16.gmra.mxu0 %v2571
    %v2796 = vpop.f32.mrf.mxu0
    %v2797 = vadd.f32 0.0, %v2796
    %v2798 = vpop.f32.mrf.mxu0
    %2799 = vdwg.mxu0
    %v2800 = vadd.f32 %v2744, %v2758
    %v2801 = vadd.f32 %v2745, %v2771
    %v2802 = vadd.f32 %v2746, %v2784
    %v2803 = vadd.f32 %v2747, %v2797
    %v2804 = vxor.u32 %v2800, 2147483648
    %v2805 = vmul.f32 %v2804, 1.442695
    %v2806 = vpow.pop %v2805
    %v2807 = vadd.f32 %v2806, 1.0
    %v2808 = vrcp.pop %v2807
    %v2809 = vmul.f32 %v2807, %v2808
    %v2810 = vsub.f32 1.0, %v2809
    %v2811 = vmul.f32 %v2808, %v2810
    %v2812 = vadd.f32 %v2808, %v2811
    %vm2813 = vweird.f32 %v2807
    %vm2814 = vweird.f32 %v2808
    %vm2815 = vmor %vm2813, %vm2814
    %v2816 = vsel %vm2815, %v2808, %v2812
    %v2817 = vand.u32 2147483647, %v2807
    %vm2818 = vcmp.eq.f32.partialorder %v2817, 8.507059e+37
    %v2819 = vand.u32 %v2807, 2147483648
    %v2820 = vor.u32 1.1754944e-38, %v2819
    %v2821 = vsel %vm2818, %v2820, %v2816
    %v2822 = vmul.f32 1.0, %v2821
    %v2823 = vxor.u32 %v2801, 2147483648
    %v2824 = vmul.f32 %v2823, 1.442695
    %v2825 = vpow.pop %v2824
    %v2826 = vadd.f32 %v2825, 1.0
    %v2827 = vrcp.pop %v2826
    %v2828 = vmul.f32 %v2826, %v2827
    %v2829 = vsub.f32 1.0, %v2828
    %v2830 = vmul.f32 %v2827, %v2829
    %v2831 = vadd.f32 %v2827, %v2830
    %vm2832 = vweird.f32 %v2826
    %vm2833 = vweird.f32 %v2827
    %vm2834 = vmor %vm2832, %vm2833
    %v2835 = vsel %vm2834, %v2827, %v2831
    %v2836 = vand.u32 2147483647, %v2826
    %vm2837 = vcmp.eq.f32.partialorder %v2836, 8.507059e+37
    %v2838 = vand.u32 %v2826, 2147483648
    %v2839 = vor.u32 1.1754944e-38, %v2838
    %v2840 = vsel %vm2837, %v2839, %v2835
    %v2841 = vmul.f32 1.0, %v2840
    %v2842 = vtanh.pop %v2802
    %v2843 = vxor.u32 %v2803, 2147483648
    %v2844 = vmul.f32 %v2843, 1.442695
    %v2845 = vpow.pop %v2844
    %v2846 = vadd.f32 %v2845, 1.0
    %v2847 = vrcp.pop %v2846
    %v2848 = vmul.f32 %v2846, %v2847
    %v2849 = vsub.f32 1.0, %v2848
    %v2850 = vmul.f32 %v2847, %v2849
    %v2851 = vadd.f32 %v2847, %v2850
    %vm2852 = vweird.f32 %v2846
    %vm2853 = vweird.f32 %v2847
    %vm2854 = vmor %vm2852, %vm2853
    %v2855 = vsel %vm2854, %v2847, %v2851
    %v2856 = vand.u32 2147483647, %v2846
    %vm2857 = vcmp.eq.f32.partialorder %v2856, 8.507059e+37
    %v2858 = vand.u32 %v2846, 2147483648
    %v2859 = vor.u32 1.1754944e-38, %v2858
    %v2860 = vsel %vm2857, %v2859, %v2855
    %v2861 = vmul.f32 1.0, %v2860
    %v2862 = vmul.f32 %v2841, %v2568
    %v2863 = vmul.f32 %v2822, %v2842
    %v2864 = vadd.f32 %v2862, %v2863
    %v2865 = vtanh.pop %v2864
    %v2866 = vmul.f32 %v2861, %v2865
    %v2867 = vpack.c.bf16 %v2866, %v2866
    %2868 = vmatpush.bf16.msra.mxu0 %v1648
    %2869 = vmatpush.bf16.msra.mxu0 %v1644
    %2870 = vmatpush.bf16.msra.mxu0 %v1640
    %2871 = vmatpush.bf16.msra.mxu0 %v1636
    %2872 = vmatpush.bf16.msra.mxu0 %v1632
    %2873 = vmatpush.bf16.msra.mxu0 %v1628
    %2874 = vmatpush.bf16.msra.mxu0 %v1624
    %2875 = vmatpush.bf16.msra.mxu0 %v1620
    %2876 = vmatmul.bf16.gmra.mxu0 %v2867
    %v2877 = vpop.f32.mrf.mxu0
    %v2878 = vadd.f32 0.0, %v2877
    %v2879 = vpop.f32.mrf.mxu0
    %2880 = vdwg.mxu0
    %2881 = vmatpush.bf16.msra.mxu0 %v1649
    %2882 = vmatpush.bf16.msra.mxu0 %v1645
    %2883 = vmatpush.bf16.msra.mxu0 %v1641
    %2884 = vmatpush.bf16.msra.mxu0 %v1637
    %2885 = vmatpush.bf16.msra.mxu0 %v1633
    %2886 = vmatpush.bf16.msra.mxu0 %v1629
    %2887 = vmatpush.bf16.msra.mxu0 %v1625
    %2888 = vmatpush.bf16.msra.mxu0 %v1621
    %2889 = vmatmul.bf16.gmra.mxu0 %v2867
    %v2890 = vpop.f32.mrf.mxu0
    %v2891 = vadd.f32 0.0, %v2890
    %v2892 = vpop.f32.mrf.mxu0
    %2893 = vdwg.mxu0
    %2894 = vmatpush.bf16.msra.mxu0 %v1650
    %2895 = vmatpush.bf16.msra.mxu0 %v1646
    %2896 = vmatpush.bf16.msra.mxu0 %v1642
    %2897 = vmatpush.bf16.msra.mxu0 %v1638
    %2898 = vmatpush.bf16.msra.mxu0 %v1634
    %2899 = vmatpush.bf16.msra.mxu0 %v1630
    %2900 = vmatpush.bf16.msra.mxu0 %v1626
    %2901 = vmatpush.bf16.msra.mxu0 %v1622
    %2902 = vmatmul.bf16.gmra.mxu0 %v2867
    %v2903 = vpop.f32.mrf.mxu0
    %v2904 = vadd.f32 0.0, %v2903
    %v2905 = vpop.f32.mrf.mxu0
    %2906 = vdwg.mxu0
    %2907 = vmatpush.bf16.msra.mxu0 %v1651
    %2908 = vmatpush.bf16.msra.mxu0 %v1647
    %2909 = vmatpush.bf16.msra.mxu0 %v1643
    %2910 = vmatpush.bf16.msra.mxu0 %v1639
    %2911 = vmatpush.bf16.msra.mxu0 %v1635
    %2912 = vmatpush.bf16.msra.mxu0 %v1631
    %2913 = vmatpush.bf16.msra.mxu0 %v1627
    %2914 = vmatpush.bf16.msra.mxu0 %v1623
    %2915 = vmatmul.bf16.gmra.mxu0 %v2867
    %v2916 = vpop.f32.mrf.mxu0
    %v2917 = vadd.f32 0.0, %v2916
    %v2918 = vpop.f32.mrf.mxu0
    %2919 = vdwg.mxu0
    %v2920 = vadd.f32 %v2702, %v2878
    %v2921 = vadd.f32 %v2715, %v2891
    %v2922 = vadd.f32 %v2728, %v2904
    %v2923 = vadd.f32 %v2741, %v2917
    %v2924 = vxor.u32 %v2920, 2147483648
    %v2925 = vmul.f32 %v2924, 1.442695
    %v2926 = vpow.pop %v2925
    %v2927 = vadd.f32 %v2926, 1.0
    %v2928 = vrcp.pop %v2927
    %v2929 = vmul.f32 %v2927, %v2928
    %v2930 = vsub.f32 1.0, %v2929
    %v2931 = vmul.f32 %v2928, %v2930
    %v2932 = vadd.f32 %v2928, %v2931
    %vm2933 = vweird.f32 %v2927
    %vm2934 = vweird.f32 %v2928
    %vm2935 = vmor %vm2933, %vm2934
    %v2936 = vsel %vm2935, %v2928, %v2932
    %v2937 = vand.u32 2147483647, %v2927
    %vm2938 = vcmp.eq.f32.partialorder %v2937, 8.507059e+37
    %v2939 = vand.u32 %v2927, 2147483648
    %v2940 = vor.u32 1.1754944e-38, %v2939
    %v2941 = vsel %vm2938, %v2940, %v2936
    %v2942 = vmul.f32 1.0, %v2941
    %v2943 = vxor.u32 %v2921, 2147483648
    %v2944 = vmul.f32 %v2943, 1.442695
    %v2945 = vpow.pop %v2944
    %v2946 = vadd.f32 %v2945, 1.0
    %v2947 = vrcp.pop %v2946
    %v2948 = vmul.f32 %v2946, %v2947
    %v2949 = vsub.f32 1.0, %v2948
    %v2950 = vmul.f32 %v2947, %v2949
    %v2951 = vadd.f32 %v2947, %v2950
    %vm2952 = vweird.f32 %v2946
    %vm2953 = vweird.f32 %v2947
    %vm2954 = vmor %vm2952, %vm2953
    %v2955 = vsel %vm2954, %v2947, %v2951
    %v2956 = vand.u32 2147483647, %v2946
    %vm2957 = vcmp.eq.f32.partialorder %v2956, 8.507059e+37
    %v2958 = vand.u32 %v2946, 2147483648
    %v2959 = vor.u32 1.1754944e-38, %v2958
    %v2960 = vsel %vm2957, %v2959, %v2955
    %v2961 = vmul.f32 1.0, %v2960
    %v2962 = vtanh.pop %v2922
    %v2963 = vxor.u32 %v2923, 2147483648
    %v2964 = vmul.f32 %v2963, 1.442695
    %v2965 = vpow.pop %v2964
    %v2966 = vadd.f32 %v2965, 1.0
    %v2967 = vrcp.pop %v2966
    %v2968 = vmul.f32 %v2966, %v2967
    %v2969 = vsub.f32 1.0, %v2968
    %v2970 = vmul.f32 %v2967, %v2969
    %v2971 = vadd.f32 %v2967, %v2970
    %vm2972 = vweird.f32 %v2966
    %vm2973 = vweird.f32 %v2967
    %vm2974 = vmor %vm2972, %vm2973
    %v2975 = vsel %vm2974, %v2967, %v2971
    %v2976 = vand.u32 2147483647, %v2966
    %vm2977 = vcmp.eq.f32.partialorder %v2976, 8.507059e+37
    %v2978 = vand.u32 %v2966, 2147483648
    %v2979 = vor.u32 1.1754944e-38, %v2978
    %v2980 = vsel %vm2977, %v2979, %v2975
    %v2981 = vmul.f32 1.0, %v2980
    %v2982 = vmul.f32 %v2961, %v2688
    %v2983 = vmul.f32 %v2942, %v2962
    %v2984 = vadd.f32 %v2982, %v2983
    %v2985 = vtanh.pop %v2984
    %v2986 = vmul.f32 %v2981, %v2985
    %v2987 = vpack.c.bf16 %v2986, %v2986
    %2988 = vmatpush.bf16.msra.mxu0 %v1087
    %2989 = vmatpush.bf16.msra.mxu0 %v1083
    %2990 = vmatpush.bf16.msra.mxu0 %v1079
    %2991 = vmatpush.bf16.msra.mxu0 %v1075
    %2992 = vmatpush.bf16.msra.mxu0 %v1071
    %2993 = vmatpush.bf16.msra.mxu0 %v1067
    %2994 = vmatpush.bf16.msra.mxu0 %v1063
    %2995 = vmatpush.bf16.msra.mxu0 %v1059
    %2996 = vmatmul.bf16.gmra.mxu0 %v2987
    %v2997 = vpop.f32.mrf.mxu0
    %v2998 = vadd.f32 %v955, %v2997
    %v2999 = vpop.f32.mrf.mxu0
    %3000 = vdwg.mxu0
    %3001 = vmatpush.bf16.msra.mxu0 %v1088
    %3002 = vmatpush.bf16.msra.mxu0 %v1084
    %3003 = vmatpush.bf16.msra.mxu0 %v1080
    %3004 = vmatpush.bf16.msra.mxu0 %v1076
    %3005 = vmatpush.bf16.msra.mxu0 %v1072
    %3006 = vmatpush.bf16.msra.mxu0 %v1068
    %3007 = vmatpush.bf16.msra.mxu0 %v1064
    %3008 = vmatpush.bf16.msra.mxu0 %v1060
    %3009 = vmatmul.bf16.gmra.mxu0 %v2987
    %v3010 = vpop.f32.mrf.mxu0
    %v3011 = vadd.f32 %v956, %v3010
    %v3012 = vpop.f32.mrf.mxu0
    %3013 = vdwg.mxu0
    %3014 = vmatpush.bf16.msra.mxu0 %v1089
    %3015 = vmatpush.bf16.msra.mxu0 %v1085
    %3016 = vmatpush.bf16.msra.mxu0 %v1081
    %3017 = vmatpush.bf16.msra.mxu0 %v1077
    %3018 = vmatpush.bf16.msra.mxu0 %v1073
    %3019 = vmatpush.bf16.msra.mxu0 %v1069
    %3020 = vmatpush.bf16.msra.mxu0 %v1065
    %3021 = vmatpush.bf16.msra.mxu0 %v1061
    %3022 = vmatmul.bf16.gmra.mxu0 %v2987
    %v3023 = vpop.f32.mrf.mxu0
    %v3024 = vadd.f32 %v957, %v3023
    %v3025 = vpop.f32.mrf.mxu0
    %3026 = vdwg.mxu0
    %3027 = vmatpush.bf16.msra.mxu0 %v1090
    %3028 = vmatpush.bf16.msra.mxu0 %v1086
    %3029 = vmatpush.bf16.msra.mxu0 %v1082
    %3030 = vmatpush.bf16.msra.mxu0 %v1078
    %3031 = vmatpush.bf16.msra.mxu0 %v1074
    %3032 = vmatpush.bf16.msra.mxu0 %v1070
    %3033 = vmatpush.bf16.msra.mxu0 %v1066
    %3034 = vmatpush.bf16.msra.mxu0 %v1062
    %3035 = vmatmul.bf16.gmra.mxu0 %v2987
    %v3036 = vpop.f32.mrf.mxu0
    %v3037 = vadd.f32 %v958, %v3036
    %v3038 = vpop.f32.mrf.mxu0
    %3039 = vdwg.mxu0
    %v3040 = vld [vmem:[%s715] sm:$0xff]
    %v3041 = vld [vmem:[%s715 + $0x8] sm:$0xff]
    %v3042 = vld [vmem:[%s715 + $0x10] sm:$0xff]
    %v3043 = vld [vmem:[%s715 + $0x18] sm:$0xff]
    %3044 = vmatpush.bf16.msra.mxu0 %v1336
    %3045 = vmatpush.bf16.msra.mxu0 %v1332
    %3046 = vmatpush.bf16.msra.mxu0 %v1328
    %3047 = vmatpush.bf16.msra.mxu0 %v1324
    %3048 = vmatpush.bf16.msra.mxu0 %v1320
    %3049 = vmatpush.bf16.msra.mxu0 %v1316
    %3050 = vmatpush.bf16.msra.mxu0 %v1312
    %3051 = vmatpush.bf16.msra.mxu0 %v1308
    %3052 = vmatmul.bf16.gmra.mxu0 %v2867
    %v3053 = vpop.f32.mrf.mxu0
    %v3054 = vadd.f32 0.0, %v3053
    %v3055 = vpop.f32.mrf.mxu0
    %3056 = vdwg.mxu0
    %3057 = vmatpush.bf16.msra.mxu0 %v1337
    %3058 = vmatpush.bf16.msra.mxu0 %v1333
    %3059 = vmatpush.bf16.msra.mxu0 %v1329
    %3060 = vmatpush.bf16.msra.mxu0 %v1325
    %3061 = vmatpush.bf16.msra.mxu0 %v1321
    %3062 = vmatpush.bf16.msra.mxu0 %v1317
    %3063 = vmatpush.bf16.msra.mxu0 %v1313
    %3064 = vmatpush.bf16.msra.mxu0 %v1309
    %3065 = vmatmul.bf16.gmra.mxu0 %v2867
    %v3066 = vpop.f32.mrf.mxu0
    %v3067 = vadd.f32 0.0, %v3066
    %v3068 = vpop.f32.mrf.mxu0
    %3069 = vdwg.mxu0
    %3070 = vmatpush.bf16.msra.mxu0 %v1338
    %3071 = vmatpush.bf16.msra.mxu0 %v1334
    %3072 = vmatpush.bf16.msra.mxu0 %v1330
    %3073 = vmatpush.bf16.msra.mxu0 %v1326
    %3074 = vmatpush.bf16.msra.mxu0 %v1322
    %3075 = vmatpush.bf16.msra.mxu0 %v1318
    %3076 = vmatpush.bf16.msra.mxu0 %v1314
    %3077 = vmatpush.bf16.msra.mxu0 %v1310
    %3078 = vmatmul.bf16.gmra.mxu0 %v2867
    %v3079 = vpop.f32.mrf.mxu0
    %v3080 = vadd.f32 0.0, %v3079
    %v3081 = vpop.f32.mrf.mxu0
    %3082 = vdwg.mxu0
    %3083 = vmatpush.bf16.msra.mxu0 %v1339
    %3084 = vmatpush.bf16.msra.mxu0 %v1335
    %3085 = vmatpush.bf16.msra.mxu0 %v1331
    %3086 = vmatpush.bf16.msra.mxu0 %v1327
    %3087 = vmatpush.bf16.msra.mxu0 %v1323
    %3088 = vmatpush.bf16.msra.mxu0 %v1319
    %3089 = vmatpush.bf16.msra.mxu0 %v1315
    %3090 = vmatpush.bf16.msra.mxu0 %v1311
    %3091 = vmatmul.bf16.gmra.mxu0 %v2867
    %v3092 = vpop.f32.mrf.mxu0
    %v3093 = vadd.f32 0.0, %v3092
    %v3094 = vpop.f32.mrf.mxu0
    %3095 = vdwg.mxu0
    %v3096 = vadd.f32 %v3040, %v3054
    %v3097 = vadd.f32 %v3041, %v3067
    %v3098 = vadd.f32 %v3042, %v3080
    %v3099 = vadd.f32 %v3043, %v3093
    %v3100 = vxor.u32 %v3096, 2147483648
    %v3101 = vmul.f32 %v3100, 1.442695
    %v3102 = vpow.pop %v3101
    %v3103 = vadd.f32 %v3102, 1.0
    %v3104 = vrcp.pop %v3103
    %v3105 = vmul.f32 %v3103, %v3104
    %v3106 = vsub.f32 1.0, %v3105
    %v3107 = vmul.f32 %v3104, %v3106
    %v3108 = vadd.f32 %v3104, %v3107
    %vm3109 = vweird.f32 %v3103
    %vm3110 = vweird.f32 %v3104
    %vm3111 = vmor %vm3109, %vm3110
    %v3112 = vsel %vm3111, %v3104, %v3108
    %v3113 = vand.u32 2147483647, %v3103
    %vm3114 = vcmp.eq.f32.partialorder %v3113, 8.507059e+37
    %v3115 = vand.u32 %v3103, 2147483648
    %v3116 = vor.u32 1.1754944e-38, %v3115
    %v3117 = vsel %vm3114, %v3116, %v3112
    %v3118 = vmul.f32 1.0, %v3117
    %v3119 = vxor.u32 %v3097, 2147483648
    %v3120 = vmul.f32 %v3119, 1.442695
    %v3121 = vpow.pop %v3120
    %v3122 = vadd.f32 %v3121, 1.0
    %v3123 = vrcp.pop %v3122
    %v3124 = vmul.f32 %v3122, %v3123
    %v3125 = vsub.f32 1.0, %v3124
    %v3126 = vmul.f32 %v3123, %v3125
    %v3127 = vadd.f32 %v3123, %v3126
    %vm3128 = vweird.f32 %v3122
    %vm3129 = vweird.f32 %v3123
    %vm3130 = vmor %vm3128, %vm3129
    %v3131 = vsel %vm3130, %v3123, %v3127
    %v3132 = vand.u32 2147483647, %v3122
    %vm3133 = vcmp.eq.f32.partialorder %v3132, 8.507059e+37
    %v3134 = vand.u32 %v3122, 2147483648
    %v3135 = vor.u32 1.1754944e-38, %v3134
    %v3136 = vsel %vm3133, %v3135, %v3131
    %v3137 = vmul.f32 1.0, %v3136
    %v3138 = vtanh.pop %v3098
    %v3139 = vxor.u32 %v3099, 2147483648
    %v3140 = vmul.f32 %v3139, 1.442695
    %v3141 = vpow.pop %v3140
    %v3142 = vadd.f32 %v3141, 1.0
    %v3143 = vrcp.pop %v3142
    %v3144 = vmul.f32 %v3142, %v3143
    %v3145 = vsub.f32 1.0, %v3144
    %v3146 = vmul.f32 %v3143, %v3145
    %v3147 = vadd.f32 %v3143, %v3146
    %vm3148 = vweird.f32 %v3142
    %vm3149 = vweird.f32 %v3143
    %vm3150 = vmor %vm3148, %vm3149
    %v3151 = vsel %vm3150, %v3143, %v3147
    %v3152 = vand.u32 2147483647, %v3142
    %vm3153 = vcmp.eq.f32.partialorder %v3152, 8.507059e+37
    %v3154 = vand.u32 %v3142, 2147483648
    %v3155 = vor.u32 1.1754944e-38, %v3154
    %v3156 = vsel %vm3153, %v3155, %v3151
    %v3157 = vmul.f32 1.0, %v3156
    %v3158 = vmul.f32 %v3137, %v2864
    %v3159 = vmul.f32 %v3118, %v3138
    %v3160 = vadd.f32 %v3158, %v3159
    %v3161 = vtanh.pop %v3160
    %v3162 = vmul.f32 %v3157, %v3161
    %v3163 = vpack.c.bf16 %v3162, %v3162
    %3164 = vmatpush.bf16.msra.mxu0 %v1648
    %3165 = vmatpush.bf16.msra.mxu0 %v1644
    %3166 = vmatpush.bf16.msra.mxu0 %v1640
    %3167 = vmatpush.bf16.msra.mxu0 %v1636
    %3168 = vmatpush.bf16.msra.mxu0 %v1632
    %3169 = vmatpush.bf16.msra.mxu0 %v1628
    %3170 = vmatpush.bf16.msra.mxu0 %v1624
    %3171 = vmatpush.bf16.msra.mxu0 %v1620
    %3172 = vmatmul.bf16.gmra.mxu0 %v3163
    %v3173 = vpop.f32.mrf.mxu0
    %v3174 = vadd.f32 0.0, %v3173
    %v3175 = vpop.f32.mrf.mxu0
    %3176 = vdwg.mxu0
    %3177 = vmatpush.bf16.msra.mxu0 %v1649
    %3178 = vmatpush.bf16.msra.mxu0 %v1645
    %3179 = vmatpush.bf16.msra.mxu0 %v1641
    %3180 = vmatpush.bf16.msra.mxu0 %v1637
    %3181 = vmatpush.bf16.msra.mxu0 %v1633
    %3182 = vmatpush.bf16.msra.mxu0 %v1629
    %3183 = vmatpush.bf16.msra.mxu0 %v1625
    %3184 = vmatpush.bf16.msra.mxu0 %v1621
    %3185 = vmatmul.bf16.gmra.mxu0 %v3163
    %v3186 = vpop.f32.mrf.mxu0
    %v3187 = vadd.f32 0.0, %v3186
    %v3188 = vpop.f32.mrf.mxu0
    %3189 = vdwg.mxu0
    %3190 = vmatpush.bf16.msra.mxu0 %v1650
    %3191 = vmatpush.bf16.msra.mxu0 %v1646
    %3192 = vmatpush.bf16.msra.mxu0 %v1642
    %3193 = vmatpush.bf16.msra.mxu0 %v1638
    %3194 = vmatpush.bf16.msra.mxu0 %v1634
    %3195 = vmatpush.bf16.msra.mxu0 %v1630
    %3196 = vmatpush.bf16.msra.mxu0 %v1626
    %3197 = vmatpush.bf16.msra.mxu0 %v1622
    %3198 = vmatmul.bf16.gmra.mxu0 %v3163
    %v3199 = vpop.f32.mrf.mxu0
    %v3200 = vadd.f32 0.0, %v3199
    %v3201 = vpop.f32.mrf.mxu0
    %3202 = vdwg.mxu0
    %3203 = vmatpush.bf16.msra.mxu0 %v1651
    %3204 = vmatpush.bf16.msra.mxu0 %v1647
    %3205 = vmatpush.bf16.msra.mxu0 %v1643
    %3206 = vmatpush.bf16.msra.mxu0 %v1639
    %3207 = vmatpush.bf16.msra.mxu0 %v1635
    %3208 = vmatpush.bf16.msra.mxu0 %v1631
    %3209 = vmatpush.bf16.msra.mxu0 %v1627
    %3210 = vmatpush.bf16.msra.mxu0 %v1623
    %3211 = vmatmul.bf16.gmra.mxu0 %v3163
    %v3212 = vpop.f32.mrf.mxu0
    %v3213 = vadd.f32 0.0, %v3212
    %v3214 = vpop.f32.mrf.mxu0
    %3215 = vdwg.mxu0
    %v3216 = vadd.f32 %v2998, %v3174
    %v3217 = vadd.f32 %v3011, %v3187
    %v3218 = vadd.f32 %v3024, %v3200
    %v3219 = vadd.f32 %v3037, %v3213
    %v3220 = vxor.u32 %v3216, 2147483648
    %v3221 = vmul.f32 %v3220, 1.442695
    %v3222 = vpow.pop %v3221
    %v3223 = vadd.f32 %v3222, 1.0
    %v3224 = vrcp.pop %v3223
    %v3225 = vmul.f32 %v3223, %v3224
    %v3226 = vsub.f32 1.0, %v3225
    %v3227 = vmul.f32 %v3224, %v3226
    %v3228 = vadd.f32 %v3224, %v3227
    %vm3229 = vweird.f32 %v3223
    %vm3230 = vweird.f32 %v3224
    %vm3231 = vmor %vm3229, %vm3230
    %v3232 = vsel %vm3231, %v3224, %v3228
    %v3233 = vand.u32 2147483647, %v3223
    %vm3234 = vcmp.eq.f32.partialorder %v3233, 8.507059e+37
    %v3235 = vand.u32 %v3223, 2147483648
    %v3236 = vor.u32 1.1754944e-38, %v3235
    %v3237 = vsel %vm3234, %v3236, %v3232
    %v3238 = vmul.f32 1.0, %v3237
    %v3239 = vxor.u32 %v3217, 2147483648
    %v3240 = vmul.f32 %v3239, 1.442695
    %v3241 = vpow.pop %v3240
    %v3242 = vadd.f32 %v3241, 1.0
    %v3243 = vrcp.pop %v3242
    %v3244 = vmul.f32 %v3242, %v3243
    %v3245 = vsub.f32 1.0, %v3244
    %v3246 = vmul.f32 %v3243, %v3245
    %v3247 = vadd.f32 %v3243, %v3246
    %vm3248 = vweird.f32 %v3242
    %vm3249 = vweird.f32 %v3243
    %vm3250 = vmor %vm3248, %vm3249
    %v3251 = vsel %vm3250, %v3243, %v3247
    %v3252 = vand.u32 2147483647, %v3242
    %vm3253 = vcmp.eq.f32.partialorder %v3252, 8.507059e+37
    %v3254 = vand.u32 %v3242, 2147483648
    %v3255 = vor.u32 1.1754944e-38, %v3254
    %v3256 = vsel %vm3253, %v3255, %v3251
    %v3257 = vmul.f32 1.0, %v3256
    %v3258 = vtanh.pop %v3218
    %v3259 = vxor.u32 %v3219, 2147483648
    %v3260 = vmul.f32 %v3259, 1.442695
    %v3261 = vpow.pop %v3260
    %v3262 = vadd.f32 %v3261, 1.0
    %v3263 = vrcp.pop %v3262
    %v3264 = vmul.f32 %v3262, %v3263
    %v3265 = vsub.f32 1.0, %v3264
    %v3266 = vmul.f32 %v3263, %v3265
    %v3267 = vadd.f32 %v3263, %v3266
    %vm3268 = vweird.f32 %v3262
    %vm3269 = vweird.f32 %v3263
    %vm3270 = vmor %vm3268, %vm3269
    %v3271 = vsel %vm3270, %v3263, %v3267
    %v3272 = vand.u32 2147483647, %v3262
    %vm3273 = vcmp.eq.f32.partialorder %v3272, 8.507059e+37
    %v3274 = vand.u32 %v3262, 2147483648
    %v3275 = vor.u32 1.1754944e-38, %v3274
    %v3276 = vsel %vm3273, %v3275, %v3271
    %v3277 = vmul.f32 1.0, %v3276
    %v3278 = vmul.f32 %v3257, %v2984
    %v3279 = vmul.f32 %v3238, %v3258
    %v3280 = vadd.f32 %v3278, %v3279
    %v3281 = vtanh.pop %v3280
    %v3282 = vmul.f32 %v3277, %v3281
    %v3283 = vpack.c.bf16 %v3282, %v3282
    %3284 = vmatpush.bf16.msra.mxu0 %v1087
    %3285 = vmatpush.bf16.msra.mxu0 %v1083
    %3286 = vmatpush.bf16.msra.mxu0 %v1079
    %3287 = vmatpush.bf16.msra.mxu0 %v1075
    %3288 = vmatpush.bf16.msra.mxu0 %v1071
    %3289 = vmatpush.bf16.msra.mxu0 %v1067
    %3290 = vmatpush.bf16.msra.mxu0 %v1063
    %3291 = vmatpush.bf16.msra.mxu0 %v1059
    %3292 = vmatmul.bf16.gmra.mxu0 %v3283
    %v3293 = vpop.f32.mrf.mxu0
    %v3294 = vadd.f32 %v955, %v3293
    %v3295 = vpop.f32.mrf.mxu0
    %3296 = vdwg.mxu0
    %3297 = vmatpush.bf16.msra.mxu0 %v1088
    %3298 = vmatpush.bf16.msra.mxu0 %v1084
    %3299 = vmatpush.bf16.msra.mxu0 %v1080
    %3300 = vmatpush.bf16.msra.mxu0 %v1076
    %3301 = vmatpush.bf16.msra.mxu0 %v1072
    %3302 = vmatpush.bf16.msra.mxu0 %v1068
    %3303 = vmatpush.bf16.msra.mxu0 %v1064
    %3304 = vmatpush.bf16.msra.mxu0 %v1060
    %3305 = vmatmul.bf16.gmra.mxu0 %v3283
    %v3306 = vpop.f32.mrf.mxu0
    %v3307 = vadd.f32 %v956, %v3306
    %v3308 = vpop.f32.mrf.mxu0
    %3309 = vdwg.mxu0
    %3310 = vmatpush.bf16.msra.mxu0 %v1089
    %3311 = vmatpush.bf16.msra.mxu0 %v1085
    %3312 = vmatpush.bf16.msra.mxu0 %v1081
    %3313 = vmatpush.bf16.msra.mxu0 %v1077
    %3314 = vmatpush.bf16.msra.mxu0 %v1073
    %3315 = vmatpush.bf16.msra.mxu0 %v1069
    %3316 = vmatpush.bf16.msra.mxu0 %v1065
    %3317 = vmatpush.bf16.msra.mxu0 %v1061
    %3318 = vmatmul.bf16.gmra.mxu0 %v3283
    %v3319 = vpop.f32.mrf.mxu0
    %v3320 = vadd.f32 %v957, %v3319
    %v3321 = vpop.f32.mrf.mxu0
    %3322 = vdwg.mxu0
    %3323 = vmatpush.bf16.msra.mxu0 %v1090
    %3324 = vmatpush.bf16.msra.mxu0 %v1086
    %3325 = vmatpush.bf16.msra.mxu0 %v1082
    %3326 = vmatpush.bf16.msra.mxu0 %v1078
    %3327 = vmatpush.bf16.msra.mxu0 %v1074
    %3328 = vmatpush.bf16.msra.mxu0 %v1070
    %3329 = vmatpush.bf16.msra.mxu0 %v1066
    %3330 = vmatpush.bf16.msra.mxu0 %v1062
    %3331 = vmatmul.bf16.gmra.mxu0 %v3283
    %v3332 = vpop.f32.mrf.mxu0
    %v3333 = vadd.f32 %v958, %v3332
    %v3334 = vpop.f32.mrf.mxu0
    %3335 = vdwg.mxu0
    %v3336 = vld [vmem:[%s812] sm:$0xff]
    %v3337 = vld [vmem:[%s812 + $0x8] sm:$0xff]
    %v3338 = vld [vmem:[%s812 + $0x10] sm:$0xff]
    %v3339 = vld [vmem:[%s812 + $0x18] sm:$0xff]
    %3340 = vmatpush.bf16.msra.mxu0 %v1336
    %3341 = vmatpush.bf16.msra.mxu0 %v1332
    %3342 = vmatpush.bf16.msra.mxu0 %v1328
    %3343 = vmatpush.bf16.msra.mxu0 %v1324
    %3344 = vmatpush.bf16.msra.mxu0 %v1320
    %3345 = vmatpush.bf16.msra.mxu0 %v1316
    %3346 = vmatpush.bf16.msra.mxu0 %v1312
    %3347 = vmatpush.bf16.msra.mxu0 %v1308
    %3348 = vmatmul.bf16.gmra.mxu0 %v3163
    %v3349 = vpop.f32.mrf.mxu0
    %v3350 = vadd.f32 0.0, %v3349
    %v3351 = vpop.f32.mrf.mxu0
    %3352 = vdwg.mxu0
    %3353 = vmatpush.bf16.msra.mxu0 %v1337
    %3354 = vmatpush.bf16.msra.mxu0 %v1333
    %3355 = vmatpush.bf16.msra.mxu0 %v1329
    %3356 = vmatpush.bf16.msra.mxu0 %v1325
    %3357 = vmatpush.bf16.msra.mxu0 %v1321
    %3358 = vmatpush.bf16.msra.mxu0 %v1317
    %3359 = vmatpush.bf16.msra.mxu0 %v1313
    %3360 = vmatpush.bf16.msra.mxu0 %v1309
    %3361 = vmatmul.bf16.gmra.mxu0 %v3163
    %v3362 = vpop.f32.mrf.mxu0
    %v3363 = vadd.f32 0.0, %v3362
    %v3364 = vpop.f32.mrf.mxu0
    %3365 = vdwg.mxu0
    %3366 = vmatpush.bf16.msra.mxu0 %v1338
    %3367 = vmatpush.bf16.msra.mxu0 %v1334
    %3368 = vmatpush.bf16.msra.mxu0 %v1330
    %3369 = vmatpush.bf16.msra.mxu0 %v1326
    %3370 = vmatpush.bf16.msra.mxu0 %v1322
    %3371 = vmatpush.bf16.msra.mxu0 %v1318
    %3372 = vmatpush.bf16.msra.mxu0 %v1314
    %3373 = vmatpush.bf16.msra.mxu0 %v1310
    %3374 = vmatmul.bf16.gmra.mxu0 %v3163
    %v3375 = vpop.f32.mrf.mxu0
    %v3376 = vadd.f32 0.0, %v3375
    %v3377 = vpop.f32.mrf.mxu0
    %3378 = vdwg.mxu0
    %3379 = vmatpush.bf16.msra.mxu0 %v1339
    %3380 = vmatpush.bf16.msra.mxu0 %v1335
    %3381 = vmatpush.bf16.msra.mxu0 %v1331
    %3382 = vmatpush.bf16.msra.mxu0 %v1327
    %3383 = vmatpush.bf16.msra.mxu0 %v1323
    %3384 = vmatpush.bf16.msra.mxu0 %v1319
    %3385 = vmatpush.bf16.msra.mxu0 %v1315
    %3386 = vmatpush.bf16.msra.mxu0 %v1311
    %3387 = vmatmul.bf16.gmra.mxu0 %v3163
    %v3388 = vpop.f32.mrf.mxu0
    %v3389 = vadd.f32 0.0, %v3388
    %v3390 = vpop.f32.mrf.mxu0
    %3391 = vdwg.mxu0
    %v3392 = vadd.f32 %v3336, %v3350
    %v3393 = vadd.f32 %v3337, %v3363
    %v3394 = vadd.f32 %v3338, %v3376
    %v3395 = vadd.f32 %v3339, %v3389
    %v3396 = vxor.u32 %v3392, 2147483648
    %v3397 = vmul.f32 %v3396, 1.442695
    %v3398 = vpow.pop %v3397
    %v3399 = vadd.f32 %v3398, 1.0
    %v3400 = vrcp.pop %v3399
    %v3401 = vmul.f32 %v3399, %v3400
    %v3402 = vsub.f32 1.0, %v3401
    %v3403 = vmul.f32 %v3400, %v3402
    %v3404 = vadd.f32 %v3400, %v3403
    %vm3405 = vweird.f32 %v3399
    %vm3406 = vweird.f32 %v3400
    %vm3407 = vmor %vm3405, %vm3406
    %v3408 = vsel %vm3407, %v3400, %v3404
    %v3409 = vand.u32 2147483647, %v3399
    %vm3410 = vcmp.eq.f32.partialorder %v3409, 8.507059e+37
    %v3411 = vand.u32 %v3399, 2147483648
    %v3412 = vor.u32 1.1754944e-38, %v3411
    %v3413 = vsel %vm3410, %v3412, %v3408
    %v3414 = vmul.f32 1.0, %v3413
    %v3415 = vxor.u32 %v3393, 2147483648
    %v3416 = vmul.f32 %v3415, 1.442695
    %v3417 = vpow.pop %v3416
    %v3418 = vadd.f32 %v3417, 1.0
    %v3419 = vrcp.pop %v3418
    %v3420 = vmul.f32 %v3418, %v3419
    %v3421 = vsub.f32 1.0, %v3420
    %v3422 = vmul.f32 %v3419, %v3421
    %v3423 = vadd.f32 %v3419, %v3422
    %vm3424 = vweird.f32 %v3418
    %vm3425 = vweird.f32 %v3419
    %vm3426 = vmor %vm3424, %vm3425
    %v3427 = vsel %vm3426, %v3419, %v3423
    %v3428 = vand.u32 2147483647, %v3418
    %vm3429 = vcmp.eq.f32.partialorder %v3428, 8.507059e+37
    %v3430 = vand.u32 %v3418, 2147483648
    %v3431 = vor.u32 1.1754944e-38, %v3430
    %v3432 = vsel %vm3429, %v3431, %v3427
    %v3433 = vmul.f32 1.0, %v3432
    %v3434 = vtanh.pop %v3394
    %v3435 = vxor.u32 %v3395, 2147483648
    %v3436 = vmul.f32 %v3435, 1.442695
    %v3437 = vpow.pop %v3436
    %v3438 = vadd.f32 %v3437, 1.0
    %v3439 = vrcp.pop %v3438
    %v3440 = vmul.f32 %v3438, %v3439
    %v3441 = vsub.f32 1.0, %v3440
    %v3442 = vmul.f32 %v3439, %v3441
    %v3443 = vadd.f32 %v3439, %v3442
    %vm3444 = vweird.f32 %v3438
    %vm3445 = vweird.f32 %v3439
    %vm3446 = vmor %vm3444, %vm3445
    %v3447 = vsel %vm3446, %v3439, %v3443
    %v3448 = vand.u32 2147483647, %v3438
    %vm3449 = vcmp.eq.f32.partialorder %v3448, 8.507059e+37
    %v3450 = vand.u32 %v3438, 2147483648
    %v3451 = vor.u32 1.1754944e-38, %v3450
    %v3452 = vsel %vm3449, %v3451, %v3447
    %v3453 = vmul.f32 1.0, %v3452
    %v3454 = vmul.f32 %v3433, %v3160
    %v3455 = vmul.f32 %v3414, %v3434
    %v3456 = vadd.f32 %v3454, %v3455
    %v3457 = vtanh.pop %v3456
    %v3458 = vmul.f32 %v3453, %v3457
    %v3459 = vpack.c.bf16 %v3458, %v3458
    %3460 = vmatpush.bf16.msra.mxu0 %v1648
    %3461 = vmatpush.bf16.msra.mxu0 %v1644
    %3462 = vmatpush.bf16.msra.mxu0 %v1640
    %3463 = vmatpush.bf16.msra.mxu0 %v1636
    %3464 = vmatpush.bf16.msra.mxu0 %v1632
    %3465 = vmatpush.bf16.msra.mxu0 %v1628
    %3466 = vmatpush.bf16.msra.mxu0 %v1624
    %3467 = vmatpush.bf16.msra.mxu0 %v1620
    %3468 = vmatmul.bf16.gmra.mxu0 %v3459
    %v3469 = vpop.f32.mrf.mxu0
    %v3470 = vadd.f32 0.0, %v3469
    %v3471 = vpop.f32.mrf.mxu0
    %3472 = vdwg.mxu0
    %3473 = vmatpush.bf16.msra.mxu0 %v1649
    %3474 = vmatpush.bf16.msra.mxu0 %v1645
    %3475 = vmatpush.bf16.msra.mxu0 %v1641
    %3476 = vmatpush.bf16.msra.mxu0 %v1637
    %3477 = vmatpush.bf16.msra.mxu0 %v1633
    %3478 = vmatpush.bf16.msra.mxu0 %v1629
    %3479 = vmatpush.bf16.msra.mxu0 %v1625
    %3480 = vmatpush.bf16.msra.mxu0 %v1621
    %3481 = vmatmul.bf16.gmra.mxu0 %v3459
    %v3482 = vpop.f32.mrf.mxu0
    %v3483 = vadd.f32 0.0, %v3482
    %v3484 = vpop.f32.mrf.mxu0
    %3485 = vdwg.mxu0
    %3486 = vmatpush.bf16.msra.mxu0 %v1650
    %3487 = vmatpush.bf16.msra.mxu0 %v1646
    %3488 = vmatpush.bf16.msra.mxu0 %v1642
    %3489 = vmatpush.bf16.msra.mxu0 %v1638
    %3490 = vmatpush.bf16.msra.mxu0 %v1634
    %3491 = vmatpush.bf16.msra.mxu0 %v1630
    %3492 = vmatpush.bf16.msra.mxu0 %v1626
    %3493 = vmatpush.bf16.msra.mxu0 %v1622
    %3494 = vmatmul.bf16.gmra.mxu0 %v3459
    %v3495 = vpop.f32.mrf.mxu0
    %v3496 = vadd.f32 0.0, %v3495
    %v3497 = vpop.f32.mrf.mxu0
    %3498 = vdwg.mxu0
    %3499 = vmatpush.bf16.msra.mxu0 %v1651
    %3500 = vmatpush.bf16.msra.mxu0 %v1647
    %3501 = vmatpush.bf16.msra.mxu0 %v1643
    %3502 = vmatpush.bf16.msra.mxu0 %v1639
    %3503 = vmatpush.bf16.msra.mxu0 %v1635
    %3504 = vmatpush.bf16.msra.mxu0 %v1631
    %3505 = vmatpush.bf16.msra.mxu0 %v1627
    %3506 = vmatpush.bf16.msra.mxu0 %v1623
    %3507 = vmatmul.bf16.gmra.mxu0 %v3459
    %v3508 = vpop.f32.mrf.mxu0
    %v3509 = vadd.f32 0.0, %v3508
    %v3510 = vpop.f32.mrf.mxu0
    %3511 = vdwg.mxu0
    %v3512 = vadd.f32 %v3294, %v3470
    %v3513 = vadd.f32 %v3307, %v3483
    %v3514 = vadd.f32 %v3320, %v3496
    %v3515 = vadd.f32 %v3333, %v3509
    %v3516 = vxor.u32 %v3512, 2147483648
    %v3517 = vmul.f32 %v3516, 1.442695
    %v3518 = vpow.pop %v3517
    %v3519 = vadd.f32 %v3518, 1.0
    %v3520 = vrcp.pop %v3519
    %v3521 = vmul.f32 %v3519, %v3520
    %v3522 = vsub.f32 1.0, %v3521
    %v3523 = vmul.f32 %v3520, %v3522
    %v3524 = vadd.f32 %v3520, %v3523
    %vm3525 = vweird.f32 %v3519
    %vm3526 = vweird.f32 %v3520
    %vm3527 = vmor %vm3525, %vm3526
    %v3528 = vsel %vm3527, %v3520, %v3524
    %v3529 = vand.u32 2147483647, %v3519
    %vm3530 = vcmp.eq.f32.partialorder %v3529, 8.507059e+37
    %v3531 = vand.u32 %v3519, 2147483648
    %v3532 = vor.u32 1.1754944e-38, %v3531
    %v3533 = vsel %vm3530, %v3532, %v3528
    %v3534 = vmul.f32 1.0, %v3533
    %v3535 = vxor.u32 %v3513, 2147483648
    %v3536 = vmul.f32 %v3535, 1.442695
    %v3537 = vpow.pop %v3536
    %v3538 = vadd.f32 %v3537, 1.0
    %v3539 = vrcp.pop %v3538
    %v3540 = vmul.f32 %v3538, %v3539
    %v3541 = vsub.f32 1.0, %v3540
    %v3542 = vmul.f32 %v3539, %v3541
    %v3543 = vadd.f32 %v3539, %v3542
    %vm3544 = vweird.f32 %v3538
    %vm3545 = vweird.f32 %v3539
    %vm3546 = vmor %vm3544, %vm3545
    %v3547 = vsel %vm3546, %v3539, %v3543
    %v3548 = vand.u32 2147483647, %v3538
    %vm3549 = vcmp.eq.f32.partialorder %v3548, 8.507059e+37
    %v3550 = vand.u32 %v3538, 2147483648
    %v3551 = vor.u32 1.1754944e-38, %v3550
    %v3552 = vsel %vm3549, %v3551, %v3547
    %v3553 = vmul.f32 1.0, %v3552
    %v3554 = vtanh.pop %v3514
    %v3555 = vxor.u32 %v3515, 2147483648
    %v3556 = vmul.f32 %v3555, 1.442695
    %v3557 = vpow.pop %v3556
    %v3558 = vadd.f32 %v3557, 1.0
    %v3559 = vrcp.pop %v3558
    %v3560 = vmul.f32 %v3558, %v3559
    %v3561 = vsub.f32 1.0, %v3560
    %v3562 = vmul.f32 %v3559, %v3561
    %v3563 = vadd.f32 %v3559, %v3562
    %vm3564 = vweird.f32 %v3558
    %vm3565 = vweird.f32 %v3559
    %vm3566 = vmor %vm3564, %vm3565
    %v3567 = vsel %vm3566, %v3559, %v3563
    %v3568 = vand.u32 2147483647, %v3558
    %vm3569 = vcmp.eq.f32.partialorder %v3568, 8.507059e+37
    %v3570 = vand.u32 %v3558, 2147483648
    %v3571 = vor.u32 1.1754944e-38, %v3570
    %v3572 = vsel %vm3569, %v3571, %v3567
    %v3573 = vmul.f32 1.0, %v3572
    %v3574 = vmul.f32 %v3553, %v3280
    %v3575 = vmul.f32 %v3534, %v3554
    %v3576 = vadd.f32 %v3574, %v3575
    %v3577 = vtanh.pop %v3576
    %v3578 = vmul.f32 %v3573, %v3577
    %v3579 = vpack.c.bf16 %v3578, %v3578
    %3580 = vmatpush.bf16.msra.mxu0 %v1087
    %3581 = vmatpush.bf16.msra.mxu0 %v1083
    %3582 = vmatpush.bf16.msra.mxu0 %v1079
    %3583 = vmatpush.bf16.msra.mxu0 %v1075
    %3584 = vmatpush.bf16.msra.mxu0 %v1071
    %3585 = vmatpush.bf16.msra.mxu0 %v1067
    %3586 = vmatpush.bf16.msra.mxu0 %v1063
    %3587 = vmatpush.bf16.msra.mxu0 %v1059
    %3588 = vmatmul.bf16.gmra.mxu0 %v3579
    %v3589 = vpop.f32.mrf.mxu0
    %v3590 = vadd.f32 %v955, %v3589
    %v3591 = vpop.f32.mrf.mxu0
    %3592 = vdwg.mxu0
    %3593 = vmatpush.bf16.msra.mxu0 %v1088
    %3594 = vmatpush.bf16.msra.mxu0 %v1084
    %3595 = vmatpush.bf16.msra.mxu0 %v1080
    %3596 = vmatpush.bf16.msra.mxu0 %v1076
    %3597 = vmatpush.bf16.msra.mxu0 %v1072
    %3598 = vmatpush.bf16.msra.mxu0 %v1068
    %3599 = vmatpush.bf16.msra.mxu0 %v1064
    %3600 = vmatpush.bf16.msra.mxu0 %v1060
    %3601 = vmatmul.bf16.gmra.mxu0 %v3579
    %v3602 = vpop.f32.mrf.mxu0
    %v3603 = vadd.f32 %v956, %v3602
    %v3604 = vpop.f32.mrf.mxu0
    %3605 = vdwg.mxu0
    %3606 = vmatpush.bf16.msra.mxu0 %v1089
    %3607 = vmatpush.bf16.msra.mxu0 %v1085
    %3608 = vmatpush.bf16.msra.mxu0 %v1081
    %3609 = vmatpush.bf16.msra.mxu0 %v1077
    %3610 = vmatpush.bf16.msra.mxu0 %v1073
    %3611 = vmatpush.bf16.msra.mxu0 %v1069
    %3612 = vmatpush.bf16.msra.mxu0 %v1065
    %3613 = vmatpush.bf16.msra.mxu0 %v1061
    %3614 = vmatmul.bf16.gmra.mxu0 %v3579
    %v3615 = vpop.f32.mrf.mxu0
    %v3616 = vadd.f32 %v957, %v3615
    %v3617 = vpop.f32.mrf.mxu0
    %3618 = vdwg.mxu0
    %3619 = vmatpush.bf16.msra.mxu0 %v1090
    %3620 = vmatpush.bf16.msra.mxu0 %v1086
    %3621 = vmatpush.bf16.msra.mxu0 %v1082
    %3622 = vmatpush.bf16.msra.mxu0 %v1078
    %3623 = vmatpush.bf16.msra.mxu0 %v1074
    %3624 = vmatpush.bf16.msra.mxu0 %v1070
    %3625 = vmatpush.bf16.msra.mxu0 %v1066
    %3626 = vmatpush.bf16.msra.mxu0 %v1062
    %3627 = vmatmul.bf16.gmra.mxu0 %v3579
    %v3628 = vpop.f32.mrf.mxu0
    %v3629 = vadd.f32 %v958, %v3628
    %v3630 = vpop.f32.mrf.mxu0
    %3631 = vdwg.mxu0
    %v3632 = vld [vmem:[%s909] sm:$0xff]
    %v3633 = vld [vmem:[%s909 + $0x8] sm:$0xff]
    %v3634 = vld [vmem:[%s909 + $0x10] sm:$0xff]
    %v3635 = vld [vmem:[%s909 + $0x18] sm:$0xff]
    %3636 = vmatpush.bf16.msra.mxu0 %v1336
    %3637 = vmatpush.bf16.msra.mxu0 %v1332
    %3638 = vmatpush.bf16.msra.mxu0 %v1328
    %3639 = vmatpush.bf16.msra.mxu0 %v1324
    %3640 = vmatpush.bf16.msra.mxu0 %v1320
    %3641 = vmatpush.bf16.msra.mxu0 %v1316
    %3642 = vmatpush.bf16.msra.mxu0 %v1312
    %3643 = vmatpush.bf16.msra.mxu0 %v1308
    %3644 = vmatmul.bf16.gmra.mxu0 %v3459
    %v3645 = vpop.f32.mrf.mxu0
    %v3646 = vadd.f32 0.0, %v3645
    %v3647 = vpop.f32.mrf.mxu0
    %3648 = vdwg.mxu0
    %3649 = vmatpush.bf16.msra.mxu0 %v1337
    %3650 = vmatpush.bf16.msra.mxu0 %v1333
    %3651 = vmatpush.bf16.msra.mxu0 %v1329
    %3652 = vmatpush.bf16.msra.mxu0 %v1325
    %3653 = vmatpush.bf16.msra.mxu0 %v1321
    %3654 = vmatpush.bf16.msra.mxu0 %v1317
    %3655 = vmatpush.bf16.msra.mxu0 %v1313
    %3656 = vmatpush.bf16.msra.mxu0 %v1309
    %3657 = vmatmul.bf16.gmra.mxu0 %v3459
    %v3658 = vpop.f32.mrf.mxu0
    %v3659 = vadd.f32 0.0, %v3658
    %v3660 = vpop.f32.mrf.mxu0
    %3661 = vdwg.mxu0
    %3662 = vmatpush.bf16.msra.mxu0 %v1338
    %3663 = vmatpush.bf16.msra.mxu0 %v1334
    %3664 = vmatpush.bf16.msra.mxu0 %v1330
    %3665 = vmatpush.bf16.msra.mxu0 %v1326
    %3666 = vmatpush.bf16.msra.mxu0 %v1322
    %3667 = vmatpush.bf16.msra.mxu0 %v1318
    %3668 = vmatpush.bf16.msra.mxu0 %v1314
    %3669 = vmatpush.bf16.msra.mxu0 %v1310
    %3670 = vmatmul.bf16.gmra.mxu0 %v3459
    %v3671 = vpop.f32.mrf.mxu0
    %v3672 = vadd.f32 0.0, %v3671
    %v3673 = vpop.f32.mrf.mxu0
    %3674 = vdwg.mxu0
    %3675 = vmatpush.bf16.msra.mxu0 %v1339
    %3676 = vmatpush.bf16.msra.mxu0 %v1335
    %3677 = vmatpush.bf16.msra.mxu0 %v1331
    %3678 = vmatpush.bf16.msra.mxu0 %v1327
    %3679 = vmatpush.bf16.msra.mxu0 %v1323
    %3680 = vmatpush.bf16.msra.mxu0 %v1319
    %3681 = vmatpush.bf16.msra.mxu0 %v1315
    %3682 = vmatpush.bf16.msra.mxu0 %v1311
    %3683 = vmatmul.bf16.gmra.mxu0 %v3459
    %v3684 = vpop.f32.mrf.mxu0
    %v3685 = vadd.f32 0.0, %v3684
    %v3686 = vpop.f32.mrf.mxu0
    %3687 = vdwg.mxu0
    %v3688 = vadd.f32 %v3632, %v3646
    %v3689 = vadd.f32 %v3633, %v3659
    %v3690 = vadd.f32 %v3634, %v3672
    %v3691 = vadd.f32 %v3635, %v3685
    %v3692 = vxor.u32 %v3688, 2147483648
    %v3693 = vmul.f32 %v3692, 1.442695
    %v3694 = vpow.pop %v3693
    %v3695 = vadd.f32 %v3694, 1.0
    %v3696 = vrcp.pop %v3695
    %v3697 = vmul.f32 %v3695, %v3696
    %v3698 = vsub.f32 1.0, %v3697
    %v3699 = vmul.f32 %v3696, %v3698
    %v3700 = vadd.f32 %v3696, %v3699
    %vm3701 = vweird.f32 %v3695
    %vm3702 = vweird.f32 %v3696
    %vm3703 = vmor %vm3701, %vm3702
    %v3704 = vsel %vm3703, %v3696, %v3700
    %v3705 = vand.u32 2147483647, %v3695
    %vm3706 = vcmp.eq.f32.partialorder %v3705, 8.507059e+37
    %v3707 = vand.u32 %v3695, 2147483648
    %v3708 = vor.u32 1.1754944e-38, %v3707
    %v3709 = vsel %vm3706, %v3708, %v3704
    %v3710 = vmul.f32 1.0, %v3709
    %v3711 = vxor.u32 %v3689, 2147483648
    %v3712 = vmul.f32 %v3711, 1.442695
    %v3713 = vpow.pop %v3712
    %v3714 = vadd.f32 %v3713, 1.0
    %v3715 = vrcp.pop %v3714
    %v3716 = vmul.f32 %v3714, %v3715
    %v3717 = vsub.f32 1.0, %v3716
    %v3718 = vmul.f32 %v3715, %v3717
    %v3719 = vadd.f32 %v3715, %v3718
    %vm3720 = vweird.f32 %v3714
    %vm3721 = vweird.f32 %v3715
    %vm3722 = vmor %vm3720, %vm3721
    %v3723 = vsel %vm3722, %v3715, %v3719
    %v3724 = vand.u32 2147483647, %v3714
    %vm3725 = vcmp.eq.f32.partialorder %v3724, 8.507059e+37
    %v3726 = vand.u32 %v3714, 2147483648
    %v3727 = vor.u32 1.1754944e-38, %v3726
    %v3728 = vsel %vm3725, %v3727, %v3723
    %v3729 = vmul.f32 1.0, %v3728
    %v3730 = vtanh.pop %v3690
    %v3731 = vxor.u32 %v3691, 2147483648
    %v3732 = vmul.f32 %v3731, 1.442695
    %v3733 = vpow.pop %v3732
    %v3734 = vadd.f32 %v3733, 1.0
    %v3735 = vrcp.pop %v3734
    %v3736 = vmul.f32 %v3734, %v3735
    %v3737 = vsub.f32 1.0, %v3736
    %v3738 = vmul.f32 %v3735, %v3737
    %v3739 = vadd.f32 %v3735, %v3738
    %vm3740 = vweird.f32 %v3734
    %vm3741 = vweird.f32 %v3735
    %vm3742 = vmor %vm3740, %vm3741
    %v3743 = vsel %vm3742, %v3735, %v3739
    %v3744 = vand.u32 2147483647, %v3734
    %vm3745 = vcmp.eq.f32.partialorder %v3744, 8.507059e+37
    %v3746 = vand.u32 %v3734, 2147483648
    %v3747 = vor.u32 1.1754944e-38, %v3746
    %v3748 = vsel %vm3745, %v3747, %v3743
    %v3749 = vmul.f32 1.0, %v3748
    %v3750 = vmul.f32 %v3729, %v3456
    %v3751 = vmul.f32 %v3710, %v3730
    %v3752 = vadd.f32 %v3750, %v3751
    %v3753 = vtanh.pop %v3752
    %v3754 = vmul.f32 %v3749, %v3753
    %v3755 = vpack.c.bf16 %v3754, %v3754
    %3756 = vmatpush.bf16.msra.mxu0 %v1648
    %3757 = vmatpush.bf16.msra.mxu0 %v1644
    %3758 = vmatpush.bf16.msra.mxu0 %v1640
    %3759 = vmatpush.bf16.msra.mxu0 %v1636
    %3760 = vmatpush.bf16.msra.mxu0 %v1632
    %3761 = vmatpush.bf16.msra.mxu0 %v1628
    %3762 = vmatpush.bf16.msra.mxu0 %v1624
    %3763 = vmatpush.bf16.msra.mxu0 %v1620
    %3764 = vmatmul.bf16.gmra.mxu0 %v3755
    %v3765 = vpop.f32.mrf.mxu0
    %v3766 = vadd.f32 0.0, %v3765
    %v3767 = vpop.f32.mrf.mxu0
    %3768 = vdwg.mxu0
    %3769 = vmatpush.bf16.msra.mxu0 %v1649
    %3770 = vmatpush.bf16.msra.mxu0 %v1645
    %3771 = vmatpush.bf16.msra.mxu0 %v1641
    %3772 = vmatpush.bf16.msra.mxu0 %v1637
    %3773 = vmatpush.bf16.msra.mxu0 %v1633
    %3774 = vmatpush.bf16.msra.mxu0 %v1629
    %3775 = vmatpush.bf16.msra.mxu0 %v1625
    %3776 = vmatpush.bf16.msra.mxu0 %v1621
    %3777 = vmatmul.bf16.gmra.mxu0 %v3755
    %v3778 = vpop.f32.mrf.mxu0
    %v3779 = vadd.f32 0.0, %v3778
    %v3780 = vpop.f32.mrf.mxu0
    %3781 = vdwg.mxu0
    %3782 = vmatpush.bf16.msra.mxu0 %v1650
    %3783 = vmatpush.bf16.msra.mxu0 %v1646
    %3784 = vmatpush.bf16.msra.mxu0 %v1642
    %3785 = vmatpush.bf16.msra.mxu0 %v1638
    %3786 = vmatpush.bf16.msra.mxu0 %v1634
    %3787 = vmatpush.bf16.msra.mxu0 %v1630
    %3788 = vmatpush.bf16.msra.mxu0 %v1626
    %3789 = vmatpush.bf16.msra.mxu0 %v1622
    %3790 = vmatmul.bf16.gmra.mxu0 %v3755
    %v3791 = vpop.f32.mrf.mxu0
    %v3792 = vadd.f32 0.0, %v3791
    %v3793 = vpop.f32.mrf.mxu0
    %3794 = vdwg.mxu0
    %3795 = vmatpush.bf16.msra.mxu0 %v1651
    %3796 = vmatpush.bf16.msra.mxu0 %v1647
    %3797 = vmatpush.bf16.msra.mxu0 %v1643
    %3798 = vmatpush.bf16.msra.mxu0 %v1639
    %3799 = vmatpush.bf16.msra.mxu0 %v1635
    %3800 = vmatpush.bf16.msra.mxu0 %v1631
    %3801 = vmatpush.bf16.msra.mxu0 %v1627
    %3802 = vmatpush.bf16.msra.mxu0 %v1623
    %3803 = vmatmul.bf16.gmra.mxu0 %v3755
    %v3804 = vpop.f32.mrf.mxu0
    %v3805 = vadd.f32 0.0, %v3804
    %v3806 = vpop.f32.mrf.mxu0
    %3807 = vdwg.mxu0
    %v3808 = vadd.f32 %v3590, %v3766
    %v3809 = vadd.f32 %v3603, %v3779
    %v3810 = vadd.f32 %v3616, %v3792
    %v3811 = vadd.f32 %v3629, %v3805
    %v3812 = vxor.u32 %v3808, 2147483648
    %v3813 = vmul.f32 %v3812, 1.442695
    %v3814 = vpow.pop %v3813
    %v3815 = vadd.f32 %v3814, 1.0
    %v3816 = vrcp.pop %v3815
    %v3817 = vmul.f32 %v3815, %v3816
    %v3818 = vsub.f32 1.0, %v3817
    %v3819 = vmul.f32 %v3816, %v3818
    %v3820 = vadd.f32 %v3816, %v3819
    %vm3821 = vweird.f32 %v3815
    %vm3822 = vweird.f32 %v3816
    %vm3823 = vmor %vm3821, %vm3822
    %v3824 = vsel %vm3823, %v3816, %v3820
    %v3825 = vand.u32 2147483647, %v3815
    %vm3826 = vcmp.eq.f32.partialorder %v3825, 8.507059e+37
    %v3827 = vand.u32 %v3815, 2147483648
    %v3828 = vor.u32 1.1754944e-38, %v3827
    %v3829 = vsel %vm3826, %v3828, %v3824
    %v3830 = vmul.f32 1.0, %v3829
    %v3831 = vxor.u32 %v3809, 2147483648
    %v3832 = vmul.f32 %v3831, 1.442695
    %v3833 = vpow.pop %v3832
    %v3834 = vadd.f32 %v3833, 1.0
    %v3835 = vrcp.pop %v3834
    %v3836 = vmul.f32 %v3834, %v3835
    %v3837 = vsub.f32 1.0, %v3836
    %v3838 = vmul.f32 %v3835, %v3837
    %v3839 = vadd.f32 %v3835, %v3838
    %vm3840 = vweird.f32 %v3834
    %vm3841 = vweird.f32 %v3835
    %vm3842 = vmor %vm3840, %vm3841
    %v3843 = vsel %vm3842, %v3835, %v3839
    %v3844 = vand.u32 2147483647, %v3834
    %vm3845 = vcmp.eq.f32.partialorder %v3844, 8.507059e+37
    %v3846 = vand.u32 %v3834, 2147483648
    %v3847 = vor.u32 1.1754944e-38, %v3846
    %v3848 = vsel %vm3845, %v3847, %v3843
    %v3849 = vmul.f32 1.0, %v3848
    %v3850 = vtanh.pop %v3810
    %v3851 = vxor.u32 %v3811, 2147483648
    %v3852 = vmul.f32 %v3851, 1.442695
    %v3853 = vpow.pop %v3852
    %v3854 = vadd.f32 %v3853, 1.0
    %v3855 = vrcp.pop %v3854
    %v3856 = vmul.f32 %v3854, %v3855
    %v3857 = vsub.f32 1.0, %v3856
    %v3858 = vmul.f32 %v3855, %v3857
    %v3859 = vadd.f32 %v3855, %v3858
    %vm3860 = vweird.f32 %v3854
    %vm3861 = vweird.f32 %v3855
    %vm3862 = vmor %vm3860, %vm3861
    %v3863 = vsel %vm3862, %v3855, %v3859
    %v3864 = vand.u32 2147483647, %v3854
    %vm3865 = vcmp.eq.f32.partialorder %v3864, 8.507059e+37
    %v3866 = vand.u32 %v3854, 2147483648
    %v3867 = vor.u32 1.1754944e-38, %v3866
    %v3868 = vsel %vm3865, %v3867, %v3863
    %v3869 = vmul.f32 1.0, %v3868
    %v3870 = vmul.f32 %v3849, %v3576
    %v3871 = vmul.f32 %v3830, %v3850
    %v3872 = vadd.f32 %v3870, %v3871
    %v3873 = vtanh.pop %v3872
    %v3874 = vmul.f32 %v3869, %v3873
    %3875 = vst [vmem:[#allocation3] sm:$0xff] %v3754
    %3876 = vst [vmem:[#allocation4] sm:$0xff] %v3752
    %3877 = vst [vmem:[%s916] sm:$0xff] %v3874
    %3878 = vst [vmem:[%s918] sm:$0xff] %v3872
    // Predicated region
    $region74: #{tpu_custom_call.1} parent=1 // pred_check
      %p3879 = pneg %p131
    $region75: #{tpu_custom_call.1} parent=1 // pred_check_branch
      %3881 = sbr.rel (%p3879) target = $region77
    $region76: #{tpu_custom_call.1} parent=1 // pred_region
      %v3882 = vpack.c.bf16 %v3874, %v3874
      %v3883 = vld [vmem:[#allocation13] sm:$0xf]
      %v3884 = vld [vmem:[#allocation13 + $0x4] sm:$0xf]
      %v3885 = vld [vmem:[#allocation13 + $0x8] sm:$0xf]
      %v3886 = vld [vmem:[#allocation13 + $0xc] sm:$0xf]
      %v3887 = vld [vmem:[#allocation13 + $0x10] sm:$0xf]
      %v3888 = vld [vmem:[#allocation13 + $0x14] sm:$0xf]
      %v3889 = vld [vmem:[#allocation13 + $0x18] sm:$0xf]
      %v3890 = vld [vmem:[#allocation13 + $0x1c] sm:$0xf]
      %v3891 = vld [vmem:[#allocation13 + $0x20] sm:$0xf]
      %v3892 = vld [vmem:[#allocation13 + $0x24] sm:$0xf]
      %v3893 = vld [vmem:[#allocation13 + $0x28] sm:$0xf]
      %v3894 = vld [vmem:[#allocation13 + $0x2c] sm:$0xf]
      %v3895 = vld [vmem:[#allocation13 + $0x30] sm:$0xf]
      %v3896 = vld [vmem:[#allocation13 + $0x34] sm:$0xf]
      %v3897 = vld [vmem:[#allocation13 + $0x38] sm:$0xf]
      %v3898 = vld [vmem:[#allocation13 + $0x3c] sm:$0xf]
      %v3899 = vld [vmem:[%s8] sm:$0x1]
      %v3901 = vperm.slane %v3899, 0
      %v3919 = vunpack.c.l.b16 %v3883
      %v3920 = vunpack.c.l.b16 %v3884
      %v3921 = vunpack.c.l.b16 %v3885
      %v3922 = vunpack.c.l.b16 %v3886
      %v3923 = vunpack.c.l.b16 %v3887
      %v3924 = vunpack.c.l.b16 %v3888
      %v3925 = vunpack.c.l.b16 %v3889
      %v3926 = vunpack.c.l.b16 %v3890
      %v3927 = vunpack.c.l.b16 %v3891
      %v3928 = vunpack.c.l.b16 %v3892
      %v3929 = vunpack.c.l.b16 %v3893
      %v3930 = vunpack.c.l.b16 %v3894
      %v3931 = vunpack.c.l.b16 %v3895
      %v3932 = vunpack.c.l.b16 %v3896
      %v3933 = vunpack.c.l.b16 %v3897
      %v3934 = vunpack.c.l.b16 %v3898
      %v3935 = vpack.c.b16 %v3920, %v3919
      %v3936 = vpack.c.b16 %v3922, %v3921
      %v3937 = vpack.c.b16 %v3924, %v3923
      %v3938 = vpack.c.b16 %v3926, %v3925
      %v3939 = vpack.c.b16 %v3928, %v3927
      %v3940 = vpack.c.b16 %v3930, %v3929
      %v3941 = vpack.c.b16 %v3932, %v3931
      %v3942 = vpack.c.b16 %v3934, %v3933
      %3951 = vmatpush.bf16.msra.mxu0 %v3942
      %3952 = vmatpush.bf16.msra.mxu0 %v3941
      %3953 = vmatpush.bf16.msra.mxu0 %v3940
      %3954 = vmatpush.bf16.msra.mxu0 %v3939
      %3955 = vmatpush.bf16.msra.mxu0 %v3938
      %3956 = vmatpush.bf16.msra.mxu0 %v3937
      %3957 = vmatpush.bf16.msra.mxu0 %v3936
      %3958 = vmatpush.bf16.msra.mxu0 %v3935
      %3959 = vmatmul.bf16.gmra.mxu0 %v3882
      %v3960 = vpop.f32.mrf.mxu0
      %v3961 = vadd.f32 %v3901, %v3960
      %v3962 = vpop.f32.mrf.mxu0
      %3963 = vdwg.mxu0
      %v3964 = vmax.f32 %v3961, 0.0
      %v3965 = vpack.c.bf16 %v3964, %v3964
      %v3966 = vld [vmem:[%s9] sm:$0xf]
      %v3967 = vld [vmem:[%s9 + $0x4] sm:$0xf]
      %v3968 = vld [vmem:[%s9 + $0x8] sm:$0xf]
      %v3969 = vld [vmem:[%s9 + $0xc] sm:$0xf]
      %v3970 = vld [vmem:[%s9 + $0x10] sm:$0xf]
      %v3971 = vld [vmem:[%s9 + $0x14] sm:$0xf]
      %v3972 = vld [vmem:[%s9 + $0x18] sm:$0xf]
      %v3973 = vld [vmem:[%s9 + $0x1c] sm:$0xf]
      %v3974 = vld [vmem:[%s9 + $0x20] sm:$0xf]
      %v3975 = vld [vmem:[%s9 + $0x24] sm:$0xf]
      %v3976 = vld [vmem:[%s9 + $0x28] sm:$0xf]
      %v3977 = vld [vmem:[%s9 + $0x2c] sm:$0xf]
      %v3978 = vld [vmem:[%s9 + $0x30] sm:$0xf]
      %v3979 = vld [vmem:[%s9 + $0x34] sm:$0xf]
      %v3980 = vld [vmem:[%s9 + $0x38] sm:$0xf]
      %v3981 = vld [vmem:[%s9 + $0x3c] sm:$0xf]
      %v3982 = vld [vmem:[%s10] sm:$0x1]
      %v3984 = vperm.slane %v3982, 0
      %v4002 = vunpack.c.l.b16 %v3966
      %v4003 = vunpack.c.l.b16 %v3967
      %v4004 = vunpack.c.l.b16 %v3968
      %v4005 = vunpack.c.l.b16 %v3969
      %v4006 = vunpack.c.l.b16 %v3970
      %v4007 = vunpack.c.l.b16 %v3971
      %v4008 = vunpack.c.l.b16 %v3972
      %v4009 = vunpack.c.l.b16 %v3973
      %v4010 = vunpack.c.l.b16 %v3974
      %v4011 = vunpack.c.l.b16 %v3975
      %v4012 = vunpack.c.l.b16 %v3976
      %v4013 = vunpack.c.l.b16 %v3977
      %v4014 = vunpack.c.l.b16 %v3978
      %v4015 = vunpack.c.l.b16 %v3979
      %v4016 = vunpack.c.l.b16 %v3980
      %v4017 = vunpack.c.l.b16 %v3981
      %v4018 = vpack.c.b16 %v4003, %v4002
      %v4019 = vpack.c.b16 %v4005, %v4004
      %v4020 = vpack.c.b16 %v4007, %v4006
      %v4021 = vpack.c.b16 %v4009, %v4008
      %v4022 = vpack.c.b16 %v4011, %v4010
      %v4023 = vpack.c.b16 %v4013, %v4012
      %v4024 = vpack.c.b16 %v4015, %v4014
      %v4025 = vpack.c.b16 %v4017, %v4016
      %4034 = vmatpush.bf16.msra.mxu0 %v4025
      %4035 = vmatpush.bf16.msra.mxu0 %v4024
      %4036 = vmatpush.bf16.msra.mxu0 %v4023
      %4037 = vmatpush.bf16.msra.mxu0 %v4022
      %4038 = vmatpush.bf16.msra.mxu0 %v4021
      %4039 = vmatpush.bf16.msra.mxu0 %v4020
      %4040 = vmatpush.bf16.msra.mxu0 %v4019
      %4041 = vmatpush.bf16.msra.mxu0 %v4018
      %4042 = vmatmul.bf16.gmra.mxu0 %v3965
      %v4043 = vpop.f32.mrf.mxu0
      %v4044 = vadd.f32 %v3984, %v4043
      %v4045 = vpop.f32.mrf.mxu0
      %4046 = vdwg.mxu0
      %v4047 = vlaneseq
      %v4048 = vand.u32 %v4047, 127
      %vm4049 = vcmp.eq.s32.totalorder %v4048, 1
      %v4050 = vxor.u32 %v4044, 2147483648
      %v4051 = vmul.f32 %v4050, 1.442695
      %v4052 = vpow.pop %v4051
      %v4053 = vadd.f32 %v4052, 1.0
      %v4054 = vrcp.pop %v4053
      %v4055 = vmul.f32 %v4053, %v4054
      %v4056 = vsub.f32 1.0, %v4055
      %v4057 = vmul.f32 %v4054, %v4056
      %v4058 = vadd.f32 %v4054, %v4057
      %vm4059 = vweird.f32 %v4053
      %vm4060 = vweird.f32 %v4054
      %vm4061 = vmor %vm4059, %vm4060
      %v4062 = vsel %vm4061, %v4054, %v4058
      %v4063 = vand.u32 2147483647, %v4053
      %vm4064 = vcmp.eq.f32.partialorder %v4063, 8.507059e+37
      %v4065 = vand.u32 %v4053, 2147483648
      %v4066 = vor.u32 1.1754944e-38, %v4065
      %v4067 = vsel %vm4064, %v4066, %v4062
      %v4068 = vmul.f32 1.0, %v4067
      %v4069 = vsel %vm4049, %v4068, %v4044
      %vm4070 = vcmask 15360
      %4071 = vst.msk [vmem:[%s11] sm:$0xff] %vm4070, %v4069
    $region77: #{tpu_custom_call.1} parent=1 // pred_fallthru
      _
    // Predicated region
    $region78: #{tpu_custom_call.1} parent=1 // pred_check
      _
    $region79: #{tpu_custom_call.1} parent=1 // pred_check_branch
      %4073 = sbr.rel (0) target = $region81
    $region80: #{tpu_custom_call.1} parent=1 // pred_region
      _
    $region81: #{tpu_custom_call.1} parent=1 // pred_fallthru
      _
    // Predicated region
    $region82: #{tpu_custom_call.1} parent=1 // pred_check
      _
    $region83: #{tpu_custom_call.1} parent=1 // pred_check_branch
      %4075 = sbr.rel (0) target = $region85
    $region84: #{tpu_custom_call.1} parent=1 // pred_region
      _
    $region85: #{tpu_custom_call.1} parent=1 // pred_fallthru
      _
    %4076 = vsyncpa [#allocation6], 1
    %4077 = vsyncpa [#allocation8], 1
    %4078 = vsyncpa [#allocation11], 1
    %4079 = vsyncpa [#allocation14], 1

</llo_original>
